<compile_context>
chip_gen: v6e
topology: v6e:2x2x1
jax: 0.10.0
libtpu: 0.0.40
codegen_flags: <defaults>
</compile_context>

<pallas_src>
import math

import jax
import jax.numpy as jnp
from jax import lax
from jax.experimental import pallas as pl
from jax.experimental.pallas import tpu as pltpu

# ----- configuration (matches the module __init__ defaults where applicable) -----
INPUT_DIM = 16
MODEL_DIM = 32
NUM_CLASSES = 3
NUM_HEADS = 4            # default
NUM_LAYERS = 2           # default
DIM_FF = 2048            # nn.TransformerEncoderLayer default dim_feedforward
TEMPERATURE = 1.0        # default temperature=1
BATCH = 8
LN_EPS = 1e-5
HEAD_DIM = MODEL_DIM // NUM_HEADS

PARAM_ORDER = [
    "proj_w", "proj_b",            # projection.weight.T, projection.bias
    "in_w", "in_b",                # per-layer in_proj_weight.T, in_proj_bias
    "out_w", "out_b",              # per-layer out_proj.weight.T, out_proj.bias
    "l1_w", "l1_b",                # per-layer linear1.weight.T (bf16), linear1.bias
    "l2_w", "l2_b",                # per-layer linear2.weight.T (bf16), linear2.bias
    "n1_w", "n1_b",                # per-layer norm1 gamma/beta
    "n2_w", "n2_b",                # per-layer norm2 gamma/beta
    "fc_w", "fc_b",                # fc.weight.T, fc.bias
]


def _layernorm(x, w, b):
    mu = jnp.mean(x, axis=-1, keepdims=True)
    var = jnp.mean((x - mu) ** 2, axis=-1, keepdims=True)
    return (x - mu) * lax.rsqrt(var + LN_EPS) * w + b


def podos_kernel(x_ref, proj_w_ref, proj_b_ref,
                 in_w_ref, in_b_ref, out_w_ref, out_b_ref,
                 l1_w_ref, l1_b_ref, l2_w_ref, l2_b_ref,
                 n1_w_ref, n1_b_ref, n2_w_ref, n2_b_ref,
                 fc_w_ref, fc_b_ref, o_ref, h_ref):
    """One grid step == one encoder layer.  h_ref (VMEM scratch) carries the hidden state."""
    layer = pl.program_id(0)

    # ---- input projection only on the first grid step ----
    @pl.when(layer == 0)
    def _():
        h_ref[...] = jnp.dot(x_ref[...], proj_w_ref[...],
                             preferred_element_type=jnp.float32) + proj_b_ref[...]

    h = h_ref[...]                                   # (B, E), float32
    B = h.shape[0]

    # ---- self-attention (post-norm layer, dropout = identity) ----
    qkv = jnp.dot(h, in_w_ref[...],
                  preferred_element_type=jnp.float32) + in_b_ref[...]      # (B, 3E)
    scale = 1.0 / math.sqrt(HEAD_DIM)
    q = qkv[:, 0:MODEL_DIM] * scale                  # fold 1/sqrt(d) once into q
    k = qkv[:, MODEL_DIM:2 * MODEL_DIM]
    v = qkv[:, 2 * MODEL_DIM:3 * MODEL_DIM]
    out_w = out_w_ref[...]                           # (E, E)

    # per-head attention; each head's output accumulated straight into the out_proj result
    # (concat(heads) @ W_out == sum_h heads[h] @ W_out[h*Hd:(h+1)*Hd, :]).
    attn = jnp.zeros((B, MODEL_DIM), jnp.float32)
    for hd in range(NUM_HEADS):                      # static unroll (NUM_HEADS=4)
        sl = slice(hd * HEAD_DIM, (hd + 1) * HEAD_DIM)
        qh, kh, vh = q[:, sl], k[:, sl], v[:, sl]
        # q @ k^T without materializing a transpose: contract the last dims of both.
        scores = lax.dot_general(qh, kh, (((1,), (1,)), ((), ())),
                                 preferred_element_type=jnp.float32)       # (B, B)
        scores = scores - jnp.max(scores, axis=-1, keepdims=True)
        p = jnp.exp(scores)
        p = p * pl.reciprocal(jnp.sum(p, axis=-1, keepdims=True), approx=True)
        head = jnp.dot(p, vh, preferred_element_type=jnp.float32)          # (B, Hd)
        attn = attn + jnp.dot(head, out_w[sl, :],
                              preferred_element_type=jnp.float32)          # (B, E)
    attn = attn + out_b_ref[...]

    # residual + norm1
    h = _layernorm(h + attn, n1_w_ref[...], n1_b_ref[...])

    # ---- feed-forward: linear1 -> ReLU -> linear2 (bf16 weights, f32 accumulation) ----
    ff = jnp.dot(h.astype(jnp.bfloat16), l1_w_ref[...],
                 preferred_element_type=jnp.float32) + l1_b_ref[...]
    ff = jnp.maximum(ff, 0.0)
    ff = jnp.dot(ff.astype(jnp.bfloat16), l2_w_ref[...],
                 preferred_element_type=jnp.float32) + l2_b_ref[...]

    # residual + norm2
    h = _layernorm(h + ff, n2_w_ref[...], n2_b_ref[...])
    h_ref[...] = h

    # ---- final head on the last grid step; mean(dim=1) over the size-1 axis is identity ----
    @pl.when(layer == pl.num_programs(0) - 1)
    def _():
        out = jnp.dot(h, fc_w_ref[...],
                      preferred_element_type=jnp.float32) + fc_b_ref[...]
        if TEMPERATURE != 1.0:                       # static Python branch
            out = out / TEMPERATURE
        o_ref[...] = out


def _full_spec(shape):
    """Whole array resident every grid step (block == full shape, fetched once)."""
    nd = len(shape)
    return pl.BlockSpec(shape, lambda *_: (0,) * nd)


def _layer_spec(shape):
    """Per-layer slab: leading (layer) dim squeezed, streamed by the grid index."""
    ndim = len(shape)
    block = (None,) + tuple(shape[1:])
    return pl.BlockSpec(block, lambda l: (l,) + (0,) * (ndim - 1))


@jax.jit
def podos_forward(x, params):
    B = x.shape[0]
    E, F, C, L = MODEL_DIM, DIM_FF, NUM_CLASSES, NUM_LAYERS

    in_specs = [
        _full_spec((B, INPUT_DIM)),        # x
        _full_spec((INPUT_DIM, E)),        # proj_w
        _full_spec((1, E)),                # proj_b
        _layer_spec((L, E, 3 * E)),        # in_w
        _layer_spec((L, 1, 3 * E)),        # in_b
        _layer_spec((L, E, E)),            # out_w
        _layer_spec((L, 1, E)),            # out_b
        _layer_spec((L, E, F)),            # l1_w (bf16)
        _layer_spec((L, 1, F)),            # l1_b
        _layer_spec((L, F, E)),            # l2_w (bf16)
        _layer_spec((L, 1, E)),            # l2_b
        _layer_spec((L, 1, E)),            # n1_w
        _layer_spec((L, 1, E)),            # n1_b
        _layer_spec((L, 1, E)),            # n2_w
        _layer_spec((L, 1, E)),            # n2_b
        _full_spec((E, C)),                # fc_w
        _full_spec((1, C)),                # fc_b
    ]

    args = [x] + [params[k] for k in PARAM_ORDER]
    return pl.pallas_call(
        podos_kernel,
        out_shape=jax.ShapeDtypeStruct((B, C), jnp.float32),
        grid_spec=pltpu.PrefetchScalarGridSpec(
            num_scalar_prefetch=0,
            grid=(L,),
            in_specs=in_specs,
            out_specs=pl.BlockSpec((B, C), lambda l: (0, 0)),
            scratch_shapes=[pltpu.VMEM((B, E), jnp.float32)],
        ),
        compiler_params=pltpu.CompilerParams(
            dimension_semantics=("arbitrary",)),
    )(*args)


def podos_reference(x, params):
    """Pure-JAX reference with identical math (incl. the bf16 FFN weight storage)."""
    h = x @ params["proj_w"] + params["proj_b"]
    scale = 1.0 / math.sqrt(HEAD_DIM)
    for l in range(NUM_LAYERS):
        qkv = h @ params["in_w"][l] + params["in_b"][l]
        q = qkv[:, :MODEL_DIM] * scale
        k = qkv[:, MODEL_DIM:2 * MODEL_DIM]
        v = qkv[:, 2 * MODEL_DIM:]
        heads = []
        for hd in range(NUM_HEADS):
            sl = slice(hd * HEAD_DIM, (hd + 1) * HEAD_DIM)
            s = q[:, sl] @ k[:, sl].T
            p = jax.nn.softmax(s, axis=-1)
            heads.append(p @ v[:, sl])
        attn = jnp.concatenate(heads, axis=-1) @ params["out_w"][l] + params["out_b"][l]
        h = _layernorm(h + attn, params["n1_w"][l], params["n1_b"][l])
        ff = jnp.dot(h.astype(jnp.bfloat16), params["l1_w"][l],
                     preferred_element_type=jnp.float32) + params["l1_b"][l]
        ff = jnp.maximum(ff, 0.0)
        ff = jnp.dot(ff.astype(jnp.bfloat16), params["l2_w"][l],
                     preferred_element_type=jnp.float32) + params["l2_b"][l]
        h = _layernorm(h + ff, params["n2_w"][l], params["n2_b"][l])
    out = h @ params["fc_w"] + params["fc_b"]
    if TEMPERATURE != 1.0:
        out = out / TEMPERATURE
    return out


def make_params(key):
    """Deterministic synthetic parameters (PyTorch Linear weights stored pre-transposed).
    The large FFN weights are stored in bfloat16 (halves the dominant HBM->VMEM stream)."""
    keys = jax.random.split(key, 12)

    def w(k, shape, scale=0.05, dtype=jnp.float32):
        return (scale * jax.random.normal(k, shape, dtype=jnp.float32)).astype(dtype)

    L, E, F, C = NUM_LAYERS, MODEL_DIM, DIM_FF, NUM_CLASSES
    return dict(
        proj_w=w(keys[0], (INPUT_DIM, E)),
        proj_b=w(keys[1], (1, E)),
        in_w=w(keys[2], (L, E, 3 * E)),
        in_b=w(keys[3], (L, 1, 3 * E)),
        out_w=w(keys[4], (L, E, E)),
        out_b=w(keys[5], (L, 1, E)),
        l1_w=w(keys[6], (L, E, F), dtype=jnp.bfloat16),
        l1_b=w(keys[7], (L, 1, F)),
        l2_w=w(keys[8], (L, F, E), dtype=jnp.bfloat16),
        l2_b=w(keys[9], (L, 1, E)),
        n1_w=jnp.ones((L, 1, E), jnp.float32),
        n1_b=jnp.zeros((L, 1, E), jnp.float32),
        n2_w=jnp.ones((L, 1, E), jnp.float32),
        n2_b=jnp.zeros((L, 1, E), jnp.float32),
        fc_w=w(keys[10], (E, C)),
        fc_b=w(keys[11], (1, C)),
    )


if __name__ == "__main__":
    root = jax.random.PRNGKey(0)
    kx, kp = jax.random.split(root)
    x = jax.random.normal(kx, (BATCH, INPUT_DIM), dtype=jnp.float32)
    params = make_params(kp)

    out = jax.block_until_ready(podos_forward(x, params))
    ref = jax.block_until_ready(podos_reference(x, params))

    assert out.shape == (BATCH, NUM_CLASSES)
    assert jnp.allclose(out, ref, rtol=2e-3, atol=2e-3), (out, ref)

    print("KERNEL_OK")
</pallas_src>

<mosaic_0001>
module attributes {stable_mosaic.version = 11 : i64} {
  func.func @podos_kernel(%arg0: i32, %arg1: memref<8x16xf32, #tpu.memory_space<vmem>>, %arg2: memref<16x32xf32, #tpu.memory_space<vmem>>, %arg3: memref<1x32xf32, #tpu.memory_space<vmem>>, %arg4: memref<1x32x96xf32, #tpu.memory_space<vmem>>, %arg5: memref<1x1x96xf32, #tpu.memory_space<vmem>>, %arg6: memref<1x32x32xf32, #tpu.memory_space<vmem>>, %arg7: memref<1x1x32xf32, #tpu.memory_space<vmem>>, %arg8: memref<1x32x2048xbf16, #tpu.memory_space<vmem>>, %arg9: memref<1x1x2048xf32, #tpu.memory_space<vmem>>, %arg10: memref<1x2048x32xbf16, #tpu.memory_space<vmem>>, %arg11: memref<1x1x32xf32, #tpu.memory_space<vmem>>, %arg12: memref<1x1x32xf32, #tpu.memory_space<vmem>>, %arg13: memref<1x1x32xf32, #tpu.memory_space<vmem>>, %arg14: memref<1x1x32xf32, #tpu.memory_space<vmem>>, %arg15: memref<1x1x32xf32, #tpu.memory_space<vmem>>, %arg16: memref<32x3xf32, #tpu.memory_space<vmem>>, %arg17: memref<1x3xf32, #tpu.memory_space<vmem>>, %arg18: memref<8x3xf32, #tpu.memory_space<vmem>>, %arg19: memref<8x32xf32, #tpu.memory_space<vmem>>) attributes {dimension_semantics = [#tpu.dimension_semantics<arbitrary>], iteration_bounds = array<i64: 2>, scalar_prefetch = 0 : i64, scratch_operands = 1 : i64, tpu.core_type = #tpu.core_type<tc>, window_params = [{pipeline_mode = #tpu.pipeline_mode<synchronous>, transform_indices = @transform_0, window_bounds = array<i64: 8, 16>}, {pipeline_mode = #tpu.pipeline_mode<synchronous>, transform_indices = @transform_1, window_bounds = array<i64: 16, 32>}, {pipeline_mode = #tpu.pipeline_mode<synchronous>, transform_indices = @transform_2, window_bounds = array<i64: 1, 32>}, {transform_indices = @transform_3, window_bounds = array<i64: 1, 32, 96>}, {transform_indices = @transform_4, window_bounds = array<i64: 1, 1, 96>}, {transform_indices = @transform_5, window_bounds = array<i64: 1, 32, 32>}, {transform_indices = @transform_6, window_bounds = array<i64: 1, 1, 32>}, {transform_indices = @transform_7, window_bounds = array<i64: 1, 32, 2048>}, {transform_indices = @transform_8, window_bounds = array<i64: 1, 1, 2048>}, {transform_indices = @transform_9, window_bounds = array<i64: 1, 2048, 32>}, {transform_indices = @transform_10, window_bounds = array<i64: 1, 1, 32>}, {transform_indices = @transform_11, window_bounds = array<i64: 1, 1, 32>}, {transform_indices = @transform_12, window_bounds = array<i64: 1, 1, 32>}, {transform_indices = @transform_13, window_bounds = array<i64: 1, 1, 32>}, {transform_indices = @transform_14, window_bounds = array<i64: 1, 1, 32>}, {pipeline_mode = #tpu.pipeline_mode<synchronous>, transform_indices = @transform_15, window_bounds = array<i64: 32, 3>}, {pipeline_mode = #tpu.pipeline_mode<synchronous>, transform_indices = @transform_16, window_bounds = array<i64: 1, 3>}, {pipeline_mode = #tpu.pipeline_mode<synchronous>, transform_indices = @transform_17, window_bounds = array<i64: 8, 3>}]} {
    %c0_i32 = arith.constant 0 : i32
    %0 = arith.cmpi eq, %arg0, %c0_i32 : i32
    %1 = arith.extui %0 : i1 to i32
    %c0_i32_0 = arith.constant 0 : i32
    %2 = arith.cmpi ne, %1, %c0_i32_0 : i32
    scf.if %2 {
      %c0_76 = arith.constant 0 : index
      %c0_77 = arith.constant 0 : index
      %171 = vector.load %arg1[%c0_76, %c0_77] : memref<8x16xf32, #tpu.memory_space<vmem>>, vector<8x16xf32>
      %c0_78 = arith.constant 0 : index
      %c0_79 = arith.constant 0 : index
      %172 = vector.load %arg2[%c0_78, %c0_79] : memref<16x32xf32, #tpu.memory_space<vmem>>, vector<16x32xf32>
      %cst_80 = arith.constant dense<0.000000e+00> : vector<8x32xf32>
      %173 = tpu.matmul %171, %172, %cst_80 {dimension_numbers = #tpu.dot_dimension_numbers<[1], [0], [0], [1], [0, 0, 1, 1], [], []>} : vector<8x16xf32>, vector<16x32xf32>, vector<8x32xf32> -> vector<8x32xf32>
      %c0_81 = arith.constant 0 : index
      %c0_82 = arith.constant 0 : index
      %174 = vector.load %arg3[%c0_81, %c0_82] : memref<1x32xf32, #tpu.memory_space<vmem>>, vector<1x32xf32>
      %175 = vector.broadcast %174 : vector<1x32xf32> to vector<8x32xf32>
      %176 = arith.addf %173, %175 : vector<8x32xf32>
      %c0_83 = arith.constant 0 : index
      %c0_84 = arith.constant 0 : index
      %177 = vector.load %arg19[%c0_83, %c0_84] : memref<8x32xf32, #tpu.memory_space<vmem>>, vector<8x32xf32>
      tpu.vector_store %arg19[%c0_83, %c0_84], %176 {strides = array<i32>} : memref<8x32xf32, #tpu.memory_space<vmem>>, vector<8x32xf32>,
    } else {
    }
    %c0 = arith.constant 0 : index
    %c0_1 = arith.constant 0 : index
    %3 = vector.load %arg19[%c0, %c0_1] : memref<8x32xf32, #tpu.memory_space<vmem>>, vector<8x32xf32>
    %c0_2 = arith.constant 0 : index
    %c0_3 = arith.constant 0 : index
    %c0_4 = arith.constant 0 : index
    %4 = vector.load %arg4[%c0_2, %c0_3, %c0_4] : memref<1x32x96xf32, #tpu.memory_space<vmem>>, vector<1x32x96xf32>
    %5 = vector.shape_cast %4 : vector<1x32x96xf32> to vector<32x96xf32>
    %cst = arith.constant dense<0.000000e+00> : vector<8x96xf32>
    %6 = tpu.matmul %3, %5, %cst {dimension_numbers = #tpu.dot_dimension_numbers<[1], [0], [0], [1], [0, 0, 1, 1], [], []>} : vector<8x32xf32>, vector<32x96xf32>, vector<8x96xf32> -> vector<8x96xf32>
    %c0_5 = arith.constant 0 : index
    %c0_6 = arith.constant 0 : index
    %c0_7 = arith.constant 0 : index
    %7 = vector.load %arg5[%c0_5, %c0_6, %c0_7] : memref<1x1x96xf32, #tpu.memory_space<vmem>>, vector<1x1x96xf32>
    %8 = vector.shape_cast %7 : vector<1x1x96xf32> to vector<1x96xf32>
    %9 = vector.broadcast %8 : vector<1x96xf32> to vector<8x96xf32>
    %10 = arith.addf %6, %9 : vector<8x96xf32>
    %11 = vector.extract_strided_slice %10 {offsets = [0, 0], sizes = [8, 32], strides = [1, 1]} : vector<8x96xf32> to vector<8x32xf32>
    %cst_8 = arith.constant 0.353553385 : f32
    %12 = vector.broadcast %cst_8 : f32 to vector<8x32xf32>
    %13 = arith.mulf %11, %12 : vector<8x32xf32>
    %14 = vector.extract_strided_slice %10 {offsets = [0, 32], sizes = [8, 32], strides = [1, 1]} : vector<8x96xf32> to vector<8x32xf32>
    %15 = vector.extract_strided_slice %10 {offsets = [0, 64], sizes = [8, 32], strides = [1, 1]} : vector<8x96xf32> to vector<8x32xf32>
    %c0_9 = arith.constant 0 : index
    %c0_10 = arith.constant 0 : index
    %c0_11 = arith.constant 0 : index
    %16 = vector.load %arg6[%c0_9, %c0_10, %c0_11] : memref<1x32x32xf32, #tpu.memory_space<vmem>>, vector<1x32x32xf32>
    %17 = vector.shape_cast %16 : vector<1x32x32xf32> to vector<32x32xf32>
    %cst_12 = arith.constant 0.000000e+00 : f32
    %18 = vector.broadcast %cst_12 : f32 to vector<8x32xf32>
    %19 = vector.extract_strided_slice %13 {offsets = [0, 0], sizes = [8, 8], strides = [1, 1]} : vector<8x32xf32> to vector<8x8xf32>
    %20 = vector.extract_strided_slice %14 {offsets = [0, 0], sizes = [8, 8], strides = [1, 1]} : vector<8x32xf32> to vector<8x8xf32>
    %21 = vector.extract_strided_slice %15 {offsets = [0, 0], sizes = [8, 8], strides = [1, 1]} : vector<8x32xf32> to vector<8x8xf32>
    %cst_13 = arith.constant dense<0.000000e+00> : vector<8x8xf32>
    %22 = tpu.matmul %19, %20, %cst_13 {dimension_numbers = #tpu.dot_dimension_numbers<[1], [1], [0], [0], [0, 0, 1, 0], [], []>} : vector<8x8xf32>, vector<8x8xf32>, vector<8x8xf32> -> vector<8x8xf32>
    %cst_14 = arith.constant dense<0xFF800000> : vector<8xf32>
    %23 = vector.multi_reduction <maximumf>, %22, %cst_14 [1] : vector<8x8xf32> to vector<8xf32>
    %24 = vector.shape_cast %23 : vector<8xf32> to vector<8x1xf32>
    %25 = vector.broadcast %24 : vector<8x1xf32> to vector<8x8xf32>
    %26 = arith.subf %22, %25 : vector<8x8xf32>
    %27 = math.exp %26 : vector<8x8xf32>
    %cst_15 = arith.constant dense<0.000000e+00> : vector<8xf32>
    %28 = vector.multi_reduction <add>, %27, %cst_15 [1] : vector<8x8xf32> to vector<8xf32>
    %29 = vector.shape_cast %28 : vector<8xf32> to vector<8x1xf32>
    %30 = tpu.reciprocal %29 {approx = true} : vector<8x1xf32> -> vector<8x1xf32>
    %31 = vector.broadcast %30 : vector<8x1xf32> to vector<8x8xf32>
    %32 = arith.mulf %27, %31 : vector<8x8xf32>
    %cst_16 = arith.constant dense<0.000000e+00> : vector<8x8xf32>
    %33 = tpu.matmul %32, %21, %cst_16 {dimension_numbers = #tpu.dot_dimension_numbers<[1], [0], [0], [1], [0, 0, 1, 1], [], []>} : vector<8x8xf32>, vector<8x8xf32>, vector<8x8xf32> -> vector<8x8xf32>
    %34 = vector.extract_strided_slice %17 {offsets = [0, 0], sizes = [8, 32], strides = [1, 1]} : vector<32x32xf32> to vector<8x32xf32>
    %cst_17 = arith.constant dense<0.000000e+00> : vector<8x32xf32>
    %35 = tpu.matmul %33, %34, %cst_17 {dimension_numbers = #tpu.dot_dimension_numbers<[1], [0], [0], [1], [0, 0, 1, 1], [], []>} : vector<8x8xf32>, vector<8x32xf32>, vector<8x32xf32> -> vector<8x32xf32>
    %36 = arith.addf %18, %35 : vector<8x32xf32>
    %37 = vector.extract_strided_slice %13 {offsets = [0, 8], sizes = [8, 8], strides = [1, 1]} : vector<8x32xf32> to vector<8x8xf32>
    %38 = vector.extract_strided_slice %14 {offsets = [0, 8], sizes = [8, 8], strides = [1, 1]} : vector<8x32xf32> to vector<8x8xf32>
    %39 = vector.extract_strided_slice %15 {offsets = [0, 8], sizes = [8, 8], strides = [1, 1]} : vector<8x32xf32> to vector<8x8xf32>
    %cst_18 = arith.constant dense<0.000000e+00> : vector<8x8xf32>
    %40 = tpu.matmul %37, %38, %cst_18 {dimension_numbers = #tpu.dot_dimension_numbers<[1], [1], [0], [0], [0, 0, 1, 0], [], []>} : vector<8x8xf32>, vector<8x8xf32>, vector<8x8xf32> -> vector<8x8xf32>
    %cst_19 = arith.constant dense<0xFF800000> : vector<8xf32>
    %41 = vector.multi_reduction <maximumf>, %40, %cst_19 [1] : vector<8x8xf32> to vector<8xf32>
    %42 = vector.shape_cast %41 : vector<8xf32> to vector<8x1xf32>
    %43 = vector.broadcast %42 : vector<8x1xf32> to vector<8x8xf32>
    %44 = arith.subf %40, %43 : vector<8x8xf32>
    %45 = math.exp %44 : vector<8x8xf32>
    %cst_20 = arith.constant dense<0.000000e+00> : vector<8xf32>
    %46 = vector.multi_reduction <add>, %45, %cst_20 [1] : vector<8x8xf32> to vector<8xf32>
    %47 = vector.shape_cast %46 : vector<8xf32> to vector<8x1xf32>
    %48 = tpu.reciprocal %47 {approx = true} : vector<8x1xf32> -> vector<8x1xf32>
    %49 = vector.broadcast %48 : vector<8x1xf32> to vector<8x8xf32>
    %50 = arith.mulf %45, %49 : vector<8x8xf32>
    %cst_21 = arith.constant dense<0.000000e+00> : vector<8x8xf32>
    %51 = tpu.matmul %50, %39, %cst_21 {dimension_numbers = #tpu.dot_dimension_numbers<[1], [0], [0], [1], [0, 0, 1, 1], [], []>} : vector<8x8xf32>, vector<8x8xf32>, vector<8x8xf32> -> vector<8x8xf32>
    %52 = vector.extract_strided_slice %17 {offsets = [8, 0], sizes = [8, 32], strides = [1, 1]} : vector<32x32xf32> to vector<8x32xf32>
    %cst_22 = arith.constant dense<0.000000e+00> : vector<8x32xf32>
    %53 = tpu.matmul %51, %52, %cst_22 {dimension_numbers = #tpu.dot_dimension_numbers<[1], [0], [0], [1], [0, 0, 1, 1], [], []>} : vector<8x8xf32>, vector<8x32xf32>, vector<8x32xf32> -> vector<8x32xf32>
    %54 = arith.addf %36, %53 : vector<8x32xf32>
    %55 = vector.extract_strided_slice %13 {offsets = [0, 16], sizes = [8, 8], strides = [1, 1]} : vector<8x32xf32> to vector<8x8xf32>
    %56 = vector.extract_strided_slice %14 {offsets = [0, 16], sizes = [8, 8], strides = [1, 1]} : vector<8x32xf32> to vector<8x8xf32>
    %57 = vector.extract_strided_slice %15 {offsets = [0, 16], sizes = [8, 8], strides = [1, 1]} : vector<8x32xf32> to vector<8x8xf32>
    %cst_23 = arith.constant dense<0.000000e+00> : vector<8x8xf32>
    %58 = tpu.matmul %55, %56, %cst_23 {dimension_numbers = #tpu.dot_dimension_numbers<[1], [1], [0], [0], [0, 0, 1, 0], [], []>} : vector<8x8xf32>, vector<8x8xf32>, vector<8x8xf32> -> vector<8x8xf32>
    %cst_24 = arith.constant dense<0xFF800000> : vector<8xf32>
    %59 = vector.multi_reduction <maximumf>, %58, %cst_24 [1] : vector<8x8xf32> to vector<8xf32>
    %60 = vector.shape_cast %59 : vector<8xf32> to vector<8x1xf32>
    %61 = vector.broadcast %60 : vector<8x1xf32> to vector<8x8xf32>
    %62 = arith.subf %58, %61 : vector<8x8xf32>
    %63 = math.exp %62 : vector<8x8xf32>
    %cst_25 = arith.constant dense<0.000000e+00> : vector<8xf32>
    %64 = vector.multi_reduction <add>, %63, %cst_25 [1] : vector<8x8xf32> to vector<8xf32>
    %65 = vector.shape_cast %64 : vector<8xf32> to vector<8x1xf32>
    %66 = tpu.reciprocal %65 {approx = true} : vector<8x1xf32> -> vector<8x1xf32>
    %67 = vector.broadcast %66 : vector<8x1xf32> to vector<8x8xf32>
    %68 = arith.mulf %63, %67 : vector<8x8xf32>
    %cst_26 = arith.constant dense<0.000000e+00> : vector<8x8xf32>
    %69 = tpu.matmul %68, %57, %cst_26 {dimension_numbers = #tpu.dot_dimension_numbers<[1], [0], [0], [1], [0, 0, 1, 1], [], []>} : vector<8x8xf32>, vector<8x8xf32>, vector<8x8xf32> -> vector<8x8xf32>
    %70 = vector.extract_strided_slice %17 {offsets = [16, 0], sizes = [8, 32], strides = [1, 1]} : vector<32x32xf32> to vector<8x32xf32>
    %cst_27 = arith.constant dense<0.000000e+00> : vector<8x32xf32>
    %71 = tpu.matmul %69, %70, %cst_27 {dimension_numbers = #tpu.dot_dimension_numbers<[1], [0], [0], [1], [0, 0, 1, 1], [], []>} : vector<8x8xf32>, vector<8x32xf32>, vector<8x32xf32> -> vector<8x32xf32>
    %72 = arith.addf %54, %71 : vector<8x32xf32>
    %73 = vector.extract_strided_slice %13 {offsets = [0, 24], sizes = [8, 8], strides = [1, 1]} : vector<8x32xf32> to vector<8x8xf32>
    %74 = vector.extract_strided_slice %14 {offsets = [0, 24], sizes = [8, 8], strides = [1, 1]} : vector<8x32xf32> to vector<8x8xf32>
    %75 = vector.extract_strided_slice %15 {offsets = [0, 24], sizes = [8, 8], strides = [1, 1]} : vector<8x32xf32> to vector<8x8xf32>
    %cst_28 = arith.constant dense<0.000000e+00> : vector<8x8xf32>
    %76 = tpu.matmul %73, %74, %cst_28 {dimension_numbers = #tpu.dot_dimension_numbers<[1], [1], [0], [0], [0, 0, 1, 0], [], []>} : vector<8x8xf32>, vector<8x8xf32>, vector<8x8xf32> -> vector<8x8xf32>
    %cst_29 = arith.constant dense<0xFF800000> : vector<8xf32>
    %77 = vector.multi_reduction <maximumf>, %76, %cst_29 [1] : vector<8x8xf32> to vector<8xf32>
    %78 = vector.shape_cast %77 : vector<8xf32> to vector<8x1xf32>
    %79 = vector.broadcast %78 : vector<8x1xf32> to vector<8x8xf32>
    %80 = arith.subf %76, %79 : vector<8x8xf32>
    %81 = math.exp %80 : vector<8x8xf32>
    %cst_30 = arith.constant dense<0.000000e+00> : vector<8xf32>
    %82 = vector.multi_reduction <add>, %81, %cst_30 [1] : vector<8x8xf32> to vector<8xf32>
    %83 = vector.shape_cast %82 : vector<8xf32> to vector<8x1xf32>
    %84 = tpu.reciprocal %83 {approx = true} : vector<8x1xf32> -> vector<8x1xf32>
    %85 = vector.broadcast %84 : vector<8x1xf32> to vector<8x8xf32>
    %86 = arith.mulf %81, %85 : vector<8x8xf32>
    %cst_31 = arith.constant dense<0.000000e+00> : vector<8x8xf32>
    %87 = tpu.matmul %86, %75, %cst_31 {dimension_numbers = #tpu.dot_dimension_numbers<[1], [0], [0], [1], [0, 0, 1, 1], [], []>} : vector<8x8xf32>, vector<8x8xf32>, vector<8x8xf32> -> vector<8x8xf32>
    %88 = vector.extract_strided_slice %17 {offsets = [24, 0], sizes = [8, 32], strides = [1, 1]} : vector<32x32xf32> to vector<8x32xf32>
    %cst_32 = arith.constant dense<0.000000e+00> : vector<8x32xf32>
    %89 = tpu.matmul %87, %88, %cst_32 {dimension_numbers = #tpu.dot_dimension_numbers<[1], [0], [0], [1], [0, 0, 1, 1], [], []>} : vector<8x8xf32>, vector<8x32xf32>, vector<8x32xf32> -> vector<8x32xf32>
    %90 = arith.addf %72, %89 : vector<8x32xf32>
    %c0_33 = arith.constant 0 : index
    %c0_34 = arith.constant 0 : index
    %c0_35 = arith.constant 0 : index
    %91 = vector.load %arg7[%c0_33, %c0_34, %c0_35] : memref<1x1x32xf32, #tpu.memory_space<vmem>>, vector<1x1x32xf32>
    %92 = vector.shape_cast %91 : vector<1x1x32xf32> to vector<1x32xf32>
    %93 = vector.broadcast %92 : vector<1x32xf32> to vector<8x32xf32>
    %94 = arith.addf %90, %93 : vector<8x32xf32>
    %95 = arith.addf %3, %94 : vector<8x32xf32>
    %c0_36 = arith.constant 0 : index
    %c0_37 = arith.constant 0 : index
    %c0_38 = arith.constant 0 : index
    %96 = vector.load %arg12[%c0_36, %c0_37, %c0_38] : memref<1x1x32xf32, #tpu.memory_space<vmem>>, vector<1x1x32xf32>
    %97 = vector.shape_cast %96 : vector<1x1x32xf32> to vector<1x32xf32>
    %c0_39 = arith.constant 0 : index
    %c0_40 = arith.constant 0 : index
    %c0_41 = arith.constant 0 : index
    %98 = vector.load %arg13[%c0_39, %c0_40, %c0_41] : memref<1x1x32xf32, #tpu.memory_space<vmem>>, vector<1x1x32xf32>
    %99 = vector.shape_cast %98 : vector<1x1x32xf32> to vector<1x32xf32>
    %cst_42 = arith.constant dense<0.000000e+00> : vector<8xf32>
    %100 = vector.multi_reduction <add>, %95, %cst_42 [1] : vector<8x32xf32> to vector<8xf32>
    %101 = vector.shape_cast %100 : vector<8xf32> to vector<8x1xf32>
    %cst_43 = arith.constant 3.200000e+01 : f32
    %102 = vector.broadcast %cst_43 : f32 to vector<8x1xf32>
    %103 = arith.divf %101, %102 : vector<8x1xf32>
    %104 = vector.broadcast %103 : vector<8x1xf32> to vector<8x32xf32>
    %105 = arith.subf %95, %104 : vector<8x32xf32>
    %106 = arith.mulf %105, %105 : vector<8x32xf32>
    %cst_44 = arith.constant dense<0.000000e+00> : vector<8xf32>
    %107 = vector.multi_reduction <add>, %106, %cst_44 [1] : vector<8x32xf32> to vector<8xf32>
    %108 = vector.shape_cast %107 : vector<8xf32> to vector<8x1xf32>
    %cst_45 = arith.constant 3.200000e+01 : f32
    %109 = vector.broadcast %cst_45 : f32 to vector<8x1xf32>
    %110 = arith.divf %108, %109 : vector<8x1xf32>
    %111 = vector.broadcast %103 : vector<8x1xf32> to vector<8x32xf32>
    %112 = arith.subf %95, %111 : vector<8x32xf32>
    %cst_46 = arith.constant 9.99999974E-6 : f32
    %113 = vector.broadcast %cst_46 : f32 to vector<8x1xf32>
    %114 = arith.addf %110, %113 : vector<8x1xf32>
    %115 = math.rsqrt %114 : vector<8x1xf32>
    %116 = vector.broadcast %115 : vector<8x1xf32> to vector<8x32xf32>
    %117 = arith.mulf %112, %116 : vector<8x32xf32>
    %118 = vector.broadcast %97 : vector<1x32xf32> to vector<8x32xf32>
    %119 = arith.mulf %117, %118 : vector<8x32xf32>
    %120 = vector.broadcast %99 : vector<1x32xf32> to vector<8x32xf32>
    %121 = arith.addf %119, %120 : vector<8x32xf32>
    %122 = arith.truncf %121 : vector<8x32xf32> to vector<8x32xbf16>
    %c0_47 = arith.constant 0 : index
    %c0_48 = arith.constant 0 : index
    %c0_49 = arith.constant 0 : index
    %123 = vector.load %arg8[%c0_47, %c0_48, %c0_49] : memref<1x32x2048xbf16, #tpu.memory_space<vmem>>, vector<1x32x2048xbf16>
    %124 = vector.shape_cast %123 : vector<1x32x2048xbf16> to vector<32x2048xbf16>
    %cst_50 = arith.constant dense<0.000000e+00> : vector<8x2048xf32>
    %125 = tpu.matmul %122, %124, %cst_50 {dimension_numbers = #tpu.dot_dimension_numbers<[1], [0], [0], [1], [0, 0, 1, 1], [], []>} : vector<8x32xbf16>, vector<32x2048xbf16>, vector<8x2048xf32> -> vector<8x2048xf32>
    %c0_51 = arith.constant 0 : index
    %c0_52 = arith.constant 0 : index
    %c0_53 = arith.constant 0 : index
    %126 = vector.load %arg9[%c0_51, %c0_52, %c0_53] : memref<1x1x2048xf32, #tpu.memory_space<vmem>>, vector<1x1x2048xf32>
    %127 = vector.shape_cast %126 : vector<1x1x2048xf32> to vector<1x2048xf32>
    %128 = vector.broadcast %127 : vector<1x2048xf32> to vector<8x2048xf32>
    %129 = arith.addf %125, %128 : vector<8x2048xf32>
    %cst_54 = arith.constant 0.000000e+00 : f32
    %130 = vector.broadcast %cst_54 : f32 to vector<8x2048xf32>
    %131 = arith.maximumf %129, %130 : vector<8x2048xf32>
    %132 = arith.truncf %131 : vector<8x2048xf32> to vector<8x2048xbf16>
    %c0_55 = arith.constant 0 : index
    %c0_56 = arith.constant 0 : index
    %c0_57 = arith.constant 0 : index
    %133 = vector.load %arg10[%c0_55, %c0_56, %c0_57] : memref<1x2048x32xbf16, #tpu.memory_space<vmem>>, vector<1x2048x32xbf16>
    %134 = vector.shape_cast %133 : vector<1x2048x32xbf16> to vector<2048x32xbf16>
    %cst_58 = arith.constant dense<0.000000e+00> : vector<8x32xf32>
    %135 = tpu.matmul %132, %134, %cst_58 {dimension_numbers = #tpu.dot_dimension_numbers<[1], [0], [0], [1], [0, 0, 1, 1], [], []>} : vector<8x2048xbf16>, vector<2048x32xbf16>, vector<8x32xf32> -> vector<8x32xf32>
    %c0_59 = arith.constant 0 : index
    %c0_60 = arith.constant 0 : index
    %c0_61 = arith.constant 0 : index
    %136 = vector.load %arg11[%c0_59, %c0_60, %c0_61] : memref<1x1x32xf32, #tpu.memory_space<vmem>>, vector<1x1x32xf32>
    %137 = vector.shape_cast %136 : vector<1x1x32xf32> to vector<1x32xf32>
    %138 = vector.broadcast %137 : vector<1x32xf32> to vector<8x32xf32>
    %139 = arith.addf %135, %138 : vector<8x32xf32>
    %140 = arith.addf %121, %139 : vector<8x32xf32>
    %c0_62 = arith.constant 0 : index
    %c0_63 = arith.constant 0 : index
    %c0_64 = arith.constant 0 : index
    %141 = vector.load %arg14[%c0_62, %c0_63, %c0_64] : memref<1x1x32xf32, #tpu.memory_space<vmem>>, vector<1x1x32xf32>
    %142 = vector.shape_cast %141 : vector<1x1x32xf32> to vector<1x32xf32>
    %c0_65 = arith.constant 0 : index
    %c0_66 = arith.constant 0 : index
    %c0_67 = arith.constant 0 : index
    %143 = vector.load %arg15[%c0_65, %c0_66, %c0_67] : memref<1x1x32xf32, #tpu.memory_space<vmem>>, vector<1x1x32xf32>
    %144 = vector.shape_cast %143 : vector<1x1x32xf32> to vector<1x32xf32>
    %cst_68 = arith.constant dense<0.000000e+00> : vector<8xf32>
    %145 = vector.multi_reduction <add>, %140, %cst_68 [1] : vector<8x32xf32> to vector<8xf32>
    %146 = vector.shape_cast %145 : vector<8xf32> to vector<8x1xf32>
    %cst_69 = arith.constant 3.200000e+01 : f32
    %147 = vector.broadcast %cst_69 : f32 to vector<8x1xf32>
    %148 = arith.divf %146, %147 : vector<8x1xf32>
    %149 = vector.broadcast %148 : vector<8x1xf32> to vector<8x32xf32>
    %150 = arith.subf %140, %149 : vector<8x32xf32>
    %151 = arith.mulf %150, %150 : vector<8x32xf32>
    %cst_70 = arith.constant dense<0.000000e+00> : vector<8xf32>
    %152 = vector.multi_reduction <add>, %151, %cst_70 [1] : vector<8x32xf32> to vector<8xf32>
    %153 = vector.shape_cast %152 : vector<8xf32> to vector<8x1xf32>
    %cst_71 = arith.constant 3.200000e+01 : f32
    %154 = vector.broadcast %cst_71 : f32 to vector<8x1xf32>
    %155 = arith.divf %153, %154 : vector<8x1xf32>
    %156 = vector.broadcast %148 : vector<8x1xf32> to vector<8x32xf32>
    %157 = arith.subf %140, %156 : vector<8x32xf32>
    %cst_72 = arith.constant 9.99999974E-6 : f32
    %158 = vector.broadcast %cst_72 : f32 to vector<8x1xf32>
    %159 = arith.addf %155, %158 : vector<8x1xf32>
    %160 = math.rsqrt %159 : vector<8x1xf32>
    %161 = vector.broadcast %160 : vector<8x1xf32> to vector<8x32xf32>
    %162 = arith.mulf %157, %161 : vector<8x32xf32>
    %163 = vector.broadcast %142 : vector<1x32xf32> to vector<8x32xf32>
    %164 = arith.mulf %162, %163 : vector<8x32xf32>
    %165 = vector.broadcast %144 : vector<1x32xf32> to vector<8x32xf32>
    %166 = arith.addf %164, %165 : vector<8x32xf32>
    %c0_73 = arith.constant 0 : index
    %c0_74 = arith.constant 0 : index
    %167 = vector.load %arg19[%c0_73, %c0_74] : memref<8x32xf32, #tpu.memory_space<vmem>>, vector<8x32xf32>
    tpu.vector_store %arg19[%c0_73, %c0_74], %166 {strides = array<i32>} : memref<8x32xf32, #tpu.memory_space<vmem>>, vector<8x32xf32>,
    %c1_i32 = arith.constant 1 : i32
    %168 = arith.cmpi eq, %arg0, %c1_i32 : i32
    %169 = arith.extui %168 : i1 to i32
    %c0_i32_75 = arith.constant 0 : i32
    %170 = arith.cmpi ne, %169, %c0_i32_75 : i32
    scf.if %170 {
      %c0_76 = arith.constant 0 : index
      %c0_77 = arith.constant 0 : index
      %171 = vector.load %arg16[%c0_76, %c0_77] : memref<32x3xf32, #tpu.memory_space<vmem>>, vector<32x3xf32>
      %cst_78 = arith.constant dense<0.000000e+00> : vector<8x3xf32>
      %172 = tpu.matmul %166, %171, %cst_78 {dimension_numbers = #tpu.dot_dimension_numbers<[1], [0], [0], [1], [0, 0, 1, 1], [], []>} : vector<8x32xf32>, vector<32x3xf32>, vector<8x3xf32> -> vector<8x3xf32>
      %c0_79 = arith.constant 0 : index
      %c0_80 = arith.constant 0 : index
      %173 = vector.load %arg17[%c0_79, %c0_80] : memref<1x3xf32, #tpu.memory_space<vmem>>, vector<1x3xf32>
      %174 = vector.broadcast %173 : vector<1x3xf32> to vector<8x3xf32>
      %175 = arith.addf %172, %174 : vector<8x3xf32>
      %c0_81 = arith.constant 0 : index
      %c0_82 = arith.constant 0 : index
      %176 = vector.load %arg18[%c0_81, %c0_82] : memref<8x3xf32, #tpu.memory_space<vmem>>, vector<8x3xf32>
      tpu.vector_store %arg18[%c0_81, %c0_82], %175 {strides = array<i32>} : memref<8x3xf32, #tpu.memory_space<vmem>>, vector<8x3xf32>,
    } else {
    }
    return
  }
  func.func @transform_0(%arg0: i32) -> (i32, i32) {
    %c0_i32 = arith.constant 0 : i32
    %c0_i32_0 = arith.constant 0 : i32
    %c0_i32_1 = arith.constant 0 : i32
    return %c0_i32, %c0_i32_0 : i32, i32
  }
  func.func @transform_1(%arg0: i32) -> (i32, i32) {
    %c0_i32 = arith.constant 0 : i32
    %c0_i32_0 = arith.constant 0 : i32
    %c0_i32_1 = arith.constant 0 : i32
    return %c0_i32, %c0_i32_0 : i32, i32
  }
  func.func @transform_2(%arg0: i32) -> (i32, i32) {
    %c0_i32 = arith.constant 0 : i32
    %c0_i32_0 = arith.constant 0 : i32
    %c0_i32_1 = arith.constant 0 : i32
    return %c0_i32, %c0_i32_0 : i32, i32
  }
  func.func @transform_3(%arg0: i32) -> (i32, i32, i32) {
    %c0_i32 = arith.constant 0 : i32
    %c0_i32_0 = arith.constant 0 : i32
    %c0_i32_1 = arith.constant 0 : i32
    return %arg0, %c0_i32, %c0_i32_0 : i32, i32, i32
  }
  func.func @transform_4(%arg0: i32) -> (i32, i32, i32) {
    %c0_i32 = arith.constant 0 : i32
    %c0_i32_0 = arith.constant 0 : i32
    %c0_i32_1 = arith.constant 0 : i32
    return %arg0, %c0_i32, %c0_i32_0 : i32, i32, i32
  }
  func.func @transform_5(%arg0: i32) -> (i32, i32, i32) {
    %c0_i32 = arith.constant 0 : i32
    %c0_i32_0 = arith.constant 0 : i32
    %c0_i32_1 = arith.constant 0 : i32
    return %arg0, %c0_i32, %c0_i32_0 : i32, i32, i32
  }
  func.func @transform_6(%arg0: i32) -> (i32, i32, i32) {
    %c0_i32 = arith.constant 0 : i32
    %c0_i32_0 = arith.constant 0 : i32
    %c0_i32_1 = arith.constant 0 : i32
    return %arg0, %c0_i32, %c0_i32_0 : i32, i32, i32
  }
  func.func @transform_7(%arg0: i32) -> (i32, i32, i32) {
    %c0_i32 = arith.constant 0 : i32
    %c0_i32_0 = arith.constant 0 : i32
    %c0_i32_1 = arith.constant 0 : i32
    return %arg0, %c0_i32, %c0_i32_0 : i32, i32, i32
  }
  func.func @transform_8(%arg0: i32) -> (i32, i32, i32) {
    %c0_i32 = arith.constant 0 : i32
    %c0_i32_0 = arith.constant 0 : i32
    %c0_i32_1 = arith.constant 0 : i32
    return %arg0, %c0_i32, %c0_i32_0 : i32, i32, i32
  }
  func.func @transform_9(%arg0: i32) -> (i32, i32, i32) {
    %c0_i32 = arith.constant 0 : i32
    %c0_i32_0 = arith.constant 0 : i32
    %c0_i32_1 = arith.constant 0 : i32
    return %arg0, %c0_i32, %c0_i32_0 : i32, i32, i32
  }
  func.func @transform_10(%arg0: i32) -> (i32, i32, i32) {
    %c0_i32 = arith.constant 0 : i32
    %c0_i32_0 = arith.constant 0 : i32
    %c0_i32_1 = arith.constant 0 : i32
    return %arg0, %c0_i32, %c0_i32_0 : i32, i32, i32
  }
  func.func @transform_11(%arg0: i32) -> (i32, i32, i32) {
    %c0_i32 = arith.constant 0 : i32
    %c0_i32_0 = arith.constant 0 : i32
    %c0_i32_1 = arith.constant 0 : i32
    return %arg0, %c0_i32, %c0_i32_0 : i32, i32, i32
  }
  func.func @transform_12(%arg0: i32) -> (i32, i32, i32) {
    %c0_i32 = arith.constant 0 : i32
    %c0_i32_0 = arith.constant 0 : i32
    %c0_i32_1 = arith.constant 0 : i32
    return %arg0, %c0_i32, %c0_i32_0 : i32, i32, i32
  }
  func.func @transform_13(%arg0: i32) -> (i32, i32, i32) {
    %c0_i32 = arith.constant 0 : i32
    %c0_i32_0 = arith.constant 0 : i32
    %c0_i32_1 = arith.constant 0 : i32
    return %arg0, %c0_i32, %c0_i32_0 : i32, i32, i32
  }
  func.func @transform_14(%arg0: i32) -> (i32, i32, i32) {
    %c0_i32 = arith.constant 0 : i32
    %c0_i32_0 = arith.constant 0 : i32
    %c0_i32_1 = arith.constant 0 : i32
    return %arg0, %c0_i32, %c0_i32_0 : i32, i32, i32
  }
  func.func @transform_15(%arg0: i32) -> (i32, i32) {
    %c0_i32 = arith.constant 0 : i32
    %c0_i32_0 = arith.constant 0 : i32
    %c0_i32_1 = arith.constant 0 : i32
    return %c0_i32, %c0_i32_0 : i32, i32
  }
  func.func @transform_16(%arg0: i32) -> (i32, i32) {
    %c0_i32 = arith.constant 0 : i32
    %c0_i32_0 = arith.constant 0 : i32
    %c0_i32_1 = arith.constant 0 : i32
    return %c0_i32, %c0_i32_0 : i32, i32
  }
  func.func @transform_17(%arg0: i32) -> (i32, i32) {
    %c0_i32 = arith.constant 0 : i32
    %c0_i32_0 = arith.constant 0 : i32
    %c0_i32_1 = arith.constant 0 : i32
    return %c0_i32, %c0_i32_0 : i32, i32
  }
}

</mosaic_0001>

<llo_original>
// kernel: podos_forward.1
$region0: #{podos_forward.1}
  #allocation0 [shape = 'u32[]', space=smem, size = 0x4, offset = 0x4, fixed_abs, tag = 'smem constant byte address 0x4 - core index']
  #allocation1 [shape = 'u32[144,128]{1,0:T(1,128)}', space=vmem, size = 0x12000, scoped, tag = 'internal scratch']
  #allocation2 [shape = 'f32[8,32]{1,0:T(8,128)}', space=vmem, size = 0x1000, scoped, tag = 'scratch operand']
  %s0 = inlined_call_operand.vmem [shape: f32[8,16], index: 0, kind: input, shape index: {}]
  %s1 = inlined_call_operand.vmem [shape: f32[16,32], index: 1, kind: input, shape index: {}]
  %s2 = inlined_call_operand.vmem [shape: f32[1,32], index: 2, kind: input, shape index: {}]
  %s3 = inlined_call_operand.vmem [shape: f32[2,32,96], index: 3, kind: input, shape index: {}]
  %s4 = inlined_call_operand.vmem [shape: f32[2,1,96], index: 4, kind: input, shape index: {}]
  %s5 = inlined_call_operand.vmem [shape: f32[2,32,32], index: 5, kind: input, shape index: {}]
  %s6 = inlined_call_operand.vmem [shape: f32[2,1,32], index: 6, kind: input, shape index: {}]
  %s7 = inlined_call_operand.vmem [shape: bf16[2,32,2048], index: 7, kind: input, shape index: {}]
  %s8 = inlined_call_operand.vmem [shape: f32[2,1,2048], index: 8, kind: input, shape index: {}]
  %s9 = inlined_call_operand.vmem [shape: bf16[2,2048,32], index: 9, kind: input, shape index: {}]
  %s10 = inlined_call_operand.vmem [shape: f32[2,1,32], index: 10, kind: input, shape index: {}]
  %s11 = inlined_call_operand.vmem [shape: f32[2,1,32], index: 11, kind: input, shape index: {}]
  %s12 = inlined_call_operand.vmem [shape: f32[2,1,32], index: 12, kind: input, shape index: {}]
  %s13 = inlined_call_operand.vmem [shape: f32[2,1,32], index: 13, kind: input, shape index: {}]
  %s14 = inlined_call_operand.vmem [shape: f32[2,1,32], index: 14, kind: input, shape index: {}]
  %s15 = inlined_call_operand.vmem [shape: f32[32,3], index: 15, kind: input, shape index: {}]
  %s16 = inlined_call_operand.vmem [shape: f32[1,3], index: 16, kind: input, shape index: {}]
  %s17 = inlined_call_operand.vmem [shape: f32[8,3], index: 17, kind: output, shape index: {}]
  %s18 = sld [smem:[#allocation0]]
  $region109: #{podos_forward.1} parent=0
    _
  %s20 = ssub.s32 1, %s18
  %s21 = scalar_select 0, %s20, %s18
  loop: start=0, step=1, limit=4
  $region2: #{podos_forward.1} parent=0 // loop_pre_header
    _
  $region3: #{podos_forward.1} parent=0 // loop_header
    %s23 = sphi 0, %s27
    %p24 = scmp.ge.s32.totalorder %s23, 4
    %s31 = sphi 0, %s31
    %s33 = sphi 0, %s31
    %s34 = sphi 0, %s33
    %s48 = sphi 0, %s34
    %s52 = sphi 0, %s52
    %s54 = sphi 0, %s52
    %s55 = sphi 0, %s54
    %s69 = sphi 0, %s55
    %s73 = sphi 0, %s73
    %s75 = sphi 0, %s73
    %s76 = sphi 0, %s75
    %s90 = sphi 0, %s76
    %s96 = sphi 0, %s98
    %s99 = sphi 0, %s96
    %s100 = sphi 0, %s99
    %s116 = sphi 0, %s100
    %s122 = sphi 0, %s124
    %s125 = sphi 0, %s122
    %s126 = sphi 0, %s125
    %s142 = sphi 0, %s126
    %s148 = sphi 0, %s150
    %s151 = sphi 0, %s148
    %s152 = sphi 0, %s151
    %s168 = sphi 0, %s152
    %s174 = sphi 0, %s176
    %s177 = sphi 0, %s174
    %s178 = sphi 0, %s177
    %s194 = sphi 0, %s178
    %s200 = sphi 0, %s202
    %s203 = sphi 0, %s200
    %s204 = sphi 0, %s203
    %s220 = sphi 0, %s204
    %s226 = sphi 0, %s228
    %s229 = sphi 0, %s226
    %s230 = sphi 0, %s229
    %s246 = sphi 0, %s230
    %s252 = sphi 0, %s254
    %s255 = sphi 0, %s252
    %s256 = sphi 0, %s255
    %s272 = sphi 0, %s256
    %s278 = sphi 0, %s280
    %s281 = sphi 0, %s278
    %s282 = sphi 0, %s281
    %s298 = sphi 0, %s282
    %s304 = sphi 0, %s306
    %s307 = sphi 0, %s304
    %s308 = sphi 0, %s307
    %s324 = sphi 0, %s308
    %s330 = sphi 0, %s332
    %s333 = sphi 0, %s330
    %s334 = sphi 0, %s333
    %s350 = sphi 0, %s334
    %s356 = sphi 0, %s358
    %s359 = sphi 0, %s356
    %s360 = sphi 0, %s359
    %s376 = sphi 0, %s360
    %s382 = sphi 0, %s384
    %s385 = sphi 0, %s382
    %s386 = sphi 0, %s385
    %s402 = sphi 0, %s386
    %s406 = sphi 0, %s406
    %s408 = sphi 0, %s406
    %s409 = sphi 0, %s408
    %s423 = sphi 0, %s409
    %s427 = sphi 0, %s427
    %s429 = sphi 0, %s427
    %s430 = sphi 0, %s429
    %s444 = sphi 0, %s430
    %s448 = sphi 0, %s448
    %s450 = sphi 0, %s448
    %s451 = sphi 0, %s450
    %s465 = sphi 0, %s451
  $region4: #{podos_forward.1} parent=0 // loop_header_branch
    %26 = sbr.rel (%p24) target = $region8
  $region5: #{podos_forward.1} parent=0 // loop_body
    %s28 = ssub.s32 %s23, 1
    %s29 = ssub.s32 %s23, 2
    %s30 = sadd.s32 %s23, 1
    %s32 = sadd.s32 %s31, 1
    %p35 = scmp.eq.s32.totalorder %s23, 1
    %p36 = scmp.ne.s32.totalorder %s31, %s33
    %p37 = scmp.eq.s32.totalorder %s23, 0
    %p38 = por %p36, %p37
    %p39 = scmp.ne.s32.totalorder %s31, %s33
    %p40 = scmp.eq.s32.totalorder %s28, 1
    %p41 = por %p39, %p40
    %p42 = scmp.ne.s32.totalorder %s33, %s34
    %p43 = scmp.eq.s32.totalorder %s28, 0
    %p44 = por %p42, %p43
    %p45 = scmp.ne.s32.totalorder %s33, %s34
    %p46 = scmp.eq.s32.totalorder %s29, 1
    %p47 = por %p45, %p46
    %p49 = scmp.ne.s32.totalorder %s34, %s48
    %p50 = scmp.eq.s32.totalorder %s29, 0
    %p51 = por %p49, %p50
    %s53 = sadd.s32 %s52, 1
    %p56 = scmp.eq.s32.totalorder %s23, 1
    %p57 = scmp.ne.s32.totalorder %s52, %s54
    %p58 = scmp.eq.s32.totalorder %s23, 0
    %p59 = por %p57, %p58
    %p60 = scmp.ne.s32.totalorder %s52, %s54
    %p61 = scmp.eq.s32.totalorder %s28, 1
    %p62 = por %p60, %p61
    %p63 = scmp.ne.s32.totalorder %s54, %s55
    %p64 = scmp.eq.s32.totalorder %s28, 0
    %p65 = por %p63, %p64
    %p66 = scmp.ne.s32.totalorder %s54, %s55
    %p67 = scmp.eq.s32.totalorder %s29, 1
    %p68 = por %p66, %p67
    %p70 = scmp.ne.s32.totalorder %s55, %s69
    %p71 = scmp.eq.s32.totalorder %s29, 0
    %p72 = por %p70, %p71
    %s74 = sadd.s32 %s73, 1
    %p77 = scmp.eq.s32.totalorder %s23, 1
    %p78 = scmp.ne.s32.totalorder %s73, %s75
    %p79 = scmp.eq.s32.totalorder %s23, 0
    %p80 = por %p78, %p79
    %p81 = scmp.ne.s32.totalorder %s73, %s75
    %p82 = scmp.eq.s32.totalorder %s28, 1
    %p83 = por %p81, %p82
    %p84 = scmp.ne.s32.totalorder %s75, %s76
    %p85 = scmp.eq.s32.totalorder %s28, 0
    %p86 = por %p84, %p85
    %p87 = scmp.ne.s32.totalorder %s75, %s76
    %p88 = scmp.eq.s32.totalorder %s29, 1
    %p89 = por %p87, %p88
    %p91 = scmp.ne.s32.totalorder %s76, %s90
    %p92 = scmp.eq.s32.totalorder %s29, 0
    %p93 = por %p91, %p92
    %s94 = ssub.s32 %s23, %s30
    %p95 = scmp.eq.s32.totalorder %s94, 0
    %s97 = sadd.s32 %s96, 1
    %s98 = scalar_select %p95, %s96, %s97
    %p101 = pneg %p95
    %p102 = scmp.eq.s32.totalorder %s23, 1
    %p103 = por %p101, %p102
    %p104 = scmp.ne.s32.totalorder %s96, %s99
    %p105 = scmp.eq.s32.totalorder %s23, 0
    %p106 = por %p104, %p105
    %p107 = scmp.ne.s32.totalorder %s96, %s99
    %p108 = scmp.eq.s32.totalorder %s28, 1
    %p109 = por %p107, %p108
    %p110 = scmp.ne.s32.totalorder %s99, %s100
    %p111 = scmp.eq.s32.totalorder %s28, 0
    %p112 = por %p110, %p111
    %p113 = scmp.ne.s32.totalorder %s99, %s100
    %p114 = scmp.eq.s32.totalorder %s29, 1
    %p115 = por %p113, %p114
    %p117 = scmp.ne.s32.totalorder %s100, %s116
    %p118 = scmp.eq.s32.totalorder %s29, 0
    %p119 = por %p117, %p118
    %s120 = ssub.s32 %s23, %s30
    %p121 = scmp.eq.s32.totalorder %s120, 0
    %s123 = sadd.s32 %s122, 1
    %s124 = scalar_select %p121, %s122, %s123
    %p127 = pneg %p121
    %p128 = scmp.eq.s32.totalorder %s23, 1
    %p129 = por %p127, %p128
    %p130 = scmp.ne.s32.totalorder %s122, %s125
    %p131 = scmp.eq.s32.totalorder %s23, 0
    %p132 = por %p130, %p131
    %p133 = scmp.ne.s32.totalorder %s122, %s125
    %p134 = scmp.eq.s32.totalorder %s28, 1
    %p135 = por %p133, %p134
    %p136 = scmp.ne.s32.totalorder %s125, %s126
    %p137 = scmp.eq.s32.totalorder %s28, 0
    %p138 = por %p136, %p137
    %p139 = scmp.ne.s32.totalorder %s125, %s126
    %p140 = scmp.eq.s32.totalorder %s29, 1
    %p141 = por %p139, %p140
    %p143 = scmp.ne.s32.totalorder %s126, %s142
    %p144 = scmp.eq.s32.totalorder %s29, 0
    %p145 = por %p143, %p144
    %s146 = ssub.s32 %s23, %s30
    %p147 = scmp.eq.s32.totalorder %s146, 0
    %s149 = sadd.s32 %s148, 1
    %s150 = scalar_select %p147, %s148, %s149
    %p153 = pneg %p147
    %p154 = scmp.eq.s32.totalorder %s23, 1
    %p155 = por %p153, %p154
    %p156 = scmp.ne.s32.totalorder %s148, %s151
    %p157 = scmp.eq.s32.totalorder %s23, 0
    %p158 = por %p156, %p157
    %p159 = scmp.ne.s32.totalorder %s148, %s151
    %p160 = scmp.eq.s32.totalorder %s28, 1
    %p161 = por %p159, %p160
    %p162 = scmp.ne.s32.totalorder %s151, %s152
    %p163 = scmp.eq.s32.totalorder %s28, 0
    %p164 = por %p162, %p163
    %p165 = scmp.ne.s32.totalorder %s151, %s152
    %p166 = scmp.eq.s32.totalorder %s29, 1
    %p167 = por %p165, %p166
    %p169 = scmp.ne.s32.totalorder %s152, %s168
    %p170 = scmp.eq.s32.totalorder %s29, 0
    %p171 = por %p169, %p170
    %s172 = ssub.s32 %s23, %s30
    %p173 = scmp.eq.s32.totalorder %s172, 0
    %s175 = sadd.s32 %s174, 1
    %s176 = scalar_select %p173, %s174, %s175
    %p179 = pneg %p173
    %p180 = scmp.eq.s32.totalorder %s23, 1
    %p181 = por %p179, %p180
    %p182 = scmp.ne.s32.totalorder %s174, %s177
    %p183 = scmp.eq.s32.totalorder %s23, 0
    %p184 = por %p182, %p183
    %p185 = scmp.ne.s32.totalorder %s174, %s177
    %p186 = scmp.eq.s32.totalorder %s28, 1
    %p187 = por %p185, %p186
    %p188 = scmp.ne.s32.totalorder %s177, %s178
    %p189 = scmp.eq.s32.totalorder %s28, 0
    %p190 = por %p188, %p189
    %p191 = scmp.ne.s32.totalorder %s177, %s178
    %p192 = scmp.eq.s32.totalorder %s29, 1
    %p193 = por %p191, %p192
    %p195 = scmp.ne.s32.totalorder %s178, %s194
    %p196 = scmp.eq.s32.totalorder %s29, 0
    %p197 = por %p195, %p196
    %s198 = ssub.s32 %s23, %s30
    %p199 = scmp.eq.s32.totalorder %s198, 0
    %s201 = sadd.s32 %s200, 1
    %s202 = scalar_select %p199, %s200, %s201
    %p205 = pneg %p199
    %p206 = scmp.eq.s32.totalorder %s23, 1
    %p207 = por %p205, %p206
    %p208 = scmp.ne.s32.totalorder %s200, %s203
    %p209 = scmp.eq.s32.totalorder %s23, 0
    %p210 = por %p208, %p209
    %p211 = scmp.ne.s32.totalorder %s200, %s203
    %p212 = scmp.eq.s32.totalorder %s28, 1
    %p213 = por %p211, %p212
    %p214 = scmp.ne.s32.totalorder %s203, %s204
    %p215 = scmp.eq.s32.totalorder %s28, 0
    %p216 = por %p214, %p215
    %p217 = scmp.ne.s32.totalorder %s203, %s204
    %p218 = scmp.eq.s32.totalorder %s29, 1
    %p219 = por %p217, %p218
    %p221 = scmp.ne.s32.totalorder %s204, %s220
    %p222 = scmp.eq.s32.totalorder %s29, 0
    %p223 = por %p221, %p222
    %s224 = ssub.s32 %s23, %s30
    %p225 = scmp.eq.s32.totalorder %s224, 0
    %s227 = sadd.s32 %s226, 1
    %s228 = scalar_select %p225, %s226, %s227
    %p231 = pneg %p225
    %p232 = scmp.eq.s32.totalorder %s23, 1
    %p233 = por %p231, %p232
    %p234 = scmp.ne.s32.totalorder %s226, %s229
    %p235 = scmp.eq.s32.totalorder %s23, 0
    %p236 = por %p234, %p235
    %p237 = scmp.ne.s32.totalorder %s226, %s229
    %p238 = scmp.eq.s32.totalorder %s28, 1
    %p239 = por %p237, %p238
    %p240 = scmp.ne.s32.totalorder %s229, %s230
    %p241 = scmp.eq.s32.totalorder %s28, 0
    %p242 = por %p240, %p241
    %p243 = scmp.ne.s32.totalorder %s229, %s230
    %p244 = scmp.eq.s32.totalorder %s29, 1
    %p245 = por %p243, %p244
    %p247 = scmp.ne.s32.totalorder %s230, %s246
    %p248 = scmp.eq.s32.totalorder %s29, 0
    %p249 = por %p247, %p248
    %s250 = ssub.s32 %s23, %s30
    %p251 = scmp.eq.s32.totalorder %s250, 0
    %s253 = sadd.s32 %s252, 1
    %s254 = scalar_select %p251, %s252, %s253
    %p257 = pneg %p251
    %p258 = scmp.eq.s32.totalorder %s23, 1
    %p259 = por %p257, %p258
    %p260 = scmp.ne.s32.totalorder %s252, %s255
    %p261 = scmp.eq.s32.totalorder %s23, 0
    %p262 = por %p260, %p261
    %p263 = scmp.ne.s32.totalorder %s252, %s255
    %p264 = scmp.eq.s32.totalorder %s28, 1
    %p265 = por %p263, %p264
    %p266 = scmp.ne.s32.totalorder %s255, %s256
    %p267 = scmp.eq.s32.totalorder %s28, 0
    %p268 = por %p266, %p267
    %p269 = scmp.ne.s32.totalorder %s255, %s256
    %p270 = scmp.eq.s32.totalorder %s29, 1
    %p271 = por %p269, %p270
    %p273 = scmp.ne.s32.totalorder %s256, %s272
    %p274 = scmp.eq.s32.totalorder %s29, 0
    %p275 = por %p273, %p274
    %s276 = ssub.s32 %s23, %s30
    %p277 = scmp.eq.s32.totalorder %s276, 0
    %s279 = sadd.s32 %s278, 1
    %s280 = scalar_select %p277, %s278, %s279
    %p283 = pneg %p277
    %p284 = scmp.eq.s32.totalorder %s23, 1
    %p285 = por %p283, %p284
    %p286 = scmp.ne.s32.totalorder %s278, %s281
    %p287 = scmp.eq.s32.totalorder %s23, 0
    %p288 = por %p286, %p287
    %p289 = scmp.ne.s32.totalorder %s278, %s281
    %p290 = scmp.eq.s32.totalorder %s28, 1
    %p291 = por %p289, %p290
    %p292 = scmp.ne.s32.totalorder %s281, %s282
    %p293 = scmp.eq.s32.totalorder %s28, 0
    %p294 = por %p292, %p293
    %p295 = scmp.ne.s32.totalorder %s281, %s282
    %p296 = scmp.eq.s32.totalorder %s29, 1
    %p297 = por %p295, %p296
    %p299 = scmp.ne.s32.totalorder %s282, %s298
    %p300 = scmp.eq.s32.totalorder %s29, 0
    %p301 = por %p299, %p300
    %s302 = ssub.s32 %s23, %s30
    %p303 = scmp.eq.s32.totalorder %s302, 0
    %s305 = sadd.s32 %s304, 1
    %s306 = scalar_select %p303, %s304, %s305
    %p309 = pneg %p303
    %p310 = scmp.eq.s32.totalorder %s23, 1
    %p311 = por %p309, %p310
    %p312 = scmp.ne.s32.totalorder %s304, %s307
    %p313 = scmp.eq.s32.totalorder %s23, 0
    %p314 = por %p312, %p313
    %p315 = scmp.ne.s32.totalorder %s304, %s307
    %p316 = scmp.eq.s32.totalorder %s28, 1
    %p317 = por %p315, %p316
    %p318 = scmp.ne.s32.totalorder %s307, %s308
    %p319 = scmp.eq.s32.totalorder %s28, 0
    %p320 = por %p318, %p319
    %p321 = scmp.ne.s32.totalorder %s307, %s308
    %p322 = scmp.eq.s32.totalorder %s29, 1
    %p323 = por %p321, %p322
    %p325 = scmp.ne.s32.totalorder %s308, %s324
    %p326 = scmp.eq.s32.totalorder %s29, 0
    %p327 = por %p325, %p326
    %s328 = ssub.s32 %s23, %s30
    %p329 = scmp.eq.s32.totalorder %s328, 0
    %s331 = sadd.s32 %s330, 1
    %s332 = scalar_select %p329, %s330, %s331
    %p335 = pneg %p329
    %p336 = scmp.eq.s32.totalorder %s23, 1
    %p337 = por %p335, %p336
    %p338 = scmp.ne.s32.totalorder %s330, %s333
    %p339 = scmp.eq.s32.totalorder %s23, 0
    %p340 = por %p338, %p339
    %p341 = scmp.ne.s32.totalorder %s330, %s333
    %p342 = scmp.eq.s32.totalorder %s28, 1
    %p343 = por %p341, %p342
    %p344 = scmp.ne.s32.totalorder %s333, %s334
    %p345 = scmp.eq.s32.totalorder %s28, 0
    %p346 = por %p344, %p345
    %p347 = scmp.ne.s32.totalorder %s333, %s334
    %p348 = scmp.eq.s32.totalorder %s29, 1
    %p349 = por %p347, %p348
    %p351 = scmp.ne.s32.totalorder %s334, %s350
    %p352 = scmp.eq.s32.totalorder %s29, 0
    %p353 = por %p351, %p352
    %s354 = ssub.s32 %s23, %s30
    %p355 = scmp.eq.s32.totalorder %s354, 0
    %s357 = sadd.s32 %s356, 1
    %s358 = scalar_select %p355, %s356, %s357
    %p361 = pneg %p355
    %p362 = scmp.eq.s32.totalorder %s23, 1
    %p363 = por %p361, %p362
    %p364 = scmp.ne.s32.totalorder %s356, %s359
    %p365 = scmp.eq.s32.totalorder %s23, 0
    %p366 = por %p364, %p365
    %p367 = scmp.ne.s32.totalorder %s356, %s359
    %p368 = scmp.eq.s32.totalorder %s28, 1
    %p369 = por %p367, %p368
    %p370 = scmp.ne.s32.totalorder %s359, %s360
    %p371 = scmp.eq.s32.totalorder %s28, 0
    %p372 = por %p370, %p371
    %p373 = scmp.ne.s32.totalorder %s359, %s360
    %p374 = scmp.eq.s32.totalorder %s29, 1
    %p375 = por %p373, %p374
    %p377 = scmp.ne.s32.totalorder %s360, %s376
    %p378 = scmp.eq.s32.totalorder %s29, 0
    %p379 = por %p377, %p378
    %s380 = ssub.s32 %s23, %s30
    %p381 = scmp.eq.s32.totalorder %s380, 0
    %s383 = sadd.s32 %s382, 1
    %s384 = scalar_select %p381, %s382, %s383
    %p387 = pneg %p381
    %p388 = scmp.eq.s32.totalorder %s23, 1
    %p389 = por %p387, %p388
    %p390 = scmp.ne.s32.totalorder %s382, %s385
    %p391 = scmp.eq.s32.totalorder %s23, 0
    %p392 = por %p390, %p391
    %p393 = scmp.ne.s32.totalorder %s382, %s385
    %p394 = scmp.eq.s32.totalorder %s28, 1
    %p395 = por %p393, %p394
    %p396 = scmp.ne.s32.totalorder %s385, %s386
    %p397 = scmp.eq.s32.totalorder %s28, 0
    %p398 = por %p396, %p397
    %p399 = scmp.ne.s32.totalorder %s385, %s386
    %p400 = scmp.eq.s32.totalorder %s29, 1
    %p401 = por %p399, %p400
    %p403 = scmp.ne.s32.totalorder %s386, %s402
    %p404 = scmp.eq.s32.totalorder %s29, 0
    %p405 = por %p403, %p404
    %s407 = sadd.s32 %s406, 1
    %p410 = scmp.eq.s32.totalorder %s23, 1
    %p411 = scmp.ne.s32.totalorder %s406, %s408
    %p412 = scmp.eq.s32.totalorder %s23, 0
    %p413 = por %p411, %p412
    %p414 = scmp.ne.s32.totalorder %s406, %s408
    %p415 = scmp.eq.s32.totalorder %s28, 1
    %p416 = por %p414, %p415
    %p417 = scmp.ne.s32.totalorder %s408, %s409
    %p418 = scmp.eq.s32.totalorder %s28, 0
    %p419 = por %p417, %p418
    %p420 = scmp.ne.s32.totalorder %s408, %s409
    %p421 = scmp.eq.s32.totalorder %s29, 1
    %p422 = por %p420, %p421
    %p424 = scmp.ne.s32.totalorder %s409, %s423
    %p425 = scmp.eq.s32.totalorder %s29, 0
    %p426 = por %p424, %p425
    %s428 = sadd.s32 %s427, 1
    %p431 = scmp.eq.s32.totalorder %s23, 1
    %p432 = scmp.ne.s32.totalorder %s427, %s429
    %p433 = scmp.eq.s32.totalorder %s23, 0
    %p434 = por %p432, %p433
    %p435 = scmp.ne.s32.totalorder %s427, %s429
    %p436 = scmp.eq.s32.totalorder %s28, 1
    %p437 = por %p435, %p436
    %p438 = scmp.ne.s32.totalorder %s429, %s430
    %p439 = scmp.eq.s32.totalorder %s28, 0
    %p440 = por %p438, %p439
    %p441 = scmp.ne.s32.totalorder %s429, %s430
    %p442 = scmp.eq.s32.totalorder %s29, 1
    %p443 = por %p441, %p442
    %p445 = scmp.ne.s32.totalorder %s430, %s444
    %p446 = scmp.eq.s32.totalorder %s29, 0
    %p447 = por %p445, %p446
    %s449 = sadd.s32 %s448, 1
    %p452 = scmp.eq.s32.totalorder %s23, 1
    %p453 = scmp.ne.s32.totalorder %s448, %s450
    %p454 = scmp.eq.s32.totalorder %s23, 0
    %p455 = por %p453, %p454
    %p456 = scmp.ne.s32.totalorder %s448, %s450
    %p457 = scmp.eq.s32.totalorder %s28, 1
    %p458 = por %p456, %p457
    %p459 = scmp.ne.s32.totalorder %s450, %s451
    %p460 = scmp.eq.s32.totalorder %s28, 0
    %p461 = por %p459, %p460
    %p462 = scmp.ne.s32.totalorder %s450, %s451
    %p463 = scmp.eq.s32.totalorder %s29, 1
    %p464 = por %p462, %p463
    %p466 = scmp.ne.s32.totalorder %s451, %s465
    %p467 = scmp.eq.s32.totalorder %s29, 0
    %p468 = por %p466, %p467
    %p469 = scmp.le.s32.totalorder 1, %s23
    %p470 = scmp.lt.s32.totalorder %s23, 3
    %p471 = pnand %p469, %p470
    %p472 = pneg %p471
    // Predicated region
    $region9: #{podos_forward.1} parent=5 // pred_check
      _
    $region10: #{podos_forward.1} parent=5 // pred_check_branch
      %474 = sbr.rel (%p471) target = $region12
    $region11: #{podos_forward.1} parent=5 // pred_region
      %s475 = ssub.s32 %s23, 1
      // Predicated region
      $region13: #{podos_forward.1} parent=11 // pred_check
        %p476 = pneg %p44
      $region14: #{podos_forward.1} parent=11 // pred_check_branch
        %478 = sbr.rel (%p476) target = $region16
      $region15: #{podos_forward.1} parent=11 // pred_region
        _
      $region16: #{podos_forward.1} parent=11 // pred_fallthru
        _
      // Predicated region
      $region17: #{podos_forward.1} parent=11 // pred_check
        %p479 = pneg %p65
      $region18: #{podos_forward.1} parent=11 // pred_check_branch
        %481 = sbr.rel (%p479) target = $region20
      $region19: #{podos_forward.1} parent=11 // pred_region
        _
      $region20: #{podos_forward.1} parent=11 // pred_fallthru
        _
      // Predicated region
      $region21: #{podos_forward.1} parent=11 // pred_check
        %p482 = pneg %p86
      $region22: #{podos_forward.1} parent=11 // pred_check_branch
        %484 = sbr.rel (%p482) target = $region24
      $region23: #{podos_forward.1} parent=11 // pred_region
        _
      $region24: #{podos_forward.1} parent=11 // pred_fallthru
        _
      // Predicated region
      $region25: #{podos_forward.1} parent=11 // pred_check
        %p485 = pneg %p419
      $region26: #{podos_forward.1} parent=11 // pred_check_branch
        %487 = sbr.rel (%p485) target = $region28
      $region27: #{podos_forward.1} parent=11 // pred_region
        _
      $region28: #{podos_forward.1} parent=11 // pred_fallthru
        _
      // Predicated region
      $region29: #{podos_forward.1} parent=11 // pred_check
        %p488 = pneg %p440
      $region30: #{podos_forward.1} parent=11 // pred_check_branch
        %490 = sbr.rel (%p488) target = $region32
      $region31: #{podos_forward.1} parent=11 // pred_region
        _
      $region32: #{podos_forward.1} parent=11 // pred_fallthru
        _
    $region12: #{podos_forward.1} parent=5 // pred_fallthru
      _
    %p491 = scmp.lt.s32.totalorder %s23, 2
    // Predicated region
    $region33: #{podos_forward.1} parent=5 // pred_check
      %p492 = pneg %p491
    $region34: #{podos_forward.1} parent=5 // pred_check_branch
      %494 = sbr.rel (%p492) target = $region36
    $region35: #{podos_forward.1} parent=5 // pred_region
      // Predicated region
      $region37: #{podos_forward.1} parent=35 // pred_check
        %p495 = pneg %p106
      $region38: #{podos_forward.1} parent=35 // pred_check_branch
        %497 = sbr.rel (%p495) target = $region40
      $region39: #{podos_forward.1} parent=35 // pred_region
        %p498 = scmp.lt.s32.totalorder %s23, 1
        %s499 = scalar_select %p498, %s23, 1
        %s500 = smul.addr %s499, 4
        %s501 = smul.addr %s500, 8
        %s502 = scalar_lea.vmem %s3, %s501
      $region40: #{podos_forward.1} parent=35 // pred_fallthru
        _
      // Predicated region
      $region41: #{podos_forward.1} parent=35 // pred_check
        %p503 = pneg %p132
      $region42: #{podos_forward.1} parent=35 // pred_check_branch
        %505 = sbr.rel (%p503) target = $region44
      $region43: #{podos_forward.1} parent=35 // pred_region
        %p506 = scmp.lt.s32.totalorder %s23, 1
        %s507 = scalar_select %p506, %s23, 1
        %s508 = scalar_lea.vmem %s4, %s507
      $region44: #{podos_forward.1} parent=35 // pred_fallthru
        _
      // Predicated region
      $region45: #{podos_forward.1} parent=35 // pred_check
        %p509 = pneg %p158
      $region46: #{podos_forward.1} parent=35 // pred_check_branch
        %511 = sbr.rel (%p509) target = $region48
      $region47: #{podos_forward.1} parent=35 // pred_region
        %p512 = scmp.lt.s32.totalorder %s23, 1
        %s513 = scalar_select %p512, %s23, 1
        %s514 = smul.addr %s513, 4
        %s515 = smul.addr %s514, 8
        %s516 = scalar_lea.vmem %s5, %s515
      $region48: #{podos_forward.1} parent=35 // pred_fallthru
        _
      // Predicated region
      $region49: #{podos_forward.1} parent=35 // pred_check
        %p517 = pneg %p184
      $region50: #{podos_forward.1} parent=35 // pred_check_branch
        %519 = sbr.rel (%p517) target = $region52
      $region51: #{podos_forward.1} parent=35 // pred_region
        %p520 = scmp.lt.s32.totalorder %s23, 1
        %s521 = scalar_select %p520, %s23, 1
        %s522 = scalar_lea.vmem %s6, %s521
      $region52: #{podos_forward.1} parent=35 // pred_fallthru
        _
      // Predicated region
      $region53: #{podos_forward.1} parent=35 // pred_check
        %p523 = pneg %p210
      $region54: #{podos_forward.1} parent=35 // pred_check_branch
        %525 = sbr.rel (%p523) target = $region56
      $region55: #{podos_forward.1} parent=35 // pred_region
        %p526 = scmp.lt.s32.totalorder %s23, 1
        %s527 = scalar_select %p526, %s23, 1
        %s528 = smul.addr %s527, 64
        %s529 = smul.addr %s528, 4
        %s530 = scalar_lea.vmem %s7, %s529
      $region56: #{podos_forward.1} parent=35 // pred_fallthru
        _
      // Predicated region
      $region57: #{podos_forward.1} parent=35 // pred_check
        %p531 = pneg %p236
      $region58: #{podos_forward.1} parent=35 // pred_check_branch
        %533 = sbr.rel (%p531) target = $region60
      $region59: #{podos_forward.1} parent=35 // pred_region
        %p534 = scmp.lt.s32.totalorder %s23, 1
        %s535 = scalar_select %p534, %s23, 1
        %s536 = smul.addr %s535, 16
        %s537 = scalar_lea.vmem %s8, %s536
      $region60: #{podos_forward.1} parent=35 // pred_fallthru
        _
      // Predicated region
      $region61: #{podos_forward.1} parent=35 // pred_check
        %p538 = pneg %p262
      $region62: #{podos_forward.1} parent=35 // pred_check_branch
        %540 = sbr.rel (%p538) target = $region64
      $region63: #{podos_forward.1} parent=35 // pred_region
        %p541 = scmp.lt.s32.totalorder %s23, 1
        %s542 = scalar_select %p541, %s23, 1
        %s543 = smul.addr %s542, 256
        %s544 = smul.addr %s543, 4
        %s545 = scalar_lea.vmem %s9, %s544
      $region64: #{podos_forward.1} parent=35 // pred_fallthru
        _
      // Predicated region
      $region65: #{podos_forward.1} parent=35 // pred_check
        %p546 = pneg %p288
      $region66: #{podos_forward.1} parent=35 // pred_check_branch
        %548 = sbr.rel (%p546) target = $region68
      $region67: #{podos_forward.1} parent=35 // pred_region
        %p549 = scmp.lt.s32.totalorder %s23, 1
        %s550 = scalar_select %p549, %s23, 1
        %s551 = scalar_lea.vmem %s10, %s550
      $region68: #{podos_forward.1} parent=35 // pred_fallthru
        _
      // Predicated region
      $region69: #{podos_forward.1} parent=35 // pred_check
        %p552 = pneg %p314
      $region70: #{podos_forward.1} parent=35 // pred_check_branch
        %554 = sbr.rel (%p552) target = $region72
      $region71: #{podos_forward.1} parent=35 // pred_region
        %p555 = scmp.lt.s32.totalorder %s23, 1
        %s556 = scalar_select %p555, %s23, 1
        %s557 = scalar_lea.vmem %s11, %s556
      $region72: #{podos_forward.1} parent=35 // pred_fallthru
        _
      // Predicated region
      $region73: #{podos_forward.1} parent=35 // pred_check
        %p558 = pneg %p340
      $region74: #{podos_forward.1} parent=35 // pred_check_branch
        %560 = sbr.rel (%p558) target = $region76
      $region75: #{podos_forward.1} parent=35 // pred_region
        %p561 = scmp.lt.s32.totalorder %s23, 1
        %s562 = scalar_select %p561, %s23, 1
        %s563 = scalar_lea.vmem %s12, %s562
      $region76: #{podos_forward.1} parent=35 // pred_fallthru
        _
      // Predicated region
      $region77: #{podos_forward.1} parent=35 // pred_check
        %p564 = pneg %p366
      $region78: #{podos_forward.1} parent=35 // pred_check_branch
        %566 = sbr.rel (%p564) target = $region80
      $region79: #{podos_forward.1} parent=35 // pred_region
        %p567 = scmp.lt.s32.totalorder %s23, 1
        %s568 = scalar_select %p567, %s23, 1
        %s569 = scalar_lea.vmem %s13, %s568
      $region80: #{podos_forward.1} parent=35 // pred_fallthru
        _
      // Predicated region
      $region81: #{podos_forward.1} parent=35 // pred_check
        %p570 = pneg %p392
      $region82: #{podos_forward.1} parent=35 // pred_check_branch
        %572 = sbr.rel (%p570) target = $region84
      $region83: #{podos_forward.1} parent=35 // pred_region
        %p573 = scmp.lt.s32.totalorder %s23, 1
        %s574 = scalar_select %p573, %s23, 1
        %s575 = scalar_lea.vmem %s14, %s574
      $region84: #{podos_forward.1} parent=35 // pred_fallthru
        _
    $region36: #{podos_forward.1} parent=5 // pred_fallthru
      _
    %p576 = scmp.le.s32.totalorder 1, %s23
    %p577 = scmp.lt.s32.totalorder %s23, 3
    %p578 = pnand %p576, %p577
    %p579 = pneg %p578
    // Predicated region
    $region85: #{podos_forward.1} parent=5 // pred_check
      _
    $region86: #{podos_forward.1} parent=5 // pred_check_branch
      %581 = sbr.rel (%p578) target = $region88
    $region87: #{podos_forward.1} parent=5 // pred_region
      %s582 = ssub.s32 %s23, 1
      %p583 = pneg %p44
      %p584 = pneg %p41
      %p585 = pneg %p65
      %p586 = pneg %p62
      %p587 = pneg %p86
      %p588 = pneg %p83
      %p589 = scmp.lt.s32.totalorder %s28, 1
      %s590 = scalar_select %p589, %s28, 1
      %s591 = smul.addr %s590, 4
      %s592 = smul.addr %s591, 8
      %s593 = scalar_lea.vmem %s3, %s592
      %p594 = pneg %p112
      %p595 = pneg %p109
      %p596 = scmp.lt.s32.totalorder %s28, 1
      %s597 = scalar_select %p596, %s28, 1
      %s598 = scalar_lea.vmem %s4, %s597
      %p599 = pneg %p138
      %p600 = pneg %p135
      %p601 = scmp.lt.s32.totalorder %s28, 1
      %s602 = scalar_select %p601, %s28, 1
      %s603 = smul.addr %s602, 4
      %s604 = smul.addr %s603, 8
      %s605 = scalar_lea.vmem %s5, %s604
      %p606 = pneg %p164
      %p607 = pneg %p161
      %p608 = scmp.lt.s32.totalorder %s28, 1
      %s609 = scalar_select %p608, %s28, 1
      %s610 = scalar_lea.vmem %s6, %s609
      %p611 = pneg %p190
      %p612 = pneg %p187
      %p613 = scmp.lt.s32.totalorder %s28, 1
      %s614 = scalar_select %p613, %s28, 1
      %s615 = smul.addr %s614, 64
      %s616 = smul.addr %s615, 4
      %s617 = scalar_lea.vmem %s7, %s616
      %p618 = pneg %p216
      %p619 = pneg %p213
      %p620 = scmp.lt.s32.totalorder %s28, 1
      %s621 = scalar_select %p620, %s28, 1
      %s622 = smul.addr %s621, 16
      %s623 = scalar_lea.vmem %s8, %s622
      %p624 = pneg %p242
      %p625 = pneg %p239
      %p626 = scmp.lt.s32.totalorder %s28, 1
      %s627 = scalar_select %p626, %s28, 1
      %s628 = smul.addr %s627, 256
      %s629 = smul.addr %s628, 4
      %s630 = scalar_lea.vmem %s9, %s629
      %p631 = pneg %p268
      %p632 = pneg %p265
      %p633 = scmp.lt.s32.totalorder %s28, 1
      %s634 = scalar_select %p633, %s28, 1
      %s635 = scalar_lea.vmem %s10, %s634
      %p636 = pneg %p294
      %p637 = pneg %p291
      %p638 = scmp.lt.s32.totalorder %s28, 1
      %s639 = scalar_select %p638, %s28, 1
      %s640 = scalar_lea.vmem %s11, %s639
      %p641 = pneg %p320
      %p642 = pneg %p317
      %p643 = scmp.lt.s32.totalorder %s28, 1
      %s644 = scalar_select %p643, %s28, 1
      %s645 = scalar_lea.vmem %s12, %s644
      %p646 = pneg %p346
      %p647 = pneg %p343
      %p648 = scmp.lt.s32.totalorder %s28, 1
      %s649 = scalar_select %p648, %s28, 1
      %s650 = scalar_lea.vmem %s13, %s649
      %p651 = pneg %p372
      %p652 = pneg %p369
      %p653 = scmp.lt.s32.totalorder %s28, 1
      %s654 = scalar_select %p653, %s28, 1
      %s655 = scalar_lea.vmem %s14, %s654
      %p656 = pneg %p398
      %p657 = pneg %p395
      %p658 = pneg %p419
      %p659 = pneg %p416
      %p660 = pneg %p440
      %p661 = pneg %p437
      %p662 = pneg %p461
      %p663 = pneg %p458
      %p664 = scmp.lt.s32.totalorder %s28, 1
      %s665 = scalar_select %p664, %s28, 1
      %s666 = smul.addr %s665, 4
      %s667 = smul.addr %s666, 8
      %s668 = scalar_lea.vmem %s3, %s667
      %p669 = scmp.lt.s32.totalorder %s28, 1
      %s670 = scalar_select %p669, %s28, 1
      %s671 = scalar_lea.vmem %s4, %s670
      %p672 = scmp.lt.s32.totalorder %s28, 1
      %s673 = scalar_select %p672, %s28, 1
      %s674 = smul.addr %s673, 4
      %s675 = smul.addr %s674, 8
      %s676 = scalar_lea.vmem %s5, %s675
      %p677 = scmp.lt.s32.totalorder %s28, 1
      %s678 = scalar_select %p677, %s28, 1
      %s679 = scalar_lea.vmem %s6, %s678
      %p680 = scmp.lt.s32.totalorder %s28, 1
      %s681 = scalar_select %p680, %s28, 1
      %s682 = smul.addr %s681, 64
      %s683 = smul.addr %s682, 4
      %s684 = scalar_lea.vmem %s7, %s683
      %p685 = scmp.lt.s32.totalorder %s28, 1
      %s686 = scalar_select %p685, %s28, 1
      %s687 = smul.addr %s686, 16
      %s688 = scalar_lea.vmem %s8, %s687
      %p689 = scmp.lt.s32.totalorder %s28, 1
      %s690 = scalar_select %p689, %s28, 1
      %s691 = smul.addr %s690, 256
      %s692 = smul.addr %s691, 4
      %s693 = scalar_lea.vmem %s9, %s692
      %p694 = scmp.lt.s32.totalorder %s28, 1
      %s695 = scalar_select %p694, %s28, 1
      %s696 = scalar_lea.vmem %s10, %s695
      %p697 = scmp.lt.s32.totalorder %s28, 1
      %s698 = scalar_select %p697, %s28, 1
      %s699 = scalar_lea.vmem %s11, %s698
      %p700 = scmp.lt.s32.totalorder %s28, 1
      %s701 = scalar_select %p700, %s28, 1
      %s702 = scalar_lea.vmem %s12, %s701
      %p703 = scmp.lt.s32.totalorder %s28, 1
      %s704 = scalar_select %p703, %s28, 1
      %s705 = scalar_lea.vmem %s13, %s704
      %p706 = scmp.lt.s32.totalorder %s28, 1
      %s707 = scalar_select %p706, %s28, 1
      %s708 = scalar_lea.vmem %s14, %s707
      %p710 = scmp.eq.s32.totalorder %s28, 0
      // Predicated region
      $region89: #{podos_forward.1} parent=87 // pred_check
        %p711 = pneg %p710
      $region90: #{podos_forward.1} parent=87 // pred_check_branch
        %713 = sbr.rel (%p711) target = $region92
      $region91: #{podos_forward.1} parent=87 // pred_region
        %v714 = vld [vmem:[%s0] sm:$0xff]
        %v715 = vld [vmem:[%s1] sm:$0xff]
        %v716 = vld [vmem:[%s1 + $0x8] sm:$0xff]
        %v717 = vld [vmem:[%s2] sm:$0x1]
        %v719 = vlaneseq
        %v720 = vshrl.u32 %v719, 7
        %v721 = vsub.s32 0, %v720
        %v722 = vrot.slane %v717, %v721
        %vm724 = vcmask 130048
        %v726 = vsel %vm724, %v714, 0
        %728 = vmatprep.subr.mxu0 0.0
        %729 = vmatpush1.msra.mxu0 0.0
        %730 = vmatprep.subr.mxu0 0.0
        %731 = vmatpush1.msra.mxu0 0.0
        %732 = vmatprep.subr.mxu0 0.0
        %733 = vmatpush1.msra.mxu0 0.0
        %734 = vmatprep.subr.mxu0 0.0
        %735 = vmatpush1.msra.mxu0 0.0
        %736 = vmatprep.subr.mxu0 0.0
        %737 = vmatpush1.msra.mxu0 0.0
        %738 = vmatprep.subr.mxu0 0.0
        %739 = vmatpush1.msra.mxu0 0.0
        %740 = vmatprep.subr.mxu0 0.0
        %741 = vmatpush1.msra.mxu0 0.0
        %742 = vmatprep.subr.mxu0 0.0
        %743 = vmatpush1.msra.mxu0 0.0
        %744 = vmatprep.subr.mxu0 0.0
        %745 = vmatpush1.msra.mxu0 0.0
        %746 = vmatprep.subr.mxu0 0.0
        %747 = vmatpush1.msra.mxu0 0.0
        %748 = vmatprep.subr.mxu0 0.0
        %749 = vmatpush1.msra.mxu0 0.0
        %750 = vmatprep.subr.mxu0 0.0
        %751 = vmatpush1.msra.mxu0 0.0
        %752 = vmatprep.subr.mxu0 0.0
        %753 = vmatpush1.msra.mxu0 0.0
        %754 = vmatprep.subr.mxu0 0.0
        %755 = vmatpush1.msra.mxu0 0.0
        %756 = vmatprep.subr.mxu0 0.0
        %757 = vmatpush1.msra.mxu0 %v716
        %758 = vmatprep.subr.mxu0 0.0
        %759 = vmatpush1.msra.mxu0 %v715
        %760 = vmatprep.subr.mxu0 0.0
        %761 = vmatpush2.msra.mxu0 0.0
        %762 = vmatprep.subr.mxu0 0.0
        %763 = vmatpush2.msra.mxu0 0.0
        %764 = vmatprep.subr.mxu0 0.0
        %765 = vmatpush2.msra.mxu0 0.0
        %766 = vmatprep.subr.mxu0 0.0
        %767 = vmatpush2.msra.mxu0 0.0
        %768 = vmatprep.subr.mxu0 0.0
        %769 = vmatpush2.msra.mxu0 0.0
        %770 = vmatprep.subr.mxu0 0.0
        %771 = vmatpush2.msra.mxu0 0.0
        %772 = vmatprep.subr.mxu0 0.0
        %773 = vmatpush2.msra.mxu0 0.0
        %774 = vmatprep.subr.mxu0 0.0
        %775 = vmatpush2.msra.mxu0 0.0
        %776 = vmatprep.subr.mxu0 0.0
        %777 = vmatpush2.msra.mxu0 0.0
        %778 = vmatprep.subr.mxu0 0.0
        %779 = vmatpush2.msra.mxu0 0.0
        %780 = vmatprep.subr.mxu0 0.0
        %781 = vmatpush2.msra.mxu0 0.0
        %782 = vmatprep.subr.mxu0 0.0
        %783 = vmatpush2.msra.mxu0 0.0
        %784 = vmatprep.subr.mxu0 0.0
        %785 = vmatpush2.msra.mxu0 0.0
        %786 = vmatprep.subr.mxu0 0.0
        %787 = vmatpush2.msra.mxu0 0.0
        %788 = vmatprep.subr.mxu0 0.0
        %789 = vmatpush2.msra.mxu0 0.0
        %790 = vmatprep.subr.mxu0 0.0
        %791 = vmatpush2.msra.mxu0 0.0
        %792 = vmatprep.mubr.f32.mxu0 0.0
        %793 = vmatmul.mubr.f32.gmra.mxu0 %v726
        %v794 = vpop.f32.mrf.mxu0
        %v795 = vadd.f32 %v722, %v794
        %v796 = vpop.f32.mrf.mxu0
        %797 = vdwg.mxu0
        %vm798 = vcmask 261120
        %799 = vst.msk [vmem:[#allocation2] sm:$0xff] %vm798, %v795
      $region92: #{podos_forward.1} parent=87 // pred_fallthru
        _
      %v800 = vld [vmem:[#allocation2] sm:$0xff]
      %v801 = vld [vmem:[%s668] sm:$0xff]
      %v802 = vld [vmem:[%s668 + $0x8] sm:$0xff]
      %v803 = vld [vmem:[%s668 + $0x10] sm:$0xff]
      %v804 = vld [vmem:[%s668 + $0x18] sm:$0xff]
      %v805 = vld [vmem:[%s671] sm:$0x1]
      %v807 = vlaneseq
      %v808 = vshrl.u32 %v807, 7
      %v809 = vsub.s32 0, %v808
      %v810 = vrot.slane %v805, %v809
      %vm812 = vcmask 261120
      %v814 = vsel %vm812, %v800, 0
      %816 = vmatprep.subr.mxu0 0.0
      %817 = vmatpush1.msra.mxu0 0.0
      %818 = vmatprep.subr.mxu0 0.0
      %819 = vmatpush1.msra.mxu0 0.0
      %820 = vmatprep.subr.mxu0 0.0
      %821 = vmatpush1.msra.mxu0 0.0
      %822 = vmatprep.subr.mxu0 0.0
      %823 = vmatpush1.msra.mxu0 0.0
      %824 = vmatprep.subr.mxu0 0.0
      %825 = vmatpush1.msra.mxu0 0.0
      %826 = vmatprep.subr.mxu0 0.0
      %827 = vmatpush1.msra.mxu0 0.0
      %828 = vmatprep.subr.mxu0 0.0
      %829 = vmatpush1.msra.mxu0 0.0
      %830 = vmatprep.subr.mxu0 0.0
      %831 = vmatpush1.msra.mxu0 0.0
      %832 = vmatprep.subr.mxu0 0.0
      %833 = vmatpush1.msra.mxu0 0.0
      %834 = vmatprep.subr.mxu0 0.0
      %835 = vmatpush1.msra.mxu0 0.0
      %836 = vmatprep.subr.mxu0 0.0
      %837 = vmatpush1.msra.mxu0 0.0
      %838 = vmatprep.subr.mxu0 0.0
      %839 = vmatpush1.msra.mxu0 0.0
      %840 = vmatprep.subr.mxu0 0.0
      %841 = vmatpush1.msra.mxu0 %v804
      %842 = vmatprep.subr.mxu0 0.0
      %843 = vmatpush1.msra.mxu0 %v803
      %844 = vmatprep.subr.mxu0 0.0
      %845 = vmatpush1.msra.mxu0 %v802
      %846 = vmatprep.subr.mxu0 0.0
      %847 = vmatpush1.msra.mxu0 %v801
      %848 = vmatprep.subr.mxu0 0.0
      %849 = vmatpush2.msra.mxu0 0.0
      %850 = vmatprep.subr.mxu0 0.0
      %851 = vmatpush2.msra.mxu0 0.0
      %852 = vmatprep.subr.mxu0 0.0
      %853 = vmatpush2.msra.mxu0 0.0
      %854 = vmatprep.subr.mxu0 0.0
      %855 = vmatpush2.msra.mxu0 0.0
      %856 = vmatprep.subr.mxu0 0.0
      %857 = vmatpush2.msra.mxu0 0.0
      %858 = vmatprep.subr.mxu0 0.0
      %859 = vmatpush2.msra.mxu0 0.0
      %860 = vmatprep.subr.mxu0 0.0
      %861 = vmatpush2.msra.mxu0 0.0
      %862 = vmatprep.subr.mxu0 0.0
      %863 = vmatpush2.msra.mxu0 0.0
      %864 = vmatprep.subr.mxu0 0.0
      %865 = vmatpush2.msra.mxu0 0.0
      %866 = vmatprep.subr.mxu0 0.0
      %867 = vmatpush2.msra.mxu0 0.0
      %868 = vmatprep.subr.mxu0 0.0
      %869 = vmatpush2.msra.mxu0 0.0
      %870 = vmatprep.subr.mxu0 0.0
      %871 = vmatpush2.msra.mxu0 0.0
      %872 = vmatprep.subr.mxu0 0.0
      %873 = vmatpush2.msra.mxu0 0.0
      %874 = vmatprep.subr.mxu0 0.0
      %875 = vmatpush2.msra.mxu0 0.0
      %876 = vmatprep.subr.mxu0 0.0
      %877 = vmatpush2.msra.mxu0 0.0
      %878 = vmatprep.subr.mxu0 0.0
      %879 = vmatpush2.msra.mxu0 0.0
      %880 = vmatprep.mubr.f32.mxu0 0.0
      %881 = vmatmul.mubr.f32.gmra.mxu0 %v814
      %v882 = vpop.f32.mrf.mxu0
      %v883 = vadd.f32 %v810, %v882
      %v884 = vpop.f32.mrf.mxu0
      %885 = vdwg.mxu0
      %v886 = vmul.f32 %v883, 0.35355338
      %v887 = vld [vmem:[%s676] sm:$0xff]
      %v888 = vld [vmem:[%s676 + $0x8] sm:$0xff]
      %v889 = vld [vmem:[%s676 + $0x10] sm:$0xff]
      %v890 = vld [vmem:[%s676 + $0x18] sm:$0xff]
      %892 = vrot.lane.b32.xlu0 %v883, 96
      %v893 = vpop.permute.xlu0 %892
      %vm894 = vcmask 64512
      %v896 = vsel %vm894, %v886, 0
      %v898 = vsel %vm894, %v893, 0
      %900 = vmatprep.subr.mxu0 0.0
      %901 = vmatpush1.xpose.msra.mxu0 0.0
      %902 = vmatprep.subr.mxu0 0.0
      %903 = vmatpush1.xpose.msra.mxu0 0.0
      %904 = vmatprep.subr.mxu0 0.0
      %905 = vmatpush1.xpose.msra.mxu0 0.0
      %906 = vmatprep.subr.mxu0 0.0
      %907 = vmatpush1.xpose.msra.mxu0 0.0
      %908 = vmatprep.subr.mxu0 0.0
      %909 = vmatpush1.xpose.msra.mxu0 0.0
      %910 = vmatprep.subr.mxu0 0.0
      %911 = vmatpush1.xpose.msra.mxu0 0.0
      %912 = vmatprep.subr.mxu0 0.0
      %913 = vmatpush1.xpose.msra.mxu0 0.0
      %914 = vmatprep.subr.mxu0 0.0
      %915 = vmatpush1.xpose.msra.mxu0 0.0
      %916 = vmatprep.subr.mxu0 0.0
      %917 = vmatpush1.xpose.msra.mxu0 0.0
      %918 = vmatprep.subr.mxu0 0.0
      %919 = vmatpush1.xpose.msra.mxu0 0.0
      %920 = vmatprep.subr.mxu0 0.0
      %921 = vmatpush1.xpose.msra.mxu0 0.0
      %922 = vmatprep.subr.mxu0 0.0
      %923 = vmatpush1.xpose.msra.mxu0 0.0
      %924 = vmatprep.subr.mxu0 0.0
      %925 = vmatpush1.xpose.msra.mxu0 0.0
      %926 = vmatprep.subr.mxu0 0.0
      %927 = vmatpush1.xpose.msra.mxu0 0.0
      %928 = vmatprep.subr.mxu0 0.0
      %929 = vmatpush1.xpose.msra.mxu0 0.0
      %930 = vmatprep.subr.mxu0 0.0
      %931 = vmatpush1.xpose.msra.mxu0 %v898
      %932 = vmatprep.subr.mxu0 0.0
      %933 = vmatpush2.xpose.msra.mxu0 0.0
      %934 = vmatprep.subr.mxu0 0.0
      %935 = vmatpush2.xpose.msra.mxu0 0.0
      %936 = vmatprep.subr.mxu0 0.0
      %937 = vmatpush2.xpose.msra.mxu0 0.0
      %938 = vmatprep.subr.mxu0 0.0
      %939 = vmatpush2.xpose.msra.mxu0 0.0
      %940 = vmatprep.subr.mxu0 0.0
      %941 = vmatpush2.xpose.msra.mxu0 0.0
      %942 = vmatprep.subr.mxu0 0.0
      %943 = vmatpush2.xpose.msra.mxu0 0.0
      %944 = vmatprep.subr.mxu0 0.0
      %945 = vmatpush2.xpose.msra.mxu0 0.0
      %946 = vmatprep.subr.mxu0 0.0
      %947 = vmatpush2.xpose.msra.mxu0 0.0
      %948 = vmatprep.subr.mxu0 0.0
      %949 = vmatpush2.xpose.msra.mxu0 0.0
      %950 = vmatprep.subr.mxu0 0.0
      %951 = vmatpush2.xpose.msra.mxu0 0.0
      %952 = vmatprep.subr.mxu0 0.0
      %953 = vmatpush2.xpose.msra.mxu0 0.0
      %954 = vmatprep.subr.mxu0 0.0
      %955 = vmatpush2.xpose.msra.mxu0 0.0
      %956 = vmatprep.subr.mxu0 0.0
      %957 = vmatpush2.xpose.msra.mxu0 0.0
      %958 = vmatprep.subr.mxu0 0.0
      %959 = vmatpush2.xpose.msra.mxu0 0.0
      %960 = vmatprep.subr.mxu0 0.0
      %961 = vmatpush2.xpose.msra.mxu0 0.0
      %962 = vmatprep.subr.mxu0 0.0
      %963 = vmatpush2.xpose.msra.mxu0 0.0
      %964 = vmatprep.mubr.f32.mxu0 0.0
      %965 = vmatmul.mubr.f32.gmra.mxu0 %v896
      %v966 = vpop.f32.mrf.mxu0
      %v967 = vadd.f32 0.0, %v966
      %v968 = vpop.f32.mrf.mxu0
      %969 = vdwg.mxu0
      %v970 = vsel %vm894, %v967, -inf
      %971 = vmax.xlane.f32.xlu0 %v970
      %v972 = vpop.xlane.xlu0 %971
      %v973 = vsub.f32 %v967, %v972
      %v974 = vmul.f32 %v973, 1.442695
      %v975 = vpow.pop %v974
      %v976 = vsel %vm894, %v975, 0.0
      %977 = vadd.xlane.f32.xlu0 %v976
      %v978 = vpop.xlane.xlu0 %977
      %v979 = vrcp.pop %v978
      %v980 = vmul.f32 %v975, %v979
      %981 = vrot.lane.b32.xlu0 %v883, 64
      %v982 = vpop.permute.xlu0 %981
      %v985 = vsel %vm894, %v980, 0
      %987 = vmatprep.subr.mxu0 0.0
      %988 = vmatpush1.msra.mxu0 0.0
      %989 = vmatprep.subr.mxu0 0.0
      %990 = vmatpush1.msra.mxu0 0.0
      %991 = vmatprep.subr.mxu0 0.0
      %992 = vmatpush1.msra.mxu0 0.0
      %993 = vmatprep.subr.mxu0 0.0
      %994 = vmatpush1.msra.mxu0 0.0
      %995 = vmatprep.subr.mxu0 0.0
      %996 = vmatpush1.msra.mxu0 0.0
      %997 = vmatprep.subr.mxu0 0.0
      %998 = vmatpush1.msra.mxu0 0.0
      %999 = vmatprep.subr.mxu0 0.0
      %1000 = vmatpush1.msra.mxu0 0.0
      %1001 = vmatprep.subr.mxu0 0.0
      %1002 = vmatpush1.msra.mxu0 0.0
      %1003 = vmatprep.subr.mxu0 0.0
      %1004 = vmatpush1.msra.mxu0 0.0
      %1005 = vmatprep.subr.mxu0 0.0
      %1006 = vmatpush1.msra.mxu0 0.0
      %1007 = vmatprep.subr.mxu0 0.0
      %1008 = vmatpush1.msra.mxu0 0.0
      %1009 = vmatprep.subr.mxu0 0.0
      %1010 = vmatpush1.msra.mxu0 0.0
      %1011 = vmatprep.subr.mxu0 0.0
      %1012 = vmatpush1.msra.mxu0 0.0
      %1013 = vmatprep.subr.mxu0 0.0
      %1014 = vmatpush1.msra.mxu0 0.0
      %1015 = vmatprep.subr.mxu0 0.0
      %1016 = vmatpush1.msra.mxu0 0.0
      %1017 = vmatprep.subr.mxu0 0.0
      %1018 = vmatpush1.msra.mxu0 %v982
      %1019 = vmatprep.subr.mxu0 0.0
      %1020 = vmatpush2.msra.mxu0 0.0
      %1021 = vmatprep.subr.mxu0 0.0
      %1022 = vmatpush2.msra.mxu0 0.0
      %1023 = vmatprep.subr.mxu0 0.0
      %1024 = vmatpush2.msra.mxu0 0.0
      %1025 = vmatprep.subr.mxu0 0.0
      %1026 = vmatpush2.msra.mxu0 0.0
      %1027 = vmatprep.subr.mxu0 0.0
      %1028 = vmatpush2.msra.mxu0 0.0
      %1029 = vmatprep.subr.mxu0 0.0
      %1030 = vmatpush2.msra.mxu0 0.0
      %1031 = vmatprep.subr.mxu0 0.0
      %1032 = vmatpush2.msra.mxu0 0.0
      %1033 = vmatprep.subr.mxu0 0.0
      %1034 = vmatpush2.msra.mxu0 0.0
      %1035 = vmatprep.subr.mxu0 0.0
      %1036 = vmatpush2.msra.mxu0 0.0
      %1037 = vmatprep.subr.mxu0 0.0
      %1038 = vmatpush2.msra.mxu0 0.0
      %1039 = vmatprep.subr.mxu0 0.0
      %1040 = vmatpush2.msra.mxu0 0.0
      %1041 = vmatprep.subr.mxu0 0.0
      %1042 = vmatpush2.msra.mxu0 0.0
      %1043 = vmatprep.subr.mxu0 0.0
      %1044 = vmatpush2.msra.mxu0 0.0
      %1045 = vmatprep.subr.mxu0 0.0
      %1046 = vmatpush2.msra.mxu0 0.0
      %1047 = vmatprep.subr.mxu0 0.0
      %1048 = vmatpush2.msra.mxu0 0.0
      %1049 = vmatprep.subr.mxu0 0.0
      %1050 = vmatpush2.msra.mxu0 0.0
      %1051 = vmatprep.mubr.f32.mxu0 0.0
      %1052 = vmatmul.mubr.f32.gmra.mxu0 %v985
      %v1053 = vpop.f32.mrf.mxu0
      %v1054 = vadd.f32 0.0, %v1053
      %v1055 = vpop.f32.mrf.mxu0
      %1056 = vdwg.mxu0
      %1057 = vrot.lane.b32.xlu0 %v886, 120
      %v1058 = vpop.permute.xlu0 %1057
      %1059 = vrot.lane.b32.xlu0 %v883, 88
      %v1060 = vpop.permute.xlu0 %1059
      %v1061 = vsel %vm894, %v1058, 0
      %v1063 = vsel %vm894, %v1060, 0
      %1065 = vmatprep.subr.mxu0 0.0
      %1066 = vmatpush1.xpose.msra.mxu0 0.0
      %1067 = vmatprep.subr.mxu0 0.0
      %1068 = vmatpush1.xpose.msra.mxu0 0.0
      %1069 = vmatprep.subr.mxu0 0.0
      %1070 = vmatpush1.xpose.msra.mxu0 0.0
      %1071 = vmatprep.subr.mxu0 0.0
      %1072 = vmatpush1.xpose.msra.mxu0 0.0
      %1073 = vmatprep.subr.mxu0 0.0
      %1074 = vmatpush1.xpose.msra.mxu0 0.0
      %1075 = vmatprep.subr.mxu0 0.0
      %1076 = vmatpush1.xpose.msra.mxu0 0.0
      %1077 = vmatprep.subr.mxu0 0.0
      %1078 = vmatpush1.xpose.msra.mxu0 0.0
      %1079 = vmatprep.subr.mxu0 0.0
      %1080 = vmatpush1.xpose.msra.mxu0 0.0
      %1081 = vmatprep.subr.mxu0 0.0
      %1082 = vmatpush1.xpose.msra.mxu0 0.0
      %1083 = vmatprep.subr.mxu0 0.0
      %1084 = vmatpush1.xpose.msra.mxu0 0.0
      %1085 = vmatprep.subr.mxu0 0.0
      %1086 = vmatpush1.xpose.msra.mxu0 0.0
      %1087 = vmatprep.subr.mxu0 0.0
      %1088 = vmatpush1.xpose.msra.mxu0 0.0
      %1089 = vmatprep.subr.mxu0 0.0
      %1090 = vmatpush1.xpose.msra.mxu0 0.0
      %1091 = vmatprep.subr.mxu0 0.0
      %1092 = vmatpush1.xpose.msra.mxu0 0.0
      %1093 = vmatprep.subr.mxu0 0.0
      %1094 = vmatpush1.xpose.msra.mxu0 0.0
      %1095 = vmatprep.subr.mxu0 0.0
      %1096 = vmatpush1.xpose.msra.mxu0 %v1063
      %1097 = vmatprep.subr.mxu0 0.0
      %1098 = vmatpush2.xpose.msra.mxu0 0.0
      %1099 = vmatprep.subr.mxu0 0.0
      %1100 = vmatpush2.xpose.msra.mxu0 0.0
      %1101 = vmatprep.subr.mxu0 0.0
      %1102 = vmatpush2.xpose.msra.mxu0 0.0
      %1103 = vmatprep.subr.mxu0 0.0
      %1104 = vmatpush2.xpose.msra.mxu0 0.0
      %1105 = vmatprep.subr.mxu0 0.0
      %1106 = vmatpush2.xpose.msra.mxu0 0.0
      %1107 = vmatprep.subr.mxu0 0.0
      %1108 = vmatpush2.xpose.msra.mxu0 0.0
      %1109 = vmatprep.subr.mxu0 0.0
      %1110 = vmatpush2.xpose.msra.mxu0 0.0
      %1111 = vmatprep.subr.mxu0 0.0
      %1112 = vmatpush2.xpose.msra.mxu0 0.0
      %1113 = vmatprep.subr.mxu0 0.0
      %1114 = vmatpush2.xpose.msra.mxu0 0.0
      %1115 = vmatprep.subr.mxu0 0.0
      %1116 = vmatpush2.xpose.msra.mxu0 0.0
      %1117 = vmatprep.subr.mxu0 0.0
      %1118 = vmatpush2.xpose.msra.mxu0 0.0
      %1119 = vmatprep.subr.mxu0 0.0
      %1120 = vmatpush2.xpose.msra.mxu0 0.0
      %1121 = vmatprep.subr.mxu0 0.0
      %1122 = vmatpush2.xpose.msra.mxu0 0.0
      %1123 = vmatprep.subr.mxu0 0.0
      %1124 = vmatpush2.xpose.msra.mxu0 0.0
      %1125 = vmatprep.subr.mxu0 0.0
      %1126 = vmatpush2.xpose.msra.mxu0 0.0
      %1127 = vmatprep.subr.mxu0 0.0
      %1128 = vmatpush2.xpose.msra.mxu0 0.0
      %1129 = vmatprep.mubr.f32.mxu0 0.0
      %1130 = vmatmul.mubr.f32.gmra.mxu0 %v1061
      %v1131 = vpop.f32.mrf.mxu0
      %v1132 = vadd.f32 0.0, %v1131
      %v1133 = vpop.f32.mrf.mxu0
      %1134 = vdwg.mxu0
      %v1135 = vsel %vm894, %v1132, -inf
      %1136 = vmax.xlane.f32.xlu0 %v1135
      %v1137 = vpop.xlane.xlu0 %1136
      %v1138 = vsub.f32 %v1132, %v1137
      %v1139 = vmul.f32 %v1138, 1.442695
      %v1140 = vpow.pop %v1139
      %v1141 = vsel %vm894, %v1140, 0.0
      %1142 = vadd.xlane.f32.xlu0 %v1141
      %v1143 = vpop.xlane.xlu0 %1142
      %v1144 = vrcp.pop %v1143
      %v1145 = vmul.f32 %v1140, %v1144
      %1146 = vrot.lane.b32.xlu0 %v883, 56
      %v1147 = vpop.permute.xlu0 %1146
      %v1150 = vsel %vm894, %v1145, 0
      %1152 = vmatprep.subr.mxu0 0.0
      %1153 = vmatpush1.msra.mxu0 0.0
      %1154 = vmatprep.subr.mxu0 0.0
      %1155 = vmatpush1.msra.mxu0 0.0
      %1156 = vmatprep.subr.mxu0 0.0
      %1157 = vmatpush1.msra.mxu0 0.0
      %1158 = vmatprep.subr.mxu0 0.0
      %1159 = vmatpush1.msra.mxu0 0.0
      %1160 = vmatprep.subr.mxu0 0.0
      %1161 = vmatpush1.msra.mxu0 0.0
      %1162 = vmatprep.subr.mxu0 0.0
      %1163 = vmatpush1.msra.mxu0 0.0
      %1164 = vmatprep.subr.mxu0 0.0
      %1165 = vmatpush1.msra.mxu0 0.0
      %1166 = vmatprep.subr.mxu0 0.0
      %1167 = vmatpush1.msra.mxu0 0.0
      %1168 = vmatprep.subr.mxu0 0.0
      %1169 = vmatpush1.msra.mxu0 0.0
      %1170 = vmatprep.subr.mxu0 0.0
      %1171 = vmatpush1.msra.mxu0 0.0
      %1172 = vmatprep.subr.mxu0 0.0
      %1173 = vmatpush1.msra.mxu0 0.0
      %1174 = vmatprep.subr.mxu0 0.0
      %1175 = vmatpush1.msra.mxu0 0.0
      %1176 = vmatprep.subr.mxu0 0.0
      %1177 = vmatpush1.msra.mxu0 0.0
      %1178 = vmatprep.subr.mxu0 0.0
      %1179 = vmatpush1.msra.mxu0 0.0
      %1180 = vmatprep.subr.mxu0 0.0
      %1181 = vmatpush1.msra.mxu0 0.0
      %1182 = vmatprep.subr.mxu0 0.0
      %1183 = vmatpush1.msra.mxu0 %v1147
      %1184 = vmatprep.subr.mxu0 0.0
      %1185 = vmatpush2.msra.mxu0 0.0
      %1186 = vmatprep.subr.mxu0 0.0
      %1187 = vmatpush2.msra.mxu0 0.0
      %1188 = vmatprep.subr.mxu0 0.0
      %1189 = vmatpush2.msra.mxu0 0.0
      %1190 = vmatprep.subr.mxu0 0.0
      %1191 = vmatpush2.msra.mxu0 0.0
      %1192 = vmatprep.subr.mxu0 0.0
      %1193 = vmatpush2.msra.mxu0 0.0
      %1194 = vmatprep.subr.mxu0 0.0
      %1195 = vmatpush2.msra.mxu0 0.0
      %1196 = vmatprep.subr.mxu0 0.0
      %1197 = vmatpush2.msra.mxu0 0.0
      %1198 = vmatprep.subr.mxu0 0.0
      %1199 = vmatpush2.msra.mxu0 0.0
      %1200 = vmatprep.subr.mxu0 0.0
      %1201 = vmatpush2.msra.mxu0 0.0
      %1202 = vmatprep.subr.mxu0 0.0
      %1203 = vmatpush2.msra.mxu0 0.0
      %1204 = vmatprep.subr.mxu0 0.0
      %1205 = vmatpush2.msra.mxu0 0.0
      %1206 = vmatprep.subr.mxu0 0.0
      %1207 = vmatpush2.msra.mxu0 0.0
      %1208 = vmatprep.subr.mxu0 0.0
      %1209 = vmatpush2.msra.mxu0 0.0
      %1210 = vmatprep.subr.mxu0 0.0
      %1211 = vmatpush2.msra.mxu0 0.0
      %1212 = vmatprep.subr.mxu0 0.0
      %1213 = vmatpush2.msra.mxu0 0.0
      %1214 = vmatprep.subr.mxu0 0.0
      %1215 = vmatpush2.msra.mxu0 0.0
      %1216 = vmatprep.mubr.f32.mxu0 0.0
      %1217 = vmatmul.mubr.f32.gmra.mxu0 %v1150
      %v1218 = vpop.f32.mrf.mxu0
      %v1219 = vadd.f32 0.0, %v1218
      %v1220 = vpop.f32.mrf.mxu0
      %1221 = vdwg.mxu0
      %v1223 = vsel %vm894, %v1219, 0
      %1225 = vmatprep.subr.mxu0 0.0
      %1226 = vmatpush1.msra.mxu0 0.0
      %1227 = vmatprep.subr.mxu0 0.0
      %1228 = vmatpush1.msra.mxu0 0.0
      %1229 = vmatprep.subr.mxu0 0.0
      %1230 = vmatpush1.msra.mxu0 0.0
      %1231 = vmatprep.subr.mxu0 0.0
      %1232 = vmatpush1.msra.mxu0 0.0
      %1233 = vmatprep.subr.mxu0 0.0
      %1234 = vmatpush1.msra.mxu0 0.0
      %1235 = vmatprep.subr.mxu0 0.0
      %1236 = vmatpush1.msra.mxu0 0.0
      %1237 = vmatprep.subr.mxu0 0.0
      %1238 = vmatpush1.msra.mxu0 0.0
      %1239 = vmatprep.subr.mxu0 0.0
      %1240 = vmatpush1.msra.mxu0 0.0
      %1241 = vmatprep.subr.mxu0 0.0
      %1242 = vmatpush1.msra.mxu0 0.0
      %1243 = vmatprep.subr.mxu0 0.0
      %1244 = vmatpush1.msra.mxu0 0.0
      %1245 = vmatprep.subr.mxu0 0.0
      %1246 = vmatpush1.msra.mxu0 0.0
      %1247 = vmatprep.subr.mxu0 0.0
      %1248 = vmatpush1.msra.mxu0 0.0
      %1249 = vmatprep.subr.mxu0 0.0
      %1250 = vmatpush1.msra.mxu0 0.0
      %1251 = vmatprep.subr.mxu0 0.0
      %1252 = vmatpush1.msra.mxu0 0.0
      %1253 = vmatprep.subr.mxu0 0.0
      %1254 = vmatpush1.msra.mxu0 0.0
      %1255 = vmatprep.subr.mxu0 0.0
      %1256 = vmatpush1.msra.mxu0 %v888
      %1257 = vmatprep.subr.mxu0 0.0
      %1258 = vmatpush2.msra.mxu0 0.0
      %1259 = vmatprep.subr.mxu0 0.0
      %1260 = vmatpush2.msra.mxu0 0.0
      %1261 = vmatprep.subr.mxu0 0.0
      %1262 = vmatpush2.msra.mxu0 0.0
      %1263 = vmatprep.subr.mxu0 0.0
      %1264 = vmatpush2.msra.mxu0 0.0
      %1265 = vmatprep.subr.mxu0 0.0
      %1266 = vmatpush2.msra.mxu0 0.0
      %1267 = vmatprep.subr.mxu0 0.0
      %1268 = vmatpush2.msra.mxu0 0.0
      %1269 = vmatprep.subr.mxu0 0.0
      %1270 = vmatpush2.msra.mxu0 0.0
      %1271 = vmatprep.subr.mxu0 0.0
      %1272 = vmatpush2.msra.mxu0 0.0
      %1273 = vmatprep.subr.mxu0 0.0
      %1274 = vmatpush2.msra.mxu0 0.0
      %1275 = vmatprep.subr.mxu0 0.0
      %1276 = vmatpush2.msra.mxu0 0.0
      %1277 = vmatprep.subr.mxu0 0.0
      %1278 = vmatpush2.msra.mxu0 0.0
      %1279 = vmatprep.subr.mxu0 0.0
      %1280 = vmatpush2.msra.mxu0 0.0
      %1281 = vmatprep.subr.mxu0 0.0
      %1282 = vmatpush2.msra.mxu0 0.0
      %1283 = vmatprep.subr.mxu0 0.0
      %1284 = vmatpush2.msra.mxu0 0.0
      %1285 = vmatprep.subr.mxu0 0.0
      %1286 = vmatpush2.msra.mxu0 0.0
      %1287 = vmatprep.subr.mxu0 0.0
      %1288 = vmatpush2.msra.mxu0 0.0
      %1289 = vmatprep.mubr.f32.mxu0 0.0
      %1290 = vmatmul.mubr.f32.gmra.mxu0 %v1223
      %v1291 = vpop.f32.mrf.mxu0
      %v1292 = vadd.f32 0.0, %v1291
      %v1293 = vpop.f32.mrf.mxu0
      %1294 = vdwg.mxu0
      %v1296 = vsel %vm894, %v1054, 0
      %1298 = vmatprep.subr.mxu0 0.0
      %1299 = vmatpush1.msra.mxu0 0.0
      %1300 = vmatprep.subr.mxu0 0.0
      %1301 = vmatpush1.msra.mxu0 0.0
      %1302 = vmatprep.subr.mxu0 0.0
      %1303 = vmatpush1.msra.mxu0 0.0
      %1304 = vmatprep.subr.mxu0 0.0
      %1305 = vmatpush1.msra.mxu0 0.0
      %1306 = vmatprep.subr.mxu0 0.0
      %1307 = vmatpush1.msra.mxu0 0.0
      %1308 = vmatprep.subr.mxu0 0.0
      %1309 = vmatpush1.msra.mxu0 0.0
      %1310 = vmatprep.subr.mxu0 0.0
      %1311 = vmatpush1.msra.mxu0 0.0
      %1312 = vmatprep.subr.mxu0 0.0
      %1313 = vmatpush1.msra.mxu0 0.0
      %1314 = vmatprep.subr.mxu0 0.0
      %1315 = vmatpush1.msra.mxu0 0.0
      %1316 = vmatprep.subr.mxu0 0.0
      %1317 = vmatpush1.msra.mxu0 0.0
      %1318 = vmatprep.subr.mxu0 0.0
      %1319 = vmatpush1.msra.mxu0 0.0
      %1320 = vmatprep.subr.mxu0 0.0
      %1321 = vmatpush1.msra.mxu0 0.0
      %1322 = vmatprep.subr.mxu0 0.0
      %1323 = vmatpush1.msra.mxu0 0.0
      %1324 = vmatprep.subr.mxu0 0.0
      %1325 = vmatpush1.msra.mxu0 0.0
      %1326 = vmatprep.subr.mxu0 0.0
      %1327 = vmatpush1.msra.mxu0 0.0
      %1328 = vmatprep.subr.mxu0 0.0
      %1329 = vmatpush1.msra.mxu0 %v887
      %1330 = vmatprep.subr.mxu0 0.0
      %1331 = vmatpush2.msra.mxu0 0.0
      %1332 = vmatprep.subr.mxu0 0.0
      %1333 = vmatpush2.msra.mxu0 0.0
      %1334 = vmatprep.subr.mxu0 0.0
      %1335 = vmatpush2.msra.mxu0 0.0
      %1336 = vmatprep.subr.mxu0 0.0
      %1337 = vmatpush2.msra.mxu0 0.0
      %1338 = vmatprep.subr.mxu0 0.0
      %1339 = vmatpush2.msra.mxu0 0.0
      %1340 = vmatprep.subr.mxu0 0.0
      %1341 = vmatpush2.msra.mxu0 0.0
      %1342 = vmatprep.subr.mxu0 0.0
      %1343 = vmatpush2.msra.mxu0 0.0
      %1344 = vmatprep.subr.mxu0 0.0
      %1345 = vmatpush2.msra.mxu0 0.0
      %1346 = vmatprep.subr.mxu0 0.0
      %1347 = vmatpush2.msra.mxu0 0.0
      %1348 = vmatprep.subr.mxu0 0.0
      %1349 = vmatpush2.msra.mxu0 0.0
      %1350 = vmatprep.subr.mxu0 0.0
      %1351 = vmatpush2.msra.mxu0 0.0
      %1352 = vmatprep.subr.mxu0 0.0
      %1353 = vmatpush2.msra.mxu0 0.0
      %1354 = vmatprep.subr.mxu0 0.0
      %1355 = vmatpush2.msra.mxu0 0.0
      %1356 = vmatprep.subr.mxu0 0.0
      %1357 = vmatpush2.msra.mxu0 0.0
      %1358 = vmatprep.subr.mxu0 0.0
      %1359 = vmatpush2.msra.mxu0 0.0
      %1360 = vmatprep.subr.mxu0 0.0
      %1361 = vmatpush2.msra.mxu0 0.0
      %1362 = vmatprep.mubr.f32.mxu0 0.0
      %1363 = vmatmul.mubr.f32.gmra.mxu0 %v1296
      %v1364 = vpop.f32.mrf.mxu0
      %v1365 = vadd.f32 %v1292, %v1364
      %v1366 = vpop.f32.mrf.mxu0
      %1367 = vdwg.mxu0
      %1368 = vrot.lane.b32.xlu0 %v886, 112
      %v1369 = vpop.permute.xlu0 %1368
      %1370 = vrot.lane.b32.xlu0 %v883, 80
      %v1371 = vpop.permute.xlu0 %1370
      %v1372 = vsel %vm894, %v1369, 0
      %v1374 = vsel %vm894, %v1371, 0
      %1376 = vmatprep.subr.mxu0 0.0
      %1377 = vmatpush1.xpose.msra.mxu0 0.0
      %1378 = vmatprep.subr.mxu0 0.0
      %1379 = vmatpush1.xpose.msra.mxu0 0.0
      %1380 = vmatprep.subr.mxu0 0.0
      %1381 = vmatpush1.xpose.msra.mxu0 0.0
      %1382 = vmatprep.subr.mxu0 0.0
      %1383 = vmatpush1.xpose.msra.mxu0 0.0
      %1384 = vmatprep.subr.mxu0 0.0
      %1385 = vmatpush1.xpose.msra.mxu0 0.0
      %1386 = vmatprep.subr.mxu0 0.0
      %1387 = vmatpush1.xpose.msra.mxu0 0.0
      %1388 = vmatprep.subr.mxu0 0.0
      %1389 = vmatpush1.xpose.msra.mxu0 0.0
      %1390 = vmatprep.subr.mxu0 0.0
      %1391 = vmatpush1.xpose.msra.mxu0 0.0
      %1392 = vmatprep.subr.mxu0 0.0
      %1393 = vmatpush1.xpose.msra.mxu0 0.0
      %1394 = vmatprep.subr.mxu0 0.0
      %1395 = vmatpush1.xpose.msra.mxu0 0.0
      %1396 = vmatprep.subr.mxu0 0.0
      %1397 = vmatpush1.xpose.msra.mxu0 0.0
      %1398 = vmatprep.subr.mxu0 0.0
      %1399 = vmatpush1.xpose.msra.mxu0 0.0
      %1400 = vmatprep.subr.mxu0 0.0
      %1401 = vmatpush1.xpose.msra.mxu0 0.0
      %1402 = vmatprep.subr.mxu0 0.0
      %1403 = vmatpush1.xpose.msra.mxu0 0.0
      %1404 = vmatprep.subr.mxu0 0.0
      %1405 = vmatpush1.xpose.msra.mxu0 0.0
      %1406 = vmatprep.subr.mxu0 0.0
      %1407 = vmatpush1.xpose.msra.mxu0 %v1374
      %1408 = vmatprep.subr.mxu0 0.0
      %1409 = vmatpush2.xpose.msra.mxu0 0.0
      %1410 = vmatprep.subr.mxu0 0.0
      %1411 = vmatpush2.xpose.msra.mxu0 0.0
      %1412 = vmatprep.subr.mxu0 0.0
      %1413 = vmatpush2.xpose.msra.mxu0 0.0
      %1414 = vmatprep.subr.mxu0 0.0
      %1415 = vmatpush2.xpose.msra.mxu0 0.0
      %1416 = vmatprep.subr.mxu0 0.0
      %1417 = vmatpush2.xpose.msra.mxu0 0.0
      %1418 = vmatprep.subr.mxu0 0.0
      %1419 = vmatpush2.xpose.msra.mxu0 0.0
      %1420 = vmatprep.subr.mxu0 0.0
      %1421 = vmatpush2.xpose.msra.mxu0 0.0
      %1422 = vmatprep.subr.mxu0 0.0
      %1423 = vmatpush2.xpose.msra.mxu0 0.0
      %1424 = vmatprep.subr.mxu0 0.0
      %1425 = vmatpush2.xpose.msra.mxu0 0.0
      %1426 = vmatprep.subr.mxu0 0.0
      %1427 = vmatpush2.xpose.msra.mxu0 0.0
      %1428 = vmatprep.subr.mxu0 0.0
      %1429 = vmatpush2.xpose.msra.mxu0 0.0
      %1430 = vmatprep.subr.mxu0 0.0
      %1431 = vmatpush2.xpose.msra.mxu0 0.0
      %1432 = vmatprep.subr.mxu0 0.0
      %1433 = vmatpush2.xpose.msra.mxu0 0.0
      %1434 = vmatprep.subr.mxu0 0.0
      %1435 = vmatpush2.xpose.msra.mxu0 0.0
      %1436 = vmatprep.subr.mxu0 0.0
      %1437 = vmatpush2.xpose.msra.mxu0 0.0
      %1438 = vmatprep.subr.mxu0 0.0
      %1439 = vmatpush2.xpose.msra.mxu0 0.0
      %1440 = vmatprep.mubr.f32.mxu0 0.0
      %1441 = vmatmul.mubr.f32.gmra.mxu0 %v1372
      %v1442 = vpop.f32.mrf.mxu0
      %v1443 = vadd.f32 0.0, %v1442
      %v1444 = vpop.f32.mrf.mxu0
      %1445 = vdwg.mxu0
      %v1446 = vsel %vm894, %v1443, -inf
      %1447 = vmax.xlane.f32.xlu0 %v1446
      %v1448 = vpop.xlane.xlu0 %1447
      %v1449 = vsub.f32 %v1443, %v1448
      %v1450 = vmul.f32 %v1449, 1.442695
      %v1451 = vpow.pop %v1450
      %v1452 = vsel %vm894, %v1451, 0.0
      %1453 = vadd.xlane.f32.xlu0 %v1452
      %v1454 = vpop.xlane.xlu0 %1453
      %v1455 = vrcp.pop %v1454
      %v1456 = vmul.f32 %v1451, %v1455
      %1457 = vrot.lane.b32.xlu0 %v883, 48
      %v1458 = vpop.permute.xlu0 %1457
      %v1461 = vsel %vm894, %v1456, 0
      %1463 = vmatprep.subr.mxu0 0.0
      %1464 = vmatpush1.msra.mxu0 0.0
      %1465 = vmatprep.subr.mxu0 0.0
      %1466 = vmatpush1.msra.mxu0 0.0
      %1467 = vmatprep.subr.mxu0 0.0
      %1468 = vmatpush1.msra.mxu0 0.0
      %1469 = vmatprep.subr.mxu0 0.0
      %1470 = vmatpush1.msra.mxu0 0.0
      %1471 = vmatprep.subr.mxu0 0.0
      %1472 = vmatpush1.msra.mxu0 0.0
      %1473 = vmatprep.subr.mxu0 0.0
      %1474 = vmatpush1.msra.mxu0 0.0
      %1475 = vmatprep.subr.mxu0 0.0
      %1476 = vmatpush1.msra.mxu0 0.0
      %1477 = vmatprep.subr.mxu0 0.0
      %1478 = vmatpush1.msra.mxu0 0.0
      %1479 = vmatprep.subr.mxu0 0.0
      %1480 = vmatpush1.msra.mxu0 0.0
      %1481 = vmatprep.subr.mxu0 0.0
      %1482 = vmatpush1.msra.mxu0 0.0
      %1483 = vmatprep.subr.mxu0 0.0
      %1484 = vmatpush1.msra.mxu0 0.0
      %1485 = vmatprep.subr.mxu0 0.0
      %1486 = vmatpush1.msra.mxu0 0.0
      %1487 = vmatprep.subr.mxu0 0.0
      %1488 = vmatpush1.msra.mxu0 0.0
      %1489 = vmatprep.subr.mxu0 0.0
      %1490 = vmatpush1.msra.mxu0 0.0
      %1491 = vmatprep.subr.mxu0 0.0
      %1492 = vmatpush1.msra.mxu0 0.0
      %1493 = vmatprep.subr.mxu0 0.0
      %1494 = vmatpush1.msra.mxu0 %v1458
      %1495 = vmatprep.subr.mxu0 0.0
      %1496 = vmatpush2.msra.mxu0 0.0
      %1497 = vmatprep.subr.mxu0 0.0
      %1498 = vmatpush2.msra.mxu0 0.0
      %1499 = vmatprep.subr.mxu0 0.0
      %1500 = vmatpush2.msra.mxu0 0.0
      %1501 = vmatprep.subr.mxu0 0.0
      %1502 = vmatpush2.msra.mxu0 0.0
      %1503 = vmatprep.subr.mxu0 0.0
      %1504 = vmatpush2.msra.mxu0 0.0
      %1505 = vmatprep.subr.mxu0 0.0
      %1506 = vmatpush2.msra.mxu0 0.0
      %1507 = vmatprep.subr.mxu0 0.0
      %1508 = vmatpush2.msra.mxu0 0.0
      %1509 = vmatprep.subr.mxu0 0.0
      %1510 = vmatpush2.msra.mxu0 0.0
      %1511 = vmatprep.subr.mxu0 0.0
      %1512 = vmatpush2.msra.mxu0 0.0
      %1513 = vmatprep.subr.mxu0 0.0
      %1514 = vmatpush2.msra.mxu0 0.0
      %1515 = vmatprep.subr.mxu0 0.0
      %1516 = vmatpush2.msra.mxu0 0.0
      %1517 = vmatprep.subr.mxu0 0.0
      %1518 = vmatpush2.msra.mxu0 0.0
      %1519 = vmatprep.subr.mxu0 0.0
      %1520 = vmatpush2.msra.mxu0 0.0
      %1521 = vmatprep.subr.mxu0 0.0
      %1522 = vmatpush2.msra.mxu0 0.0
      %1523 = vmatprep.subr.mxu0 0.0
      %1524 = vmatpush2.msra.mxu0 0.0
      %1525 = vmatprep.subr.mxu0 0.0
      %1526 = vmatpush2.msra.mxu0 0.0
      %1527 = vmatprep.mubr.f32.mxu0 0.0
      %1528 = vmatmul.mubr.f32.gmra.mxu0 %v1461
      %v1529 = vpop.f32.mrf.mxu0
      %v1530 = vadd.f32 0.0, %v1529
      %v1531 = vpop.f32.mrf.mxu0
      %1532 = vdwg.mxu0
      %v1534 = vsel %vm894, %v1530, 0
      %1536 = vmatprep.subr.mxu0 0.0
      %1537 = vmatpush1.msra.mxu0 0.0
      %1538 = vmatprep.subr.mxu0 0.0
      %1539 = vmatpush1.msra.mxu0 0.0
      %1540 = vmatprep.subr.mxu0 0.0
      %1541 = vmatpush1.msra.mxu0 0.0
      %1542 = vmatprep.subr.mxu0 0.0
      %1543 = vmatpush1.msra.mxu0 0.0
      %1544 = vmatprep.subr.mxu0 0.0
      %1545 = vmatpush1.msra.mxu0 0.0
      %1546 = vmatprep.subr.mxu0 0.0
      %1547 = vmatpush1.msra.mxu0 0.0
      %1548 = vmatprep.subr.mxu0 0.0
      %1549 = vmatpush1.msra.mxu0 0.0
      %1550 = vmatprep.subr.mxu0 0.0
      %1551 = vmatpush1.msra.mxu0 0.0
      %1552 = vmatprep.subr.mxu0 0.0
      %1553 = vmatpush1.msra.mxu0 0.0
      %1554 = vmatprep.subr.mxu0 0.0
      %1555 = vmatpush1.msra.mxu0 0.0
      %1556 = vmatprep.subr.mxu0 0.0
      %1557 = vmatpush1.msra.mxu0 0.0
      %1558 = vmatprep.subr.mxu0 0.0
      %1559 = vmatpush1.msra.mxu0 0.0
      %1560 = vmatprep.subr.mxu0 0.0
      %1561 = vmatpush1.msra.mxu0 0.0
      %1562 = vmatprep.subr.mxu0 0.0
      %1563 = vmatpush1.msra.mxu0 0.0
      %1564 = vmatprep.subr.mxu0 0.0
      %1565 = vmatpush1.msra.mxu0 0.0
      %1566 = vmatprep.subr.mxu0 0.0
      %1567 = vmatpush1.msra.mxu0 %v889
      %1568 = vmatprep.subr.mxu0 0.0
      %1569 = vmatpush2.msra.mxu0 0.0
      %1570 = vmatprep.subr.mxu0 0.0
      %1571 = vmatpush2.msra.mxu0 0.0
      %1572 = vmatprep.subr.mxu0 0.0
      %1573 = vmatpush2.msra.mxu0 0.0
      %1574 = vmatprep.subr.mxu0 0.0
      %1575 = vmatpush2.msra.mxu0 0.0
      %1576 = vmatprep.subr.mxu0 0.0
      %1577 = vmatpush2.msra.mxu0 0.0
      %1578 = vmatprep.subr.mxu0 0.0
      %1579 = vmatpush2.msra.mxu0 0.0
      %1580 = vmatprep.subr.mxu0 0.0
      %1581 = vmatpush2.msra.mxu0 0.0
      %1582 = vmatprep.subr.mxu0 0.0
      %1583 = vmatpush2.msra.mxu0 0.0
      %1584 = vmatprep.subr.mxu0 0.0
      %1585 = vmatpush2.msra.mxu0 0.0
      %1586 = vmatprep.subr.mxu0 0.0
      %1587 = vmatpush2.msra.mxu0 0.0
      %1588 = vmatprep.subr.mxu0 0.0
      %1589 = vmatpush2.msra.mxu0 0.0
      %1590 = vmatprep.subr.mxu0 0.0
      %1591 = vmatpush2.msra.mxu0 0.0
      %1592 = vmatprep.subr.mxu0 0.0
      %1593 = vmatpush2.msra.mxu0 0.0
      %1594 = vmatprep.subr.mxu0 0.0
      %1595 = vmatpush2.msra.mxu0 0.0
      %1596 = vmatprep.subr.mxu0 0.0
      %1597 = vmatpush2.msra.mxu0 0.0
      %1598 = vmatprep.subr.mxu0 0.0
      %1599 = vmatpush2.msra.mxu0 0.0
      %1600 = vmatprep.mubr.f32.mxu0 0.0
      %1601 = vmatmul.mubr.f32.gmra.mxu0 %v1534
      %v1602 = vpop.f32.mrf.mxu0
      %v1603 = vadd.f32 0.0, %v1602
      %v1604 = vpop.f32.mrf.mxu0
      %1605 = vdwg.mxu0
      %v1606 = vadd.f32 %v1365, %v1603
      %1607 = vrot.lane.b32.xlu0 %v886, 104
      %v1608 = vpop.permute.xlu0 %1607
      %1609 = vrot.lane.b32.xlu0 %v883, 72
      %v1610 = vpop.permute.xlu0 %1609
      %v1611 = vsel %vm894, %v1608, 0
      %v1613 = vsel %vm894, %v1610, 0
      %1615 = vmatprep.subr.mxu0 0.0
      %1616 = vmatpush1.xpose.msra.mxu0 0.0
      %1617 = vmatprep.subr.mxu0 0.0
      %1618 = vmatpush1.xpose.msra.mxu0 0.0
      %1619 = vmatprep.subr.mxu0 0.0
      %1620 = vmatpush1.xpose.msra.mxu0 0.0
      %1621 = vmatprep.subr.mxu0 0.0
      %1622 = vmatpush1.xpose.msra.mxu0 0.0
      %1623 = vmatprep.subr.mxu0 0.0
      %1624 = vmatpush1.xpose.msra.mxu0 0.0
      %1625 = vmatprep.subr.mxu0 0.0
      %1626 = vmatpush1.xpose.msra.mxu0 0.0
      %1627 = vmatprep.subr.mxu0 0.0
      %1628 = vmatpush1.xpose.msra.mxu0 0.0
      %1629 = vmatprep.subr.mxu0 0.0
      %1630 = vmatpush1.xpose.msra.mxu0 0.0
      %1631 = vmatprep.subr.mxu0 0.0
      %1632 = vmatpush1.xpose.msra.mxu0 0.0
      %1633 = vmatprep.subr.mxu0 0.0
      %1634 = vmatpush1.xpose.msra.mxu0 0.0
      %1635 = vmatprep.subr.mxu0 0.0
      %1636 = vmatpush1.xpose.msra.mxu0 0.0
      %1637 = vmatprep.subr.mxu0 0.0
      %1638 = vmatpush1.xpose.msra.mxu0 0.0
      %1639 = vmatprep.subr.mxu0 0.0
      %1640 = vmatpush1.xpose.msra.mxu0 0.0
      %1641 = vmatprep.subr.mxu0 0.0
      %1642 = vmatpush1.xpose.msra.mxu0 0.0
      %1643 = vmatprep.subr.mxu0 0.0
      %1644 = vmatpush1.xpose.msra.mxu0 0.0
      %1645 = vmatprep.subr.mxu0 0.0
      %1646 = vmatpush1.xpose.msra.mxu0 %v1613
      %1647 = vmatprep.subr.mxu0 0.0
      %1648 = vmatpush2.xpose.msra.mxu0 0.0
      %1649 = vmatprep.subr.mxu0 0.0
      %1650 = vmatpush2.xpose.msra.mxu0 0.0
      %1651 = vmatprep.subr.mxu0 0.0
      %1652 = vmatpush2.xpose.msra.mxu0 0.0
      %1653 = vmatprep.subr.mxu0 0.0
      %1654 = vmatpush2.xpose.msra.mxu0 0.0
      %1655 = vmatprep.subr.mxu0 0.0
      %1656 = vmatpush2.xpose.msra.mxu0 0.0
      %1657 = vmatprep.subr.mxu0 0.0
      %1658 = vmatpush2.xpose.msra.mxu0 0.0
      %1659 = vmatprep.subr.mxu0 0.0
      %1660 = vmatpush2.xpose.msra.mxu0 0.0
      %1661 = vmatprep.subr.mxu0 0.0
      %1662 = vmatpush2.xpose.msra.mxu0 0.0
      %1663 = vmatprep.subr.mxu0 0.0
      %1664 = vmatpush2.xpose.msra.mxu0 0.0
      %1665 = vmatprep.subr.mxu0 0.0
      %1666 = vmatpush2.xpose.msra.mxu0 0.0
      %1667 = vmatprep.subr.mxu0 0.0
      %1668 = vmatpush2.xpose.msra.mxu0 0.0
      %1669 = vmatprep.subr.mxu0 0.0
      %1670 = vmatpush2.xpose.msra.mxu0 0.0
      %1671 = vmatprep.subr.mxu0 0.0
      %1672 = vmatpush2.xpose.msra.mxu0 0.0
      %1673 = vmatprep.subr.mxu0 0.0
      %1674 = vmatpush2.xpose.msra.mxu0 0.0
      %1675 = vmatprep.subr.mxu0 0.0
      %1676 = vmatpush2.xpose.msra.mxu0 0.0
      %1677 = vmatprep.subr.mxu0 0.0
      %1678 = vmatpush2.xpose.msra.mxu0 0.0
      %1679 = vmatprep.mubr.f32.mxu0 0.0
      %1680 = vmatmul.mubr.f32.gmra.mxu0 %v1611
      %v1681 = vpop.f32.mrf.mxu0
      %v1682 = vadd.f32 0.0, %v1681
      %v1683 = vpop.f32.mrf.mxu0
      %1684 = vdwg.mxu0
      %v1685 = vsel %vm894, %v1682, -inf
      %1686 = vmax.xlane.f32.xlu0 %v1685
      %v1687 = vpop.xlane.xlu0 %1686
      %v1688 = vsub.f32 %v1682, %v1687
      %v1689 = vmul.f32 %v1688, 1.442695
      %v1690 = vpow.pop %v1689
      %v1691 = vsel %vm894, %v1690, 0.0
      %1692 = vadd.xlane.f32.xlu0 %v1691
      %v1693 = vpop.xlane.xlu0 %1692
      %v1694 = vrcp.pop %v1693
      %v1695 = vmul.f32 %v1690, %v1694
      %1696 = vrot.lane.b32.xlu0 %v883, 40
      %v1697 = vpop.permute.xlu0 %1696
      %v1700 = vsel %vm894, %v1695, 0
      %1702 = vmatprep.subr.mxu0 0.0
      %1703 = vmatpush1.msra.mxu0 0.0
      %1704 = vmatprep.subr.mxu0 0.0
      %1705 = vmatpush1.msra.mxu0 0.0
      %1706 = vmatprep.subr.mxu0 0.0
      %1707 = vmatpush1.msra.mxu0 0.0
      %1708 = vmatprep.subr.mxu0 0.0
      %1709 = vmatpush1.msra.mxu0 0.0
      %1710 = vmatprep.subr.mxu0 0.0
      %1711 = vmatpush1.msra.mxu0 0.0
      %1712 = vmatprep.subr.mxu0 0.0
      %1713 = vmatpush1.msra.mxu0 0.0
      %1714 = vmatprep.subr.mxu0 0.0
      %1715 = vmatpush1.msra.mxu0 0.0
      %1716 = vmatprep.subr.mxu0 0.0
      %1717 = vmatpush1.msra.mxu0 0.0
      %1718 = vmatprep.subr.mxu0 0.0
      %1719 = vmatpush1.msra.mxu0 0.0
      %1720 = vmatprep.subr.mxu0 0.0
      %1721 = vmatpush1.msra.mxu0 0.0
      %1722 = vmatprep.subr.mxu0 0.0
      %1723 = vmatpush1.msra.mxu0 0.0
      %1724 = vmatprep.subr.mxu0 0.0
      %1725 = vmatpush1.msra.mxu0 0.0
      %1726 = vmatprep.subr.mxu0 0.0
      %1727 = vmatpush1.msra.mxu0 0.0
      %1728 = vmatprep.subr.mxu0 0.0
      %1729 = vmatpush1.msra.mxu0 0.0
      %1730 = vmatprep.subr.mxu0 0.0
      %1731 = vmatpush1.msra.mxu0 0.0
      %1732 = vmatprep.subr.mxu0 0.0
      %1733 = vmatpush1.msra.mxu0 %v1697
      %1734 = vmatprep.subr.mxu0 0.0
      %1735 = vmatpush2.msra.mxu0 0.0
      %1736 = vmatprep.subr.mxu0 0.0
      %1737 = vmatpush2.msra.mxu0 0.0
      %1738 = vmatprep.subr.mxu0 0.0
      %1739 = vmatpush2.msra.mxu0 0.0
      %1740 = vmatprep.subr.mxu0 0.0
      %1741 = vmatpush2.msra.mxu0 0.0
      %1742 = vmatprep.subr.mxu0 0.0
      %1743 = vmatpush2.msra.mxu0 0.0
      %1744 = vmatprep.subr.mxu0 0.0
      %1745 = vmatpush2.msra.mxu0 0.0
      %1746 = vmatprep.subr.mxu0 0.0
      %1747 = vmatpush2.msra.mxu0 0.0
      %1748 = vmatprep.subr.mxu0 0.0
      %1749 = vmatpush2.msra.mxu0 0.0
      %1750 = vmatprep.subr.mxu0 0.0
      %1751 = vmatpush2.msra.mxu0 0.0
      %1752 = vmatprep.subr.mxu0 0.0
      %1753 = vmatpush2.msra.mxu0 0.0
      %1754 = vmatprep.subr.mxu0 0.0
      %1755 = vmatpush2.msra.mxu0 0.0
      %1756 = vmatprep.subr.mxu0 0.0
      %1757 = vmatpush2.msra.mxu0 0.0
      %1758 = vmatprep.subr.mxu0 0.0
      %1759 = vmatpush2.msra.mxu0 0.0
      %1760 = vmatprep.subr.mxu0 0.0
      %1761 = vmatpush2.msra.mxu0 0.0
      %1762 = vmatprep.subr.mxu0 0.0
      %1763 = vmatpush2.msra.mxu0 0.0
      %1764 = vmatprep.subr.mxu0 0.0
      %1765 = vmatpush2.msra.mxu0 0.0
      %1766 = vmatprep.mubr.f32.mxu0 0.0
      %1767 = vmatmul.mubr.f32.gmra.mxu0 %v1700
      %v1768 = vpop.f32.mrf.mxu0
      %v1769 = vadd.f32 0.0, %v1768
      %v1770 = vpop.f32.mrf.mxu0
      %1771 = vdwg.mxu0
      %v1773 = vsel %vm894, %v1769, 0
      %1775 = vmatprep.subr.mxu0 0.0
      %1776 = vmatpush1.msra.mxu0 0.0
      %1777 = vmatprep.subr.mxu0 0.0
      %1778 = vmatpush1.msra.mxu0 0.0
      %1779 = vmatprep.subr.mxu0 0.0
      %1780 = vmatpush1.msra.mxu0 0.0
      %1781 = vmatprep.subr.mxu0 0.0
      %1782 = vmatpush1.msra.mxu0 0.0
      %1783 = vmatprep.subr.mxu0 0.0
      %1784 = vmatpush1.msra.mxu0 0.0
      %1785 = vmatprep.subr.mxu0 0.0
      %1786 = vmatpush1.msra.mxu0 0.0
      %1787 = vmatprep.subr.mxu0 0.0
      %1788 = vmatpush1.msra.mxu0 0.0
      %1789 = vmatprep.subr.mxu0 0.0
      %1790 = vmatpush1.msra.mxu0 0.0
      %1791 = vmatprep.subr.mxu0 0.0
      %1792 = vmatpush1.msra.mxu0 0.0
      %1793 = vmatprep.subr.mxu0 0.0
      %1794 = vmatpush1.msra.mxu0 0.0
      %1795 = vmatprep.subr.mxu0 0.0
      %1796 = vmatpush1.msra.mxu0 0.0
      %1797 = vmatprep.subr.mxu0 0.0
      %1798 = vmatpush1.msra.mxu0 0.0
      %1799 = vmatprep.subr.mxu0 0.0
      %1800 = vmatpush1.msra.mxu0 0.0
      %1801 = vmatprep.subr.mxu0 0.0
      %1802 = vmatpush1.msra.mxu0 0.0
      %1803 = vmatprep.subr.mxu0 0.0
      %1804 = vmatpush1.msra.mxu0 0.0
      %1805 = vmatprep.subr.mxu0 0.0
      %1806 = vmatpush1.msra.mxu0 %v890
      %1807 = vmatprep.subr.mxu0 0.0
      %1808 = vmatpush2.msra.mxu0 0.0
      %1809 = vmatprep.subr.mxu0 0.0
      %1810 = vmatpush2.msra.mxu0 0.0
      %1811 = vmatprep.subr.mxu0 0.0
      %1812 = vmatpush2.msra.mxu0 0.0
      %1813 = vmatprep.subr.mxu0 0.0
      %1814 = vmatpush2.msra.mxu0 0.0
      %1815 = vmatprep.subr.mxu0 0.0
      %1816 = vmatpush2.msra.mxu0 0.0
      %1817 = vmatprep.subr.mxu0 0.0
      %1818 = vmatpush2.msra.mxu0 0.0
      %1819 = vmatprep.subr.mxu0 0.0
      %1820 = vmatpush2.msra.mxu0 0.0
      %1821 = vmatprep.subr.mxu0 0.0
      %1822 = vmatpush2.msra.mxu0 0.0
      %1823 = vmatprep.subr.mxu0 0.0
      %1824 = vmatpush2.msra.mxu0 0.0
      %1825 = vmatprep.subr.mxu0 0.0
      %1826 = vmatpush2.msra.mxu0 0.0
      %1827 = vmatprep.subr.mxu0 0.0
      %1828 = vmatpush2.msra.mxu0 0.0
      %1829 = vmatprep.subr.mxu0 0.0
      %1830 = vmatpush2.msra.mxu0 0.0
      %1831 = vmatprep.subr.mxu0 0.0
      %1832 = vmatpush2.msra.mxu0 0.0
      %1833 = vmatprep.subr.mxu0 0.0
      %1834 = vmatpush2.msra.mxu0 0.0
      %1835 = vmatprep.subr.mxu0 0.0
      %1836 = vmatpush2.msra.mxu0 0.0
      %1837 = vmatprep.subr.mxu0 0.0
      %1838 = vmatpush2.msra.mxu0 0.0
      %1839 = vmatprep.mubr.f32.mxu0 0.0
      %1840 = vmatmul.mubr.f32.gmra.mxu0 %v1773
      %v1841 = vpop.f32.mrf.mxu0
      %v1842 = vadd.f32 0.0, %v1841
      %v1843 = vpop.f32.mrf.mxu0
      %1844 = vdwg.mxu0
      %v1845 = vadd.f32 %v1606, %v1842
      %v1846 = vld [vmem:[%s679] sm:$0x1]
      %v1848 = vlaneseq
      %v1849 = vshrl.u32 %v1848, 7
      %v1850 = vsub.s32 0, %v1849
      %v1851 = vrot.slane %v1846, %v1850
      %v1853 = vadd.f32 %v1845, %v1851
      %v1854 = vadd.f32 %v800, %v1853
      %v1855 = vld [vmem:[%s699] sm:$0x1]
      %v1856 = vld [vmem:[%s702] sm:$0x1]
      %v1857 = vsel %vm812, %v1854, 0.0
      %1858 = vadd.xlane.f32.xlu0 %v1857
      %v1859 = vpop.xlane.xlu0 %1858
      %v1860 = vrcp.pop 32.0
      %v1861 = vmul.f32 %v1859, %v1860
      %v1862 = vsub.f32 %v1854, %v1861
      %v1863 = vmul.f32 %v1862, %v1862
      %v1864 = vsel %vm812, %v1863, 0.0
      %1865 = vadd.xlane.f32.xlu0 %v1864
      %v1866 = vpop.xlane.xlu0 %1865
      %v1867 = vmul.f32 %v1866, %v1860
      %v1868 = vadd.f32 %v1867, 1e-05
      %v1869 = vrsqrt.pop %v1868
      %v1870 = vmul.f32 %v1862, %v1869
      %v1872 = vlaneseq
      %v1873 = vshrl.u32 %v1872, 7
      %v1874 = vsub.s32 0, %v1873
      %v1875 = vrot.slane %v1855, %v1874
      %v1877 = vmul.f32 %v1870, %v1875
      %v1879 = vlaneseq
      %v1880 = vshrl.u32 %v1879, 7
      %v1881 = vsub.s32 0, %v1880
      %v1882 = vrot.slane %v1856, %v1881
      %v1884 = vadd.f32 %v1877, %v1882
      %v1885 = vpack.c.bf16 %v1884, %v1884
      %v1886 = vld [vmem:[%s684] sm:$0xff]
      %v1887 = vld [vmem:[%s684 + $0x8] sm:$0xff]
      %v1888 = vld [vmem:[%s684 + $0x10] sm:$0xff]
      %v1889 = vld [vmem:[%s684 + $0x18] sm:$0xff]
      %v1890 = vld [vmem:[%s684 + $0x20] sm:$0xff]
      %v1891 = vld [vmem:[%s684 + $0x28] sm:$0xff]
      %v1892 = vld [vmem:[%s684 + $0x30] sm:$0xff]
      %v1893 = vld [vmem:[%s684 + $0x38] sm:$0xff]
      %v1894 = vld [vmem:[%s684 + $0x40] sm:$0xff]
      %v1895 = vld [vmem:[%s684 + $0x48] sm:$0xff]
      %v1896 = vld [vmem:[%s684 + $0x50] sm:$0xff]
      %v1897 = vld [vmem:[%s684 + $0x58] sm:$0xff]
      %v1898 = vld [vmem:[%s684 + $0x60] sm:$0xff]
      %v1899 = vld [vmem:[%s684 + $0x68] sm:$0xff]
      %v1900 = vld [vmem:[%s684 + $0x70] sm:$0xff]
      %v1901 = vld [vmem:[%s684 + $0x78] sm:$0xff]
      %v1902 = vld [vmem:[%s684 + $0x80] sm:$0xff]
      %v1903 = vld [vmem:[%s684 + $0x88] sm:$0xff]
      %v1904 = vld [vmem:[%s684 + $0x90] sm:$0xff]
      %v1905 = vld [vmem:[%s684 + $0x98] sm:$0xff]
      %v1906 = vld [vmem:[%s684 + $0xa0] sm:$0xff]
      %v1907 = vld [vmem:[%s684 + $0xa8] sm:$0xff]
      %v1908 = vld [vmem:[%s684 + $0xb0] sm:$0xff]
      %v1909 = vld [vmem:[%s684 + $0xb8] sm:$0xff]
      %v1910 = vld [vmem:[%s684 + $0xc0] sm:$0xff]
      %v1911 = vld [vmem:[%s684 + $0xc8] sm:$0xff]
      %v1912 = vld [vmem:[%s684 + $0xd0] sm:$0xff]
      %v1913 = vld [vmem:[%s684 + $0xd8] sm:$0xff]
      %v1914 = vld [vmem:[%s684 + $0xe0] sm:$0xff]
      %v1915 = vld [vmem:[%s684 + $0xe8] sm:$0xff]
      %v1916 = vld [vmem:[%s684 + $0xf0] sm:$0xff]
      %v1917 = vld [vmem:[%s684 + $0xf8] sm:$0xff]
      %v1918 = vld [vmem:[%s688] sm:$0xff]
      %v1919 = vld [vmem:[%s688 + $0x8] sm:$0xff]
      %v1922 = vlaneseq
      %v1923 = vshrl.u32 %v1922, 7
      %v1924 = vsub.s32 0, %v1923
      %v1925 = vrot.slane %v1918, %v1924
      %v1926 = vlaneseq
      %v1927 = vshrl.u32 %v1926, 7
      %v1928 = vsub.s32 1, %v1927
      %v1929 = vrot.slane %v1918, %v1928
      %v1930 = vlaneseq
      %v1931 = vshrl.u32 %v1930, 7
      %v1932 = vsub.s32 2, %v1931
      %v1933 = vrot.slane %v1918, %v1932
      %v1934 = vlaneseq
      %v1935 = vshrl.u32 %v1934, 7
      %v1936 = vsub.s32 3, %v1935
      %v1937 = vrot.slane %v1918, %v1936
      %v1938 = vlaneseq
      %v1939 = vshrl.u32 %v1938, 7
      %v1940 = vsub.s32 4, %v1939
      %v1941 = vrot.slane %v1918, %v1940
      %v1942 = vlaneseq
      %v1943 = vshrl.u32 %v1942, 7
      %v1944 = vsub.s32 5, %v1943
      %v1945 = vrot.slane %v1918, %v1944
      %v1946 = vlaneseq
      %v1947 = vshrl.u32 %v1946, 7
      %v1948 = vsub.s32 6, %v1947
      %v1949 = vrot.slane %v1918, %v1948
      %v1950 = vlaneseq
      %v1951 = vshrl.u32 %v1950, 7
      %v1952 = vsub.s32 7, %v1951
      %v1953 = vrot.slane %v1918, %v1952
      %v1954 = vlaneseq
      %v1955 = vshrl.u32 %v1954, 7
      %v1956 = vsub.s32 0, %v1955
      %v1957 = vrot.slane %v1919, %v1956
      %v1958 = vlaneseq
      %v1959 = vshrl.u32 %v1958, 7
      %v1960 = vsub.s32 1, %v1959
      %v1961 = vrot.slane %v1919, %v1960
      %v1962 = vlaneseq
      %v1963 = vshrl.u32 %v1962, 7
      %v1964 = vsub.s32 2, %v1963
      %v1965 = vrot.slane %v1919, %v1964
      %v1966 = vlaneseq
      %v1967 = vshrl.u32 %v1966, 7
      %v1968 = vsub.s32 3, %v1967
      %v1969 = vrot.slane %v1919, %v1968
      %v1970 = vlaneseq
      %v1971 = vshrl.u32 %v1970, 7
      %v1972 = vsub.s32 4, %v1971
      %v1973 = vrot.slane %v1919, %v1972
      %v1974 = vlaneseq
      %v1975 = vshrl.u32 %v1974, 7
      %v1976 = vsub.s32 5, %v1975
      %v1977 = vrot.slane %v1919, %v1976
      %v1978 = vlaneseq
      %v1979 = vshrl.u32 %v1978, 7
      %v1980 = vsub.s32 6, %v1979
      %v1981 = vrot.slane %v1919, %v1980
      %v1982 = vlaneseq
      %v1983 = vshrl.u32 %v1982, 7
      %v1984 = vsub.s32 7, %v1983
      %v1985 = vrot.slane %v1919, %v1984
      %v2034 = vunpack.c.l.b16 %v1886
      %v2035 = vunpack.c.h.b16 %v1886
      %v2036 = vunpack.c.l.b16 %v1887
      %v2037 = vunpack.c.h.b16 %v1887
      %v2038 = vunpack.c.l.b16 %v1888
      %v2039 = vunpack.c.h.b16 %v1888
      %v2040 = vunpack.c.l.b16 %v1889
      %v2041 = vunpack.c.h.b16 %v1889
      %v2042 = vunpack.c.l.b16 %v1890
      %v2043 = vunpack.c.h.b16 %v1890
      %v2044 = vunpack.c.l.b16 %v1891
      %v2045 = vunpack.c.h.b16 %v1891
      %v2046 = vunpack.c.l.b16 %v1892
      %v2047 = vunpack.c.h.b16 %v1892
      %v2048 = vunpack.c.l.b16 %v1893
      %v2049 = vunpack.c.h.b16 %v1893
      %v2050 = vunpack.c.l.b16 %v1894
      %v2051 = vunpack.c.h.b16 %v1894
      %v2052 = vunpack.c.l.b16 %v1895
      %v2053 = vunpack.c.h.b16 %v1895
      %v2054 = vunpack.c.l.b16 %v1896
      %v2055 = vunpack.c.h.b16 %v1896
      %v2056 = vunpack.c.l.b16 %v1897
      %v2057 = vunpack.c.h.b16 %v1897
      %v2058 = vunpack.c.l.b16 %v1898
      %v2059 = vunpack.c.h.b16 %v1898
      %v2060 = vunpack.c.l.b16 %v1899
      %v2061 = vunpack.c.h.b16 %v1899
      %v2062 = vunpack.c.l.b16 %v1900
      %v2063 = vunpack.c.h.b16 %v1900
      %v2064 = vunpack.c.l.b16 %v1901
      %v2065 = vunpack.c.h.b16 %v1901
      %v2066 = vunpack.c.l.b16 %v1902
      %v2067 = vunpack.c.h.b16 %v1902
      %v2068 = vunpack.c.l.b16 %v1903
      %v2069 = vunpack.c.h.b16 %v1903
      %v2070 = vunpack.c.l.b16 %v1904
      %v2071 = vunpack.c.h.b16 %v1904
      %v2072 = vunpack.c.l.b16 %v1905
      %v2073 = vunpack.c.h.b16 %v1905
      %v2074 = vunpack.c.l.b16 %v1906
      %v2075 = vunpack.c.h.b16 %v1906
      %v2076 = vunpack.c.l.b16 %v1907
      %v2077 = vunpack.c.h.b16 %v1907
      %v2078 = vunpack.c.l.b16 %v1908
      %v2079 = vunpack.c.h.b16 %v1908
      %v2080 = vunpack.c.l.b16 %v1909
      %v2081 = vunpack.c.h.b16 %v1909
      %v2082 = vunpack.c.l.b16 %v1910
      %v2083 = vunpack.c.h.b16 %v1910
      %v2084 = vunpack.c.l.b16 %v1911
      %v2085 = vunpack.c.h.b16 %v1911
      %v2086 = vunpack.c.l.b16 %v1912
      %v2087 = vunpack.c.h.b16 %v1912
      %v2088 = vunpack.c.l.b16 %v1913
      %v2089 = vunpack.c.h.b16 %v1913
      %v2090 = vunpack.c.l.b16 %v1914
      %v2091 = vunpack.c.h.b16 %v1914
      %v2092 = vunpack.c.l.b16 %v1915
      %v2093 = vunpack.c.h.b16 %v1915
      %v2094 = vunpack.c.l.b16 %v1916
      %v2095 = vunpack.c.h.b16 %v1916
      %v2096 = vunpack.c.l.b16 %v1917
      %v2097 = vunpack.c.h.b16 %v1917
      %v2098 = vpack.c.b16 %v2050, %v2034
      %v2099 = vpack.c.b16 %v2051, %v2035
      %v2100 = vpack.c.b16 %v2052, %v2036
      %v2101 = vpack.c.b16 %v2053, %v2037
      %v2102 = vpack.c.b16 %v2054, %v2038
      %v2103 = vpack.c.b16 %v2055, %v2039
      %v2104 = vpack.c.b16 %v2056, %v2040
      %v2105 = vpack.c.b16 %v2057, %v2041
      %v2106 = vpack.c.b16 %v2058, %v2042
      %v2107 = vpack.c.b16 %v2059, %v2043
      %v2108 = vpack.c.b16 %v2060, %v2044
      %v2109 = vpack.c.b16 %v2061, %v2045
      %v2110 = vpack.c.b16 %v2062, %v2046
      %v2111 = vpack.c.b16 %v2063, %v2047
      %v2112 = vpack.c.b16 %v2064, %v2048
      %v2113 = vpack.c.b16 %v2065, %v2049
      %v2114 = vpack.c.b16 %v2082, %v2066
      %v2115 = vpack.c.b16 %v2083, %v2067
      %v2116 = vpack.c.b16 %v2084, %v2068
      %v2117 = vpack.c.b16 %v2085, %v2069
      %v2118 = vpack.c.b16 %v2086, %v2070
      %v2119 = vpack.c.b16 %v2087, %v2071
      %v2120 = vpack.c.b16 %v2088, %v2072
      %v2121 = vpack.c.b16 %v2089, %v2073
      %v2122 = vpack.c.b16 %v2090, %v2074
      %v2123 = vpack.c.b16 %v2091, %v2075
      %v2124 = vpack.c.b16 %v2092, %v2076
      %v2125 = vpack.c.b16 %v2093, %v2077
      %v2126 = vpack.c.b16 %v2094, %v2078
      %v2127 = vpack.c.b16 %v2095, %v2079
      %v2128 = vpack.c.b16 %v2096, %v2080
      %v2129 = vpack.c.b16 %v2097, %v2081
      %v2163 = vsel %vm812, %v1885, 0
      %2165 = vmatprep.subr.bf16.mxu0 0
      %2166 = vmatpush1.bf16.msra.mxu0 0
      %2167 = vmatprep.subr.bf16.mxu0 0
      %2168 = vmatpush1.bf16.msra.mxu0 0
      %2169 = vmatprep.subr.bf16.mxu0 0
      %2170 = vmatpush1.bf16.msra.mxu0 0
      %2171 = vmatprep.subr.bf16.mxu0 0
      %2172 = vmatpush1.bf16.msra.mxu0 0
      %2173 = vmatprep.subr.bf16.mxu0 0
      %2174 = vmatpush1.bf16.msra.mxu0 0
      %2175 = vmatprep.subr.bf16.mxu0 0
      %2176 = vmatpush1.bf16.msra.mxu0 0
      %2177 = vmatprep.subr.bf16.mxu0 %v2115
      %2178 = vmatpush1.bf16.msra.mxu0 %v2114
      %2179 = vmatprep.subr.bf16.mxu0 %v2099
      %2180 = vmatpush1.bf16.msra.mxu0 %v2098
      %2181 = vmatprep.subr.bf16.mxu0 0
      %2182 = vmatpush2.bf16.msra.mxu0 0
      %2183 = vmatprep.subr.bf16.mxu0 0
      %2184 = vmatpush2.bf16.msra.mxu0 0
      %2185 = vmatprep.subr.bf16.mxu0 0
      %2186 = vmatpush2.bf16.msra.mxu0 0
      %2187 = vmatprep.subr.bf16.mxu0 0
      %2188 = vmatpush2.bf16.msra.mxu0 0
      %2189 = vmatprep.subr.bf16.mxu0 0
      %2190 = vmatpush2.bf16.msra.mxu0 0
      %2191 = vmatprep.subr.bf16.mxu0 0
      %2192 = vmatpush2.bf16.msra.mxu0 0
      %2193 = vmatprep.subr.bf16.mxu0 0
      %2194 = vmatpush2.bf16.msra.mxu0 0
      %2195 = vmatprep.subr.bf16.mxu0 0
      %2196 = vmatpush2.bf16.msra.mxu0 0
      %2197 = vmatprep.mubr.bf16.mxu0 0
      %2198 = vmatmul.mubr.bf16.gmra.mxu0 %v2163
      %v2199 = vpop.f32.mrf.mxu0
      %v2200 = vadd.f32 %v1925, %v2199
      %v2201 = vpop.f32.mrf.mxu0
      %v2202 = vadd.f32 %v1929, %v2201
      %v2203 = vpop.f32.mrf.mxu0
      %v2204 = vpop.f32.mrf.mxu0
      %2205 = vdwg.mxu0
      %2206 = vmatprep.subr.bf16.mxu0 0
      %2207 = vmatpush1.bf16.msra.mxu0 0
      %2208 = vmatprep.subr.bf16.mxu0 0
      %2209 = vmatpush1.bf16.msra.mxu0 0
      %2210 = vmatprep.subr.bf16.mxu0 0
      %2211 = vmatpush1.bf16.msra.mxu0 0
      %2212 = vmatprep.subr.bf16.mxu0 0
      %2213 = vmatpush1.bf16.msra.mxu0 0
      %2214 = vmatprep.subr.bf16.mxu0 0
      %2215 = vmatpush1.bf16.msra.mxu0 0
      %2216 = vmatprep.subr.bf16.mxu0 0
      %2217 = vmatpush1.bf16.msra.mxu0 0
      %2218 = vmatprep.subr.bf16.mxu0 %v2117
      %2219 = vmatpush1.bf16.msra.mxu0 %v2116
      %2220 = vmatprep.subr.bf16.mxu0 %v2101
      %2221 = vmatpush1.bf16.msra.mxu0 %v2100
      %2222 = vmatprep.subr.bf16.mxu0 0
      %2223 = vmatpush2.bf16.msra.mxu0 0
      %2224 = vmatprep.subr.bf16.mxu0 0
      %2225 = vmatpush2.bf16.msra.mxu0 0
      %2226 = vmatprep.subr.bf16.mxu0 0
      %2227 = vmatpush2.bf16.msra.mxu0 0
      %2228 = vmatprep.subr.bf16.mxu0 0
      %2229 = vmatpush2.bf16.msra.mxu0 0
      %2230 = vmatprep.subr.bf16.mxu0 0
      %2231 = vmatpush2.bf16.msra.mxu0 0
      %2232 = vmatprep.subr.bf16.mxu0 0
      %2233 = vmatpush2.bf16.msra.mxu0 0
      %2234 = vmatprep.subr.bf16.mxu0 0
      %2235 = vmatpush2.bf16.msra.mxu0 0
      %2236 = vmatprep.subr.bf16.mxu0 0
      %2237 = vmatpush2.bf16.msra.mxu0 0
      %2238 = vmatprep.mubr.bf16.mxu0 0
      %2239 = vmatmul.mubr.bf16.gmra.mxu0 %v2163
      %v2240 = vpop.f32.mrf.mxu0
      %v2241 = vadd.f32 %v1933, %v2240
      %v2242 = vpop.f32.mrf.mxu0
      %v2243 = vadd.f32 %v1937, %v2242
      %v2244 = vpop.f32.mrf.mxu0
      %v2245 = vpop.f32.mrf.mxu0
      %2246 = vdwg.mxu0
      %2247 = vmatprep.subr.bf16.mxu0 0
      %2248 = vmatpush1.bf16.msra.mxu0 0
      %2249 = vmatprep.subr.bf16.mxu0 0
      %2250 = vmatpush1.bf16.msra.mxu0 0
      %2251 = vmatprep.subr.bf16.mxu0 0
      %2252 = vmatpush1.bf16.msra.mxu0 0
      %2253 = vmatprep.subr.bf16.mxu0 0
      %2254 = vmatpush1.bf16.msra.mxu0 0
      %2255 = vmatprep.subr.bf16.mxu0 0
      %2256 = vmatpush1.bf16.msra.mxu0 0
      %2257 = vmatprep.subr.bf16.mxu0 0
      %2258 = vmatpush1.bf16.msra.mxu0 0
      %2259 = vmatprep.subr.bf16.mxu0 %v2119
      %2260 = vmatpush1.bf16.msra.mxu0 %v2118
      %2261 = vmatprep.subr.bf16.mxu0 %v2103
      %2262 = vmatpush1.bf16.msra.mxu0 %v2102
      %2263 = vmatprep.subr.bf16.mxu0 0
      %2264 = vmatpush2.bf16.msra.mxu0 0
      %2265 = vmatprep.subr.bf16.mxu0 0
      %2266 = vmatpush2.bf16.msra.mxu0 0
      %2267 = vmatprep.subr.bf16.mxu0 0
      %2268 = vmatpush2.bf16.msra.mxu0 0
      %2269 = vmatprep.subr.bf16.mxu0 0
      %2270 = vmatpush2.bf16.msra.mxu0 0
      %2271 = vmatprep.subr.bf16.mxu0 0
      %2272 = vmatpush2.bf16.msra.mxu0 0
      %2273 = vmatprep.subr.bf16.mxu0 0
      %2274 = vmatpush2.bf16.msra.mxu0 0
      %2275 = vmatprep.subr.bf16.mxu0 0
      %2276 = vmatpush2.bf16.msra.mxu0 0
      %2277 = vmatprep.subr.bf16.mxu0 0
      %2278 = vmatpush2.bf16.msra.mxu0 0
      %2279 = vmatprep.mubr.bf16.mxu0 0
      %2280 = vmatmul.mubr.bf16.gmra.mxu0 %v2163
      %v2281 = vpop.f32.mrf.mxu0
      %v2282 = vadd.f32 %v1941, %v2281
      %v2283 = vpop.f32.mrf.mxu0
      %v2284 = vadd.f32 %v1945, %v2283
      %v2285 = vpop.f32.mrf.mxu0
      %v2286 = vpop.f32.mrf.mxu0
      %2287 = vdwg.mxu0
      %2288 = vmatprep.subr.bf16.mxu0 0
      %2289 = vmatpush1.bf16.msra.mxu0 0
      %2290 = vmatprep.subr.bf16.mxu0 0
      %2291 = vmatpush1.bf16.msra.mxu0 0
      %2292 = vmatprep.subr.bf16.mxu0 0
      %2293 = vmatpush1.bf16.msra.mxu0 0
      %2294 = vmatprep.subr.bf16.mxu0 0
      %2295 = vmatpush1.bf16.msra.mxu0 0
      %2296 = vmatprep.subr.bf16.mxu0 0
      %2297 = vmatpush1.bf16.msra.mxu0 0
      %2298 = vmatprep.subr.bf16.mxu0 0
      %2299 = vmatpush1.bf16.msra.mxu0 0
      %2300 = vmatprep.subr.bf16.mxu0 %v2121
      %2301 = vmatpush1.bf16.msra.mxu0 %v2120
      %2302 = vmatprep.subr.bf16.mxu0 %v2105
      %2303 = vmatpush1.bf16.msra.mxu0 %v2104
      %2304 = vmatprep.subr.bf16.mxu0 0
      %2305 = vmatpush2.bf16.msra.mxu0 0
      %2306 = vmatprep.subr.bf16.mxu0 0
      %2307 = vmatpush2.bf16.msra.mxu0 0
      %2308 = vmatprep.subr.bf16.mxu0 0
      %2309 = vmatpush2.bf16.msra.mxu0 0
      %2310 = vmatprep.subr.bf16.mxu0 0
      %2311 = vmatpush2.bf16.msra.mxu0 0
      %2312 = vmatprep.subr.bf16.mxu0 0
      %2313 = vmatpush2.bf16.msra.mxu0 0
      %2314 = vmatprep.subr.bf16.mxu0 0
      %2315 = vmatpush2.bf16.msra.mxu0 0
      %2316 = vmatprep.subr.bf16.mxu0 0
      %2317 = vmatpush2.bf16.msra.mxu0 0
      %2318 = vmatprep.subr.bf16.mxu0 0
      %2319 = vmatpush2.bf16.msra.mxu0 0
      %2320 = vmatprep.mubr.bf16.mxu0 0
      %2321 = vmatmul.mubr.bf16.gmra.mxu0 %v2163
      %v2322 = vpop.f32.mrf.mxu0
      %v2323 = vadd.f32 %v1949, %v2322
      %v2324 = vpop.f32.mrf.mxu0
      %v2325 = vadd.f32 %v1953, %v2324
      %v2326 = vpop.f32.mrf.mxu0
      %v2327 = vpop.f32.mrf.mxu0
      %2328 = vdwg.mxu0
      %2329 = vmatprep.subr.bf16.mxu0 0
      %2330 = vmatpush1.bf16.msra.mxu0 0
      %2331 = vmatprep.subr.bf16.mxu0 0
      %2332 = vmatpush1.bf16.msra.mxu0 0
      %2333 = vmatprep.subr.bf16.mxu0 0
      %2334 = vmatpush1.bf16.msra.mxu0 0
      %2335 = vmatprep.subr.bf16.mxu0 0
      %2336 = vmatpush1.bf16.msra.mxu0 0
      %2337 = vmatprep.subr.bf16.mxu0 0
      %2338 = vmatpush1.bf16.msra.mxu0 0
      %2339 = vmatprep.subr.bf16.mxu0 0
      %2340 = vmatpush1.bf16.msra.mxu0 0
      %2341 = vmatprep.subr.bf16.mxu0 %v2123
      %2342 = vmatpush1.bf16.msra.mxu0 %v2122
      %2343 = vmatprep.subr.bf16.mxu0 %v2107
      %2344 = vmatpush1.bf16.msra.mxu0 %v2106
      %2345 = vmatprep.subr.bf16.mxu0 0
      %2346 = vmatpush2.bf16.msra.mxu0 0
      %2347 = vmatprep.subr.bf16.mxu0 0
      %2348 = vmatpush2.bf16.msra.mxu0 0
      %2349 = vmatprep.subr.bf16.mxu0 0
      %2350 = vmatpush2.bf16.msra.mxu0 0
      %2351 = vmatprep.subr.bf16.mxu0 0
      %2352 = vmatpush2.bf16.msra.mxu0 0
      %2353 = vmatprep.subr.bf16.mxu0 0
      %2354 = vmatpush2.bf16.msra.mxu0 0
      %2355 = vmatprep.subr.bf16.mxu0 0
      %2356 = vmatpush2.bf16.msra.mxu0 0
      %2357 = vmatprep.subr.bf16.mxu0 0
      %2358 = vmatpush2.bf16.msra.mxu0 0
      %2359 = vmatprep.subr.bf16.mxu0 0
      %2360 = vmatpush2.bf16.msra.mxu0 0
      %2361 = vmatprep.mubr.bf16.mxu0 0
      %2362 = vmatmul.mubr.bf16.gmra.mxu0 %v2163
      %v2363 = vpop.f32.mrf.mxu0
      %v2364 = vadd.f32 %v1957, %v2363
      %v2365 = vpop.f32.mrf.mxu0
      %v2366 = vadd.f32 %v1961, %v2365
      %v2367 = vpop.f32.mrf.mxu0
      %v2368 = vpop.f32.mrf.mxu0
      %2369 = vdwg.mxu0
      %2370 = vmatprep.subr.bf16.mxu0 0
      %2371 = vmatpush1.bf16.msra.mxu0 0
      %2372 = vmatprep.subr.bf16.mxu0 0
      %2373 = vmatpush1.bf16.msra.mxu0 0
      %2374 = vmatprep.subr.bf16.mxu0 0
      %2375 = vmatpush1.bf16.msra.mxu0 0
      %2376 = vmatprep.subr.bf16.mxu0 0
      %2377 = vmatpush1.bf16.msra.mxu0 0
      %2378 = vmatprep.subr.bf16.mxu0 0
      %2379 = vmatpush1.bf16.msra.mxu0 0
      %2380 = vmatprep.subr.bf16.mxu0 0
      %2381 = vmatpush1.bf16.msra.mxu0 0
      %2382 = vmatprep.subr.bf16.mxu0 %v2125
      %2383 = vmatpush1.bf16.msra.mxu0 %v2124
      %2384 = vmatprep.subr.bf16.mxu0 %v2109
      %2385 = vmatpush1.bf16.msra.mxu0 %v2108
      %2386 = vmatprep.subr.bf16.mxu0 0
      %2387 = vmatpush2.bf16.msra.mxu0 0
      %2388 = vmatprep.subr.bf16.mxu0 0
      %2389 = vmatpush2.bf16.msra.mxu0 0
      %2390 = vmatprep.subr.bf16.mxu0 0
      %2391 = vmatpush2.bf16.msra.mxu0 0
      %2392 = vmatprep.subr.bf16.mxu0 0
      %2393 = vmatpush2.bf16.msra.mxu0 0
      %2394 = vmatprep.subr.bf16.mxu0 0
      %2395 = vmatpush2.bf16.msra.mxu0 0
      %2396 = vmatprep.subr.bf16.mxu0 0
      %2397 = vmatpush2.bf16.msra.mxu0 0
      %2398 = vmatprep.subr.bf16.mxu0 0
      %2399 = vmatpush2.bf16.msra.mxu0 0
      %2400 = vmatprep.subr.bf16.mxu0 0
      %2401 = vmatpush2.bf16.msra.mxu0 0
      %2402 = vmatprep.mubr.bf16.mxu0 0
      %2403 = vmatmul.mubr.bf16.gmra.mxu0 %v2163
      %v2404 = vpop.f32.mrf.mxu0
      %v2405 = vadd.f32 %v1965, %v2404
      %v2406 = vpop.f32.mrf.mxu0
      %v2407 = vadd.f32 %v1969, %v2406
      %v2408 = vpop.f32.mrf.mxu0
      %v2409 = vpop.f32.mrf.mxu0
      %2410 = vdwg.mxu0
      %2411 = vmatprep.subr.bf16.mxu0 0
      %2412 = vmatpush1.bf16.msra.mxu0 0
      %2413 = vmatprep.subr.bf16.mxu0 0
      %2414 = vmatpush1.bf16.msra.mxu0 0
      %2415 = vmatprep.subr.bf16.mxu0 0
      %2416 = vmatpush1.bf16.msra.mxu0 0
      %2417 = vmatprep.subr.bf16.mxu0 0
      %2418 = vmatpush1.bf16.msra.mxu0 0
      %2419 = vmatprep.subr.bf16.mxu0 0
      %2420 = vmatpush1.bf16.msra.mxu0 0
      %2421 = vmatprep.subr.bf16.mxu0 0
      %2422 = vmatpush1.bf16.msra.mxu0 0
      %2423 = vmatprep.subr.bf16.mxu0 %v2127
      %2424 = vmatpush1.bf16.msra.mxu0 %v2126
      %2425 = vmatprep.subr.bf16.mxu0 %v2111
      %2426 = vmatpush1.bf16.msra.mxu0 %v2110
      %2427 = vmatprep.subr.bf16.mxu0 0
      %2428 = vmatpush2.bf16.msra.mxu0 0
      %2429 = vmatprep.subr.bf16.mxu0 0
      %2430 = vmatpush2.bf16.msra.mxu0 0
      %2431 = vmatprep.subr.bf16.mxu0 0
      %2432 = vmatpush2.bf16.msra.mxu0 0
      %2433 = vmatprep.subr.bf16.mxu0 0
      %2434 = vmatpush2.bf16.msra.mxu0 0
      %2435 = vmatprep.subr.bf16.mxu0 0
      %2436 = vmatpush2.bf16.msra.mxu0 0
      %2437 = vmatprep.subr.bf16.mxu0 0
      %2438 = vmatpush2.bf16.msra.mxu0 0
      %2439 = vmatprep.subr.bf16.mxu0 0
      %2440 = vmatpush2.bf16.msra.mxu0 0
      %2441 = vmatprep.subr.bf16.mxu0 0
      %2442 = vmatpush2.bf16.msra.mxu0 0
      %2443 = vmatprep.mubr.bf16.mxu0 0
      %2444 = vmatmul.mubr.bf16.gmra.mxu0 %v2163
      %v2445 = vpop.f32.mrf.mxu0
      %v2446 = vadd.f32 %v1973, %v2445
      %v2447 = vpop.f32.mrf.mxu0
      %v2448 = vadd.f32 %v1977, %v2447
      %v2449 = vpop.f32.mrf.mxu0
      %v2450 = vpop.f32.mrf.mxu0
      %2451 = vdwg.mxu0
      %2452 = vmatprep.subr.bf16.mxu0 0
      %2453 = vmatpush1.bf16.msra.mxu0 0
      %2454 = vmatprep.subr.bf16.mxu0 0
      %2455 = vmatpush1.bf16.msra.mxu0 0
      %2456 = vmatprep.subr.bf16.mxu0 0
      %2457 = vmatpush1.bf16.msra.mxu0 0
      %2458 = vmatprep.subr.bf16.mxu0 0
      %2459 = vmatpush1.bf16.msra.mxu0 0
      %2460 = vmatprep.subr.bf16.mxu0 0
      %2461 = vmatpush1.bf16.msra.mxu0 0
      %2462 = vmatprep.subr.bf16.mxu0 0
      %2463 = vmatpush1.bf16.msra.mxu0 0
      %2464 = vmatprep.subr.bf16.mxu0 %v2129
      %2465 = vmatpush1.bf16.msra.mxu0 %v2128
      %2466 = vmatprep.subr.bf16.mxu0 %v2113
      %2467 = vmatpush1.bf16.msra.mxu0 %v2112
      %2468 = vmatprep.subr.bf16.mxu0 0
      %2469 = vmatpush2.bf16.msra.mxu0 0
      %2470 = vmatprep.subr.bf16.mxu0 0
      %2471 = vmatpush2.bf16.msra.mxu0 0
      %2472 = vmatprep.subr.bf16.mxu0 0
      %2473 = vmatpush2.bf16.msra.mxu0 0
      %2474 = vmatprep.subr.bf16.mxu0 0
      %2475 = vmatpush2.bf16.msra.mxu0 0
      %2476 = vmatprep.subr.bf16.mxu0 0
      %2477 = vmatpush2.bf16.msra.mxu0 0
      %2478 = vmatprep.subr.bf16.mxu0 0
      %2479 = vmatpush2.bf16.msra.mxu0 0
      %2480 = vmatprep.subr.bf16.mxu0 0
      %2481 = vmatpush2.bf16.msra.mxu0 0
      %2482 = vmatprep.subr.bf16.mxu0 0
      %2483 = vmatpush2.bf16.msra.mxu0 0
      %2484 = vmatprep.mubr.bf16.mxu0 0
      %2485 = vmatmul.mubr.bf16.gmra.mxu0 %v2163
      %v2486 = vpop.f32.mrf.mxu0
      %v2487 = vadd.f32 %v1981, %v2486
      %v2488 = vpop.f32.mrf.mxu0
      %v2489 = vadd.f32 %v1985, %v2488
      %v2490 = vpop.f32.mrf.mxu0
      %v2491 = vpop.f32.mrf.mxu0
      %2492 = vdwg.mxu0
      %v2493 = vmax.f32 %v2200, 0.0
      %v2494 = vmax.f32 %v2202, 0.0
      %v2495 = vmax.f32 %v2241, 0.0
      %v2496 = vmax.f32 %v2243, 0.0
      %v2497 = vmax.f32 %v2282, 0.0
      %v2498 = vmax.f32 %v2284, 0.0
      %v2499 = vmax.f32 %v2323, 0.0
      %v2500 = vmax.f32 %v2325, 0.0
      %v2501 = vmax.f32 %v2364, 0.0
      %v2502 = vmax.f32 %v2366, 0.0
      %v2503 = vmax.f32 %v2405, 0.0
      %v2504 = vmax.f32 %v2407, 0.0
      %v2505 = vmax.f32 %v2446, 0.0
      %v2506 = vmax.f32 %v2448, 0.0
      %v2507 = vmax.f32 %v2487, 0.0
      %v2508 = vmax.f32 %v2489, 0.0
      %v2509 = vpack.c.bf16 %v2493, %v2493
      %v2510 = vpack.c.bf16 %v2494, %v2494
      %v2511 = vpack.c.bf16 %v2495, %v2495
      %v2512 = vpack.c.bf16 %v2496, %v2496
      %v2513 = vpack.c.bf16 %v2497, %v2497
      %v2514 = vpack.c.bf16 %v2498, %v2498
      %v2515 = vpack.c.bf16 %v2499, %v2499
      %v2516 = vpack.c.bf16 %v2500, %v2500
      %v2517 = vpack.c.bf16 %v2501, %v2501
      %v2518 = vpack.c.bf16 %v2502, %v2502
      %v2519 = vpack.c.bf16 %v2503, %v2503
      %v2520 = vpack.c.bf16 %v2504, %v2504
      %v2521 = vpack.c.bf16 %v2505, %v2505
      %v2522 = vpack.c.bf16 %v2506, %v2506
      %v2523 = vpack.c.bf16 %v2507, %v2507
      %v2524 = vpack.c.bf16 %v2508, %v2508
      %v2525 = vld [vmem:[%s693] sm:$0xf]
      %v2526 = vld [vmem:[%s693 + $0x4] sm:$0xf]
      %v2527 = vld [vmem:[%s693 + $0x8] sm:$0xf]
      %v2528 = vld [vmem:[%s693 + $0xc] sm:$0xf]
      %v2529 = vld [vmem:[%s693 + $0x10] sm:$0xf]
      %v2530 = vld [vmem:[%s693 + $0x14] sm:$0xf]
      %v2531 = vld [vmem:[%s693 + $0x18] sm:$0xf]
      %v2532 = vld [vmem:[%s693 + $0x1c] sm:$0xf]
      %v2533 = vld [vmem:[%s693 + $0x20] sm:$0xf]
      %v2534 = vld [vmem:[%s693 + $0x24] sm:$0xf]
      %v2535 = vld [vmem:[%s693 + $0x28] sm:$0xf]
      %v2536 = vld [vmem:[%s693 + $0x2c] sm:$0xf]
      %v2537 = vld [vmem:[%s693 + $0x30] sm:$0xf]
      %v2538 = vld [vmem:[%s693 + $0x34] sm:$0xf]
      %v2539 = vld [vmem:[%s693 + $0x38] sm:$0xf]
      %v2540 = vld [vmem:[%s693 + $0x3c] sm:$0xf]
      %v2541 = vld [vmem:[%s693 + $0x40] sm:$0xf]
      %v2542 = vld [vmem:[%s693 + $0x44] sm:$0xf]
      %v2543 = vld [vmem:[%s693 + $0x48] sm:$0xf]
      %v2544 = vld [vmem:[%s693 + $0x4c] sm:$0xf]
      %v2545 = vld [vmem:[%s693 + $0x50] sm:$0xf]
      %v2546 = vld [vmem:[%s693 + $0x54] sm:$0xf]
      %v2547 = vld [vmem:[%s693 + $0x58] sm:$0xf]
      %v2548 = vld [vmem:[%s693 + $0x5c] sm:$0xf]
      %v2549 = vld [vmem:[%s693 + $0x60] sm:$0xf]
      %v2550 = vld [vmem:[%s693 + $0x64] sm:$0xf]
      %v2551 = vld [vmem:[%s693 + $0x68] sm:$0xf]
      %v2552 = vld [vmem:[%s693 + $0x6c] sm:$0xf]
      %v2553 = vld [vmem:[%s693 + $0x70] sm:$0xf]
      %v2554 = vld [vmem:[%s693 + $0x74] sm:$0xf]
      %v2555 = vld [vmem:[%s693 + $0x78] sm:$0xf]
      %v2556 = vld [vmem:[%s693 + $0x7c] sm:$0xf]
      %v2557 = vld [vmem:[%s693 + $0x80] sm:$0xf]
      %v2558 = vld [vmem:[%s693 + $0x84] sm:$0xf]
      %v2559 = vld [vmem:[%s693 + $0x88] sm:$0xf]
      %v2560 = vld [vmem:[%s693 + $0x8c] sm:$0xf]
      %v2561 = vld [vmem:[%s693 + $0x90] sm:$0xf]
      %v2562 = vld [vmem:[%s693 + $0x94] sm:$0xf]
      %v2563 = vld [vmem:[%s693 + $0x98] sm:$0xf]
      %v2564 = vld [vmem:[%s693 + $0x9c] sm:$0xf]
      %v2565 = vld [vmem:[%s693 + $0xa0] sm:$0xf]
      %v2566 = vld [vmem:[%s693 + $0xa4] sm:$0xf]
      %v2567 = vld [vmem:[%s693 + $0xa8] sm:$0xf]
      %v2568 = vld [vmem:[%s693 + $0xac] sm:$0xf]
      %v2569 = vld [vmem:[%s693 + $0xb0] sm:$0xf]
      %v2570 = vld [vmem:[%s693 + $0xb4] sm:$0xf]
      %v2571 = vld [vmem:[%s693 + $0xb8] sm:$0xf]
      %v2572 = vld [vmem:[%s693 + $0xbc] sm:$0xf]
      %v2573 = vld [vmem:[%s693 + $0xc0] sm:$0xf]
      %v2574 = vld [vmem:[%s693 + $0xc4] sm:$0xf]
      %v2575 = vld [vmem:[%s693 + $0xc8] sm:$0xf]
      %v2576 = vld [vmem:[%s693 + $0xcc] sm:$0xf]
      %v2577 = vld [vmem:[%s693 + $0xd0] sm:$0xf]
      %v2578 = vld [vmem:[%s693 + $0xd4] sm:$0xf]
      %v2579 = vld [vmem:[%s693 + $0xd8] sm:$0xf]
      %v2580 = vld [vmem:[%s693 + $0xdc] sm:$0xf]
      %v2581 = vld [vmem:[%s693 + $0xe0] sm:$0xf]
      %v2582 = vld [vmem:[%s693 + $0xe4] sm:$0xf]
      %v2583 = vld [vmem:[%s693 + $0xe8] sm:$0xf]
      %v2584 = vld [vmem:[%s693 + $0xec] sm:$0xf]
      %v2585 = vld [vmem:[%s693 + $0xf0] sm:$0xf]
      %v2586 = vld [vmem:[%s693 + $0xf4] sm:$0xf]
      %v2587 = vld [vmem:[%s693 + $0xf8] sm:$0xf]
      %v2588 = vld [vmem:[%s693 + $0xfc] sm:$0xf]
      %v2589 = vld [vmem:[%s693 + $0x100] sm:$0xf]
      %v2590 = vld [vmem:[%s693 + $0x104] sm:$0xf]
      %v2591 = vld [vmem:[%s693 + $0x108] sm:$0xf]
      %v2592 = vld [vmem:[%s693 + $0x10c] sm:$0xf]
      %v2593 = vld [vmem:[%s693 + $0x110] sm:$0xf]
      %v2594 = vld [vmem:[%s693 + $0x114] sm:$0xf]
      %v2595 = vld [vmem:[%s693 + $0x118] sm:$0xf]
      %v2596 = vld [vmem:[%s693 + $0x11c] sm:$0xf]
      %v2597 = vld [vmem:[%s693 + $0x120] sm:$0xf]
      %v2598 = vld [vmem:[%s693 + $0x124] sm:$0xf]
      %v2599 = vld [vmem:[%s693 + $0x128] sm:$0xf]
      %v2600 = vld [vmem:[%s693 + $0x12c] sm:$0xf]
      %v2601 = vld [vmem:[%s693 + $0x130] sm:$0xf]
      %v2602 = vld [vmem:[%s693 + $0x134] sm:$0xf]
      %v2603 = vld [vmem:[%s693 + $0x138] sm:$0xf]
      %v2604 = vld [vmem:[%s693 + $0x13c] sm:$0xf]
      %v2605 = vld [vmem:[%s693 + $0x140] sm:$0xf]
      %v2606 = vld [vmem:[%s693 + $0x144] sm:$0xf]
      %v2607 = vld [vmem:[%s693 + $0x148] sm:$0xf]
      %v2608 = vld [vmem:[%s693 + $0x14c] sm:$0xf]
      %v2609 = vld [vmem:[%s693 + $0x150] sm:$0xf]
      %v2610 = vld [vmem:[%s693 + $0x154] sm:$0xf]
      %v2611 = vld [vmem:[%s693 + $0x158] sm:$0xf]
      %v2612 = vld [vmem:[%s693 + $0x15c] sm:$0xf]
      %v2613 = vld [vmem:[%s693 + $0x160] sm:$0xf]
      %v2614 = vld [vmem:[%s693 + $0x164] sm:$0xf]
      %v2615 = vld [vmem:[%s693 + $0x168] sm:$0xf]
      %v2616 = vld [vmem:[%s693 + $0x16c] sm:$0xf]
      %v2617 = vld [vmem:[%s693 + $0x170] sm:$0xf]
      %v2618 = vld [vmem:[%s693 + $0x174] sm:$0xf]
      %v2619 = vld [vmem:[%s693 + $0x178] sm:$0xf]
      %v2620 = vld [vmem:[%s693 + $0x17c] sm:$0xf]
      %v2621 = vld [vmem:[%s693 + $0x180] sm:$0xf]
      %v2622 = vld [vmem:[%s693 + $0x184] sm:$0xf]
      %v2623 = vld [vmem:[%s693 + $0x188] sm:$0xf]
      %v2624 = vld [vmem:[%s693 + $0x18c] sm:$0xf]
      %v2625 = vld [vmem:[%s693 + $0x190] sm:$0xf]
      %v2626 = vld [vmem:[%s693 + $0x194] sm:$0xf]
      %v2627 = vld [vmem:[%s693 + $0x198] sm:$0xf]
      %v2628 = vld [vmem:[%s693 + $0x19c] sm:$0xf]
      %v2629 = vld [vmem:[%s693 + $0x1a0] sm:$0xf]
      %v2630 = vld [vmem:[%s693 + $0x1a4] sm:$0xf]
      %v2631 = vld [vmem:[%s693 + $0x1a8] sm:$0xf]
      %v2632 = vld [vmem:[%s693 + $0x1ac] sm:$0xf]
      %v2633 = vld [vmem:[%s693 + $0x1b0] sm:$0xf]
      %v2634 = vld [vmem:[%s693 + $0x1b4] sm:$0xf]
      %v2635 = vld [vmem:[%s693 + $0x1b8] sm:$0xf]
      %v2636 = vld [vmem:[%s693 + $0x1bc] sm:$0xf]
      %v2637 = vld [vmem:[%s693 + $0x1c0] sm:$0xf]
      %v2638 = vld [vmem:[%s693 + $0x1c4] sm:$0xf]
      %v2639 = vld [vmem:[%s693 + $0x1c8] sm:$0xf]
      %v2640 = vld [vmem:[%s693 + $0x1cc] sm:$0xf]
      %v2641 = vld [vmem:[%s693 + $0x1d0] sm:$0xf]
      %v2642 = vld [vmem:[%s693 + $0x1d4] sm:$0xf]
      %v2643 = vld [vmem:[%s693 + $0x1d8] sm:$0xf]
      %v2644 = vld [vmem:[%s693 + $0x1dc] sm:$0xf]
      %v2645 = vld [vmem:[%s693 + $0x1e0] sm:$0xf]
      %v2646 = vld [vmem:[%s693 + $0x1e4] sm:$0xf]
      %v2647 = vld [vmem:[%s693 + $0x1e8] sm:$0xf]
      %v2648 = vld [vmem:[%s693 + $0x1ec] sm:$0xf]
      %v2649 = vld [vmem:[%s693 + $0x1f0] sm:$0xf]
      %v2650 = vld [vmem:[%s693 + $0x1f4] sm:$0xf]
      %v2651 = vld [vmem:[%s693 + $0x1f8] sm:$0xf]
      %v2652 = vld [vmem:[%s693 + $0x1fc] sm:$0xf]
      %v2653 = vld [vmem:[%s693 + $0x200] sm:$0xf]
      %v2654 = vld [vmem:[%s693 + $0x204] sm:$0xf]
      %v2655 = vld [vmem:[%s693 + $0x208] sm:$0xf]
      %v2656 = vld [vmem:[%s693 + $0x20c] sm:$0xf]
      %v2657 = vld [vmem:[%s693 + $0x210] sm:$0xf]
      %v2658 = vld [vmem:[%s693 + $0x214] sm:$0xf]
      %v2659 = vld [vmem:[%s693 + $0x218] sm:$0xf]
      %v2660 = vld [vmem:[%s693 + $0x21c] sm:$0xf]
      %v2661 = vld [vmem:[%s693 + $0x220] sm:$0xf]
      %v2662 = vld [vmem:[%s693 + $0x224] sm:$0xf]
      %v2663 = vld [vmem:[%s693 + $0x228] sm:$0xf]
      %v2664 = vld [vmem:[%s693 + $0x22c] sm:$0xf]
      %v2665 = vld [vmem:[%s693 + $0x230] sm:$0xf]
      %v2666 = vld [vmem:[%s693 + $0x234] sm:$0xf]
      %v2667 = vld [vmem:[%s693 + $0x238] sm:$0xf]
      %v2668 = vld [vmem:[%s693 + $0x23c] sm:$0xf]
      %v2669 = vld [vmem:[%s693 + $0x240] sm:$0xf]
      %v2670 = vld [vmem:[%s693 + $0x244] sm:$0xf]
      %v2671 = vld [vmem:[%s693 + $0x248] sm:$0xf]
      %v2672 = vld [vmem:[%s693 + $0x24c] sm:$0xf]
      %v2673 = vld [vmem:[%s693 + $0x250] sm:$0xf]
      %v2674 = vld [vmem:[%s693 + $0x254] sm:$0xf]
      %v2675 = vld [vmem:[%s693 + $0x258] sm:$0xf]
      %v2676 = vld [vmem:[%s693 + $0x25c] sm:$0xf]
      %v2677 = vld [vmem:[%s693 + $0x260] sm:$0xf]
      %v2678 = vld [vmem:[%s693 + $0x264] sm:$0xf]
      %v2679 = vld [vmem:[%s693 + $0x268] sm:$0xf]
      %v2680 = vld [vmem:[%s693 + $0x26c] sm:$0xf]
      %v2681 = vld [vmem:[%s693 + $0x270] sm:$0xf]
      %v2682 = vld [vmem:[%s693 + $0x274] sm:$0xf]
      %v2683 = vld [vmem:[%s693 + $0x278] sm:$0xf]
      %v2684 = vld [vmem:[%s693 + $0x27c] sm:$0xf]
      %v2685 = vld [vmem:[%s693 + $0x280] sm:$0xf]
      %v2686 = vld [vmem:[%s693 + $0x284] sm:$0xf]
      %v2687 = vld [vmem:[%s693 + $0x288] sm:$0xf]
      %v2688 = vld [vmem:[%s693 + $0x28c] sm:$0xf]
      %v2689 = vld [vmem:[%s693 + $0x290] sm:$0xf]
      %v2690 = vld [vmem:[%s693 + $0x294] sm:$0xf]
      %v2691 = vld [vmem:[%s693 + $0x298] sm:$0xf]
      %v2692 = vld [vmem:[%s693 + $0x29c] sm:$0xf]
      %v2693 = vld [vmem:[%s693 + $0x2a0] sm:$0xf]
      %v2694 = vld [vmem:[%s693 + $0x2a4] sm:$0xf]
      %v2695 = vld [vmem:[%s693 + $0x2a8] sm:$0xf]
      %v2696 = vld [vmem:[%s693 + $0x2ac] sm:$0xf]
      %v2697 = vld [vmem:[%s693 + $0x2b0] sm:$0xf]
      %v2698 = vld [vmem:[%s693 + $0x2b4] sm:$0xf]
      %v2699 = vld [vmem:[%s693 + $0x2b8] sm:$0xf]
      %v2700 = vld [vmem:[%s693 + $0x2bc] sm:$0xf]
      %v2701 = vld [vmem:[%s693 + $0x2c0] sm:$0xf]
      %v2702 = vld [vmem:[%s693 + $0x2c4] sm:$0xf]
      %v2703 = vld [vmem:[%s693 + $0x2c8] sm:$0xf]
      %v2704 = vld [vmem:[%s693 + $0x2cc] sm:$0xf]
      %v2705 = vld [vmem:[%s693 + $0x2d0] sm:$0xf]
      %v2706 = vld [vmem:[%s693 + $0x2d4] sm:$0xf]
      %v2707 = vld [vmem:[%s693 + $0x2d8] sm:$0xf]
      %v2708 = vld [vmem:[%s693 + $0x2dc] sm:$0xf]
      %v2709 = vld [vmem:[%s693 + $0x2e0] sm:$0xf]
      %v2710 = vld [vmem:[%s693 + $0x2e4] sm:$0xf]
      %v2711 = vld [vmem:[%s693 + $0x2e8] sm:$0xf]
      %v2712 = vld [vmem:[%s693 + $0x2ec] sm:$0xf]
      %v2713 = vld [vmem:[%s693 + $0x2f0] sm:$0xf]
      %v2714 = vld [vmem:[%s693 + $0x2f4] sm:$0xf]
      %v2715 = vld [vmem:[%s693 + $0x2f8] sm:$0xf]
      %v2716 = vld [vmem:[%s693 + $0x2fc] sm:$0xf]
      %v2717 = vld [vmem:[%s693 + $0x300] sm:$0xf]
      %v2718 = vld [vmem:[%s693 + $0x304] sm:$0xf]
      %v2719 = vld [vmem:[%s693 + $0x308] sm:$0xf]
      %v2720 = vld [vmem:[%s693 + $0x30c] sm:$0xf]
      %v2721 = vld [vmem:[%s693 + $0x310] sm:$0xf]
      %v2722 = vld [vmem:[%s693 + $0x314] sm:$0xf]
      %v2723 = vld [vmem:[%s693 + $0x318] sm:$0xf]
      %v2724 = vld [vmem:[%s693 + $0x31c] sm:$0xf]
      %v2725 = vld [vmem:[%s693 + $0x320] sm:$0xf]
      %v2726 = vld [vmem:[%s693 + $0x324] sm:$0xf]
      %v2727 = vld [vmem:[%s693 + $0x328] sm:$0xf]
      %v2728 = vld [vmem:[%s693 + $0x32c] sm:$0xf]
      %v2729 = vld [vmem:[%s693 + $0x330] sm:$0xf]
      %v2730 = vld [vmem:[%s693 + $0x334] sm:$0xf]
      %v2731 = vld [vmem:[%s693 + $0x338] sm:$0xf]
      %v2732 = vld [vmem:[%s693 + $0x33c] sm:$0xf]
      %v2733 = vld [vmem:[%s693 + $0x340] sm:$0xf]
      %v2734 = vld [vmem:[%s693 + $0x344] sm:$0xf]
      %v2735 = vld [vmem:[%s693 + $0x348] sm:$0xf]
      %v2736 = vld [vmem:[%s693 + $0x34c] sm:$0xf]
      %v2737 = vld [vmem:[%s693 + $0x350] sm:$0xf]
      %v2738 = vld [vmem:[%s693 + $0x354] sm:$0xf]
      %v2739 = vld [vmem:[%s693 + $0x358] sm:$0xf]
      %v2740 = vld [vmem:[%s693 + $0x35c] sm:$0xf]
      %v2741 = vld [vmem:[%s693 + $0x360] sm:$0xf]
      %v2742 = vld [vmem:[%s693 + $0x364] sm:$0xf]
      %v2743 = vld [vmem:[%s693 + $0x368] sm:$0xf]
      %v2744 = vld [vmem:[%s693 + $0x36c] sm:$0xf]
      %v2745 = vld [vmem:[%s693 + $0x370] sm:$0xf]
      %v2746 = vld [vmem:[%s693 + $0x374] sm:$0xf]
      %v2747 = vld [vmem:[%s693 + $0x378] sm:$0xf]
      %v2748 = vld [vmem:[%s693 + $0x37c] sm:$0xf]
      %v2749 = vld [vmem:[%s693 + $0x380] sm:$0xf]
      %v2750 = vld [vmem:[%s693 + $0x384] sm:$0xf]
      %v2751 = vld [vmem:[%s693 + $0x388] sm:$0xf]
      %v2752 = vld [vmem:[%s693 + $0x38c] sm:$0xf]
      %v2753 = vld [vmem:[%s693 + $0x390] sm:$0xf]
      %v2754 = vld [vmem:[%s693 + $0x394] sm:$0xf]
      %v2755 = vld [vmem:[%s693 + $0x398] sm:$0xf]
      %v2756 = vld [vmem:[%s693 + $0x39c] sm:$0xf]
      %v2757 = vld [vmem:[%s693 + $0x3a0] sm:$0xf]
      %v2758 = vld [vmem:[%s693 + $0x3a4] sm:$0xf]
      %v2759 = vld [vmem:[%s693 + $0x3a8] sm:$0xf]
      %v2760 = vld [vmem:[%s693 + $0x3ac] sm:$0xf]
      %v2761 = vld [vmem:[%s693 + $0x3b0] sm:$0xf]
      %v2762 = vld [vmem:[%s693 + $0x3b4] sm:$0xf]
      %v2763 = vld [vmem:[%s693 + $0x3b8] sm:$0xf]
      %v2764 = vld [vmem:[%s693 + $0x3bc] sm:$0xf]
      %v2765 = vld [vmem:[%s693 + $0x3c0] sm:$0xf]
      %v2766 = vld [vmem:[%s693 + $0x3c4] sm:$0xf]
      %v2767 = vld [vmem:[%s693 + $0x3c8] sm:$0xf]
      %v2768 = vld [vmem:[%s693 + $0x3cc] sm:$0xf]
      %v2769 = vld [vmem:[%s693 + $0x3d0] sm:$0xf]
      %v2770 = vld [vmem:[%s693 + $0x3d4] sm:$0xf]
      %v2771 = vld [vmem:[%s693 + $0x3d8] sm:$0xf]
      %v2772 = vld [vmem:[%s693 + $0x3dc] sm:$0xf]
      %v2773 = vld [vmem:[%s693 + $0x3e0] sm:$0xf]
      %v2774 = vld [vmem:[%s693 + $0x3e4] sm:$0xf]
      %v2775 = vld [vmem:[%s693 + $0x3e8] sm:$0xf]
      %v2776 = vld [vmem:[%s693 + $0x3ec] sm:$0xf]
      %v2777 = vld [vmem:[%s693 + $0x3f0] sm:$0xf]
      %v2778 = vld [vmem:[%s693 + $0x3f4] sm:$0xf]
      %v2779 = vld [vmem:[%s693 + $0x3f8] sm:$0xf]
      %v2780 = vld [vmem:[%s693 + $0x3fc] sm:$0xf]
      %v2781 = vld [vmem:[%s696] sm:$0x1]
      %v2783 = vlaneseq
      %v2784 = vshrl.u32 %v2783, 7
      %v2785 = vsub.s32 0, %v2784
      %v2786 = vrot.slane %v2781, %v2785
      %v3044 = vunpack.c.l.b16 %v2525
      %v3045 = vunpack.c.l.b16 %v2526
      %v3046 = vunpack.c.l.b16 %v2527
      %v3047 = vunpack.c.l.b16 %v2528
      %v3048 = vunpack.c.l.b16 %v2529
      %v3049 = vunpack.c.l.b16 %v2530
      %v3050 = vunpack.c.l.b16 %v2531
      %v3051 = vunpack.c.l.b16 %v2532
      %v3052 = vunpack.c.l.b16 %v2533
      %v3053 = vunpack.c.l.b16 %v2534
      %v3054 = vunpack.c.l.b16 %v2535
      %v3055 = vunpack.c.l.b16 %v2536
      %v3056 = vunpack.c.l.b16 %v2537
      %v3057 = vunpack.c.l.b16 %v2538
      %v3058 = vunpack.c.l.b16 %v2539
      %v3059 = vunpack.c.l.b16 %v2540
      %v3060 = vunpack.c.l.b16 %v2541
      %v3061 = vunpack.c.l.b16 %v2542
      %v3062 = vunpack.c.l.b16 %v2543
      %v3063 = vunpack.c.l.b16 %v2544
      %v3064 = vunpack.c.l.b16 %v2545
      %v3065 = vunpack.c.l.b16 %v2546
      %v3066 = vunpack.c.l.b16 %v2547
      %v3067 = vunpack.c.l.b16 %v2548
      %v3068 = vunpack.c.l.b16 %v2549
      %v3069 = vunpack.c.l.b16 %v2550
      %v3070 = vunpack.c.l.b16 %v2551
      %v3071 = vunpack.c.l.b16 %v2552
      %v3072 = vunpack.c.l.b16 %v2553
      %v3073 = vunpack.c.l.b16 %v2554
      %v3074 = vunpack.c.l.b16 %v2555
      %v3075 = vunpack.c.l.b16 %v2556
      %v3076 = vunpack.c.l.b16 %v2557
      %v3077 = vunpack.c.l.b16 %v2558
      %v3078 = vunpack.c.l.b16 %v2559
      %v3079 = vunpack.c.l.b16 %v2560
      %v3080 = vunpack.c.l.b16 %v2561
      %v3081 = vunpack.c.l.b16 %v2562
      %v3082 = vunpack.c.l.b16 %v2563
      %v3083 = vunpack.c.l.b16 %v2564
      %v3084 = vunpack.c.l.b16 %v2565
      %v3085 = vunpack.c.l.b16 %v2566
      %v3086 = vunpack.c.l.b16 %v2567
      %v3087 = vunpack.c.l.b16 %v2568
      %v3088 = vunpack.c.l.b16 %v2569
      %v3089 = vunpack.c.l.b16 %v2570
      %v3090 = vunpack.c.l.b16 %v2571
      %v3091 = vunpack.c.l.b16 %v2572
      %v3092 = vunpack.c.l.b16 %v2573
      %v3093 = vunpack.c.l.b16 %v2574
      %v3094 = vunpack.c.l.b16 %v2575
      %v3095 = vunpack.c.l.b16 %v2576
      %v3096 = vunpack.c.l.b16 %v2577
      %v3097 = vunpack.c.l.b16 %v2578
      %v3098 = vunpack.c.l.b16 %v2579
      %v3099 = vunpack.c.l.b16 %v2580
      %v3100 = vunpack.c.l.b16 %v2581
      %v3101 = vunpack.c.l.b16 %v2582
      %v3102 = vunpack.c.l.b16 %v2583
      %v3103 = vunpack.c.l.b16 %v2584
      %v3104 = vunpack.c.l.b16 %v2585
      %v3105 = vunpack.c.l.b16 %v2586
      %v3106 = vunpack.c.l.b16 %v2587
      %v3107 = vunpack.c.l.b16 %v2588
      %v3108 = vunpack.c.l.b16 %v2589
      %v3109 = vunpack.c.l.b16 %v2590
      %v3110 = vunpack.c.l.b16 %v2591
      %v3111 = vunpack.c.l.b16 %v2592
      %v3112 = vunpack.c.l.b16 %v2593
      %v3113 = vunpack.c.l.b16 %v2594
      %v3114 = vunpack.c.l.b16 %v2595
      %v3115 = vunpack.c.l.b16 %v2596
      %v3116 = vunpack.c.l.b16 %v2597
      %v3117 = vunpack.c.l.b16 %v2598
      %v3118 = vunpack.c.l.b16 %v2599
      %v3119 = vunpack.c.l.b16 %v2600
      %v3120 = vunpack.c.l.b16 %v2601
      %v3121 = vunpack.c.l.b16 %v2602
      %v3122 = vunpack.c.l.b16 %v2603
      %v3123 = vunpack.c.l.b16 %v2604
      %v3124 = vunpack.c.l.b16 %v2605
      %v3125 = vunpack.c.l.b16 %v2606
      %v3126 = vunpack.c.l.b16 %v2607
      %v3127 = vunpack.c.l.b16 %v2608
      %v3128 = vunpack.c.l.b16 %v2609
      %v3129 = vunpack.c.l.b16 %v2610
      %v3130 = vunpack.c.l.b16 %v2611
      %v3131 = vunpack.c.l.b16 %v2612
      %v3132 = vunpack.c.l.b16 %v2613
      %v3133 = vunpack.c.l.b16 %v2614
      %v3134 = vunpack.c.l.b16 %v2615
      %v3135 = vunpack.c.l.b16 %v2616
      %v3136 = vunpack.c.l.b16 %v2617
      %v3137 = vunpack.c.l.b16 %v2618
      %v3138 = vunpack.c.l.b16 %v2619
      %v3139 = vunpack.c.l.b16 %v2620
      %v3140 = vunpack.c.l.b16 %v2621
      %v3141 = vunpack.c.l.b16 %v2622
      %v3142 = vunpack.c.l.b16 %v2623
      %v3143 = vunpack.c.l.b16 %v2624
      %v3144 = vunpack.c.l.b16 %v2625
      %v3145 = vunpack.c.l.b16 %v2626
      %v3146 = vunpack.c.l.b16 %v2627
      %v3147 = vunpack.c.l.b16 %v2628
      %v3148 = vunpack.c.l.b16 %v2629
      %v3149 = vunpack.c.l.b16 %v2630
      %v3150 = vunpack.c.l.b16 %v2631
      %v3151 = vunpack.c.l.b16 %v2632
      %v3152 = vunpack.c.l.b16 %v2633
      %v3153 = vunpack.c.l.b16 %v2634
      %v3154 = vunpack.c.l.b16 %v2635
      %v3155 = vunpack.c.l.b16 %v2636
      %v3156 = vunpack.c.l.b16 %v2637
      %v3157 = vunpack.c.l.b16 %v2638
      %v3158 = vunpack.c.l.b16 %v2639
      %v3159 = vunpack.c.l.b16 %v2640
      %v3160 = vunpack.c.l.b16 %v2641
      %v3161 = vunpack.c.l.b16 %v2642
      %v3162 = vunpack.c.l.b16 %v2643
      %v3163 = vunpack.c.l.b16 %v2644
      %v3164 = vunpack.c.l.b16 %v2645
      %v3165 = vunpack.c.l.b16 %v2646
      %v3166 = vunpack.c.l.b16 %v2647
      %v3167 = vunpack.c.l.b16 %v2648
      %v3168 = vunpack.c.l.b16 %v2649
      %v3169 = vunpack.c.l.b16 %v2650
      %v3170 = vunpack.c.l.b16 %v2651
      %v3171 = vunpack.c.l.b16 %v2652
      %v3172 = vunpack.c.l.b16 %v2653
      %v3173 = vunpack.c.l.b16 %v2654
      %v3174 = vunpack.c.l.b16 %v2655
      %v3175 = vunpack.c.l.b16 %v2656
      %v3176 = vunpack.c.l.b16 %v2657
      %v3177 = vunpack.c.l.b16 %v2658
      %v3178 = vunpack.c.l.b16 %v2659
      %v3179 = vunpack.c.l.b16 %v2660
      %v3180 = vunpack.c.l.b16 %v2661
      %v3181 = vunpack.c.l.b16 %v2662
      %v3182 = vunpack.c.l.b16 %v2663
      %v3183 = vunpack.c.l.b16 %v2664
      %v3184 = vunpack.c.l.b16 %v2665
      %v3185 = vunpack.c.l.b16 %v2666
      %v3186 = vunpack.c.l.b16 %v2667
      %v3187 = vunpack.c.l.b16 %v2668
      %v3188 = vunpack.c.l.b16 %v2669
      %v3189 = vunpack.c.l.b16 %v2670
      %v3190 = vunpack.c.l.b16 %v2671
      %v3191 = vunpack.c.l.b16 %v2672
      %v3192 = vunpack.c.l.b16 %v2673
      %v3193 = vunpack.c.l.b16 %v2674
      %v3194 = vunpack.c.l.b16 %v2675
      %v3195 = vunpack.c.l.b16 %v2676
      %v3196 = vunpack.c.l.b16 %v2677
      %v3197 = vunpack.c.l.b16 %v2678
      %v3198 = vunpack.c.l.b16 %v2679
      %v3199 = vunpack.c.l.b16 %v2680
      %v3200 = vunpack.c.l.b16 %v2681
      %v3201 = vunpack.c.l.b16 %v2682
      %v3202 = vunpack.c.l.b16 %v2683
      %v3203 = vunpack.c.l.b16 %v2684
      %v3204 = vunpack.c.l.b16 %v2685
      %v3205 = vunpack.c.l.b16 %v2686
      %v3206 = vunpack.c.l.b16 %v2687
      %v3207 = vunpack.c.l.b16 %v2688
      %v3208 = vunpack.c.l.b16 %v2689
      %v3209 = vunpack.c.l.b16 %v2690
      %v3210 = vunpack.c.l.b16 %v2691
      %v3211 = vunpack.c.l.b16 %v2692
      %v3212 = vunpack.c.l.b16 %v2693
      %v3213 = vunpack.c.l.b16 %v2694
      %v3214 = vunpack.c.l.b16 %v2695
      %v3215 = vunpack.c.l.b16 %v2696
      %v3216 = vunpack.c.l.b16 %v2697
      %v3217 = vunpack.c.l.b16 %v2698
      %v3218 = vunpack.c.l.b16 %v2699
      %v3219 = vunpack.c.l.b16 %v2700
      %v3220 = vunpack.c.l.b16 %v2701
      %v3221 = vunpack.c.l.b16 %v2702
      %v3222 = vunpack.c.l.b16 %v2703
      %v3223 = vunpack.c.l.b16 %v2704
      %v3224 = vunpack.c.l.b16 %v2705
      %v3225 = vunpack.c.l.b16 %v2706
      %v3226 = vunpack.c.l.b16 %v2707
      %v3227 = vunpack.c.l.b16 %v2708
      %v3228 = vunpack.c.l.b16 %v2709
      %v3229 = vunpack.c.l.b16 %v2710
      %v3230 = vunpack.c.l.b16 %v2711
      %v3231 = vunpack.c.l.b16 %v2712
      %v3232 = vunpack.c.l.b16 %v2713
      %v3233 = vunpack.c.l.b16 %v2714
      %v3234 = vunpack.c.l.b16 %v2715
      %v3235 = vunpack.c.l.b16 %v2716
      %v3236 = vunpack.c.l.b16 %v2717
      %v3237 = vunpack.c.l.b16 %v2718
      %v3238 = vunpack.c.l.b16 %v2719
      %v3239 = vunpack.c.l.b16 %v2720
      %v3240 = vunpack.c.l.b16 %v2721
      %v3241 = vunpack.c.l.b16 %v2722
      %v3242 = vunpack.c.l.b16 %v2723
      %v3243 = vunpack.c.l.b16 %v2724
      %v3244 = vunpack.c.l.b16 %v2725
      %v3245 = vunpack.c.l.b16 %v2726
      %v3246 = vunpack.c.l.b16 %v2727
      %v3247 = vunpack.c.l.b16 %v2728
      %v3248 = vunpack.c.l.b16 %v2729
      %v3249 = vunpack.c.l.b16 %v2730
      %v3250 = vunpack.c.l.b16 %v2731
      %v3251 = vunpack.c.l.b16 %v2732
      %v3252 = vunpack.c.l.b16 %v2733
      %v3253 = vunpack.c.l.b16 %v2734
      %v3254 = vunpack.c.l.b16 %v2735
      %v3255 = vunpack.c.l.b16 %v2736
      %v3256 = vunpack.c.l.b16 %v2737
      %v3257 = vunpack.c.l.b16 %v2738
      %v3258 = vunpack.c.l.b16 %v2739
      %v3259 = vunpack.c.l.b16 %v2740
      %v3260 = vunpack.c.l.b16 %v2741
      %v3261 = vunpack.c.l.b16 %v2742
      %v3262 = vunpack.c.l.b16 %v2743
      %v3263 = vunpack.c.l.b16 %v2744
      %v3264 = vunpack.c.l.b16 %v2745
      %v3265 = vunpack.c.l.b16 %v2746
      %v3266 = vunpack.c.l.b16 %v2747
      %v3267 = vunpack.c.l.b16 %v2748
      %v3268 = vunpack.c.l.b16 %v2749
      %v3269 = vunpack.c.l.b16 %v2750
      %v3270 = vunpack.c.l.b16 %v2751
      %v3271 = vunpack.c.l.b16 %v2752
      %v3272 = vunpack.c.l.b16 %v2753
      %v3273 = vunpack.c.l.b16 %v2754
      %v3274 = vunpack.c.l.b16 %v2755
      %v3275 = vunpack.c.l.b16 %v2756
      %v3276 = vunpack.c.l.b16 %v2757
      %v3277 = vunpack.c.l.b16 %v2758
      %v3278 = vunpack.c.l.b16 %v2759
      %v3279 = vunpack.c.l.b16 %v2760
      %v3280 = vunpack.c.l.b16 %v2761
      %v3281 = vunpack.c.l.b16 %v2762
      %v3282 = vunpack.c.l.b16 %v2763
      %v3283 = vunpack.c.l.b16 %v2764
      %v3284 = vunpack.c.l.b16 %v2765
      %v3285 = vunpack.c.l.b16 %v2766
      %v3286 = vunpack.c.l.b16 %v2767
      %v3287 = vunpack.c.l.b16 %v2768
      %v3288 = vunpack.c.l.b16 %v2769
      %v3289 = vunpack.c.l.b16 %v2770
      %v3290 = vunpack.c.l.b16 %v2771
      %v3291 = vunpack.c.l.b16 %v2772
      %v3292 = vunpack.c.l.b16 %v2773
      %v3293 = vunpack.c.l.b16 %v2774
      %v3294 = vunpack.c.l.b16 %v2775
      %v3295 = vunpack.c.l.b16 %v2776
      %v3296 = vunpack.c.l.b16 %v2777
      %v3297 = vunpack.c.l.b16 %v2778
      %v3298 = vunpack.c.l.b16 %v2779
      %v3299 = vunpack.c.l.b16 %v2780
      %v3300 = vpack.c.b16 %v3045, %v3044
      %v3301 = vpack.c.b16 %v3047, %v3046
      %v3302 = vpack.c.b16 %v3049, %v3048
      %v3303 = vpack.c.b16 %v3051, %v3050
      %v3304 = vpack.c.b16 %v3053, %v3052
      %v3305 = vpack.c.b16 %v3055, %v3054
      %v3306 = vpack.c.b16 %v3057, %v3056
      %v3307 = vpack.c.b16 %v3059, %v3058
      %v3308 = vpack.c.b16 %v3061, %v3060
      %v3309 = vpack.c.b16 %v3063, %v3062
      %v3310 = vpack.c.b16 %v3065, %v3064
      %v3311 = vpack.c.b16 %v3067, %v3066
      %v3312 = vpack.c.b16 %v3069, %v3068
      %v3313 = vpack.c.b16 %v3071, %v3070
      %v3314 = vpack.c.b16 %v3073, %v3072
      %v3315 = vpack.c.b16 %v3075, %v3074
      %v3316 = vpack.c.b16 %v3077, %v3076
      %v3317 = vpack.c.b16 %v3079, %v3078
      %v3318 = vpack.c.b16 %v3081, %v3080
      %v3319 = vpack.c.b16 %v3083, %v3082
      %v3320 = vpack.c.b16 %v3085, %v3084
      %v3321 = vpack.c.b16 %v3087, %v3086
      %v3322 = vpack.c.b16 %v3089, %v3088
      %v3323 = vpack.c.b16 %v3091, %v3090
      %v3324 = vpack.c.b16 %v3093, %v3092
      %v3325 = vpack.c.b16 %v3095, %v3094
      %v3326 = vpack.c.b16 %v3097, %v3096
      %v3327 = vpack.c.b16 %v3099, %v3098
      %v3328 = vpack.c.b16 %v3101, %v3100
      %v3329 = vpack.c.b16 %v3103, %v3102
      %v3330 = vpack.c.b16 %v3105, %v3104
      %v3331 = vpack.c.b16 %v3107, %v3106
      %v3332 = vpack.c.b16 %v3109, %v3108
      %v3333 = vpack.c.b16 %v3111, %v3110
      %v3334 = vpack.c.b16 %v3113, %v3112
      %v3335 = vpack.c.b16 %v3115, %v3114
      %v3336 = vpack.c.b16 %v3117, %v3116
      %v3337 = vpack.c.b16 %v3119, %v3118
      %v3338 = vpack.c.b16 %v3121, %v3120
      %v3339 = vpack.c.b16 %v3123, %v3122
      %v3340 = vpack.c.b16 %v3125, %v3124
      %v3341 = vpack.c.b16 %v3127, %v3126
      %v3342 = vpack.c.b16 %v3129, %v3128
      %v3343 = vpack.c.b16 %v3131, %v3130
      %v3344 = vpack.c.b16 %v3133, %v3132
      %v3345 = vpack.c.b16 %v3135, %v3134
      %v3346 = vpack.c.b16 %v3137, %v3136
      %v3347 = vpack.c.b16 %v3139, %v3138
      %v3348 = vpack.c.b16 %v3141, %v3140
      %v3349 = vpack.c.b16 %v3143, %v3142
      %v3350 = vpack.c.b16 %v3145, %v3144
      %v3351 = vpack.c.b16 %v3147, %v3146
      %v3352 = vpack.c.b16 %v3149, %v3148
      %v3353 = vpack.c.b16 %v3151, %v3150
      %v3354 = vpack.c.b16 %v3153, %v3152
      %v3355 = vpack.c.b16 %v3155, %v3154
      %v3356 = vpack.c.b16 %v3157, %v3156
      %v3357 = vpack.c.b16 %v3159, %v3158
      %v3358 = vpack.c.b16 %v3161, %v3160
      %v3359 = vpack.c.b16 %v3163, %v3162
      %v3360 = vpack.c.b16 %v3165, %v3164
      %v3361 = vpack.c.b16 %v3167, %v3166
      %v3362 = vpack.c.b16 %v3169, %v3168
      %v3363 = vpack.c.b16 %v3171, %v3170
      %v3364 = vpack.c.b16 %v3173, %v3172
      %v3365 = vpack.c.b16 %v3175, %v3174
      %v3366 = vpack.c.b16 %v3177, %v3176
      %v3367 = vpack.c.b16 %v3179, %v3178
      %v3368 = vpack.c.b16 %v3181, %v3180
      %v3369 = vpack.c.b16 %v3183, %v3182
      %v3370 = vpack.c.b16 %v3185, %v3184
      %v3371 = vpack.c.b16 %v3187, %v3186
      %v3372 = vpack.c.b16 %v3189, %v3188
      %v3373 = vpack.c.b16 %v3191, %v3190
      %v3374 = vpack.c.b16 %v3193, %v3192
      %v3375 = vpack.c.b16 %v3195, %v3194
      %v3376 = vpack.c.b16 %v3197, %v3196
      %v3377 = vpack.c.b16 %v3199, %v3198
      %v3378 = vpack.c.b16 %v3201, %v3200
      %v3379 = vpack.c.b16 %v3203, %v3202
      %v3380 = vpack.c.b16 %v3205, %v3204
      %v3381 = vpack.c.b16 %v3207, %v3206
      %v3382 = vpack.c.b16 %v3209, %v3208
      %v3383 = vpack.c.b16 %v3211, %v3210
      %v3384 = vpack.c.b16 %v3213, %v3212
      %v3385 = vpack.c.b16 %v3215, %v3214
      %v3386 = vpack.c.b16 %v3217, %v3216
      %v3387 = vpack.c.b16 %v3219, %v3218
      %v3388 = vpack.c.b16 %v3221, %v3220
      %v3389 = vpack.c.b16 %v3223, %v3222
      %v3390 = vpack.c.b16 %v3225, %v3224
      %v3391 = vpack.c.b16 %v3227, %v3226
      %v3392 = vpack.c.b16 %v3229, %v3228
      %v3393 = vpack.c.b16 %v3231, %v3230
      %v3394 = vpack.c.b16 %v3233, %v3232
      %v3395 = vpack.c.b16 %v3235, %v3234
      %v3396 = vpack.c.b16 %v3237, %v3236
      %v3397 = vpack.c.b16 %v3239, %v3238
      %v3398 = vpack.c.b16 %v3241, %v3240
      %v3399 = vpack.c.b16 %v3243, %v3242
      %v3400 = vpack.c.b16 %v3245, %v3244
      %v3401 = vpack.c.b16 %v3247, %v3246
      %v3402 = vpack.c.b16 %v3249, %v3248
      %v3403 = vpack.c.b16 %v3251, %v3250
      %v3404 = vpack.c.b16 %v3253, %v3252
      %v3405 = vpack.c.b16 %v3255, %v3254
      %v3406 = vpack.c.b16 %v3257, %v3256
      %v3407 = vpack.c.b16 %v3259, %v3258
      %v3408 = vpack.c.b16 %v3261, %v3260
      %v3409 = vpack.c.b16 %v3263, %v3262
      %v3410 = vpack.c.b16 %v3265, %v3264
      %v3411 = vpack.c.b16 %v3267, %v3266
      %v3412 = vpack.c.b16 %v3269, %v3268
      %v3413 = vpack.c.b16 %v3271, %v3270
      %v3414 = vpack.c.b16 %v3273, %v3272
      %v3415 = vpack.c.b16 %v3275, %v3274
      %v3416 = vpack.c.b16 %v3277, %v3276
      %v3417 = vpack.c.b16 %v3279, %v3278
      %v3418 = vpack.c.b16 %v3281, %v3280
      %v3419 = vpack.c.b16 %v3283, %v3282
      %v3420 = vpack.c.b16 %v3285, %v3284
      %v3421 = vpack.c.b16 %v3287, %v3286
      %v3422 = vpack.c.b16 %v3289, %v3288
      %v3423 = vpack.c.b16 %v3291, %v3290
      %v3424 = vpack.c.b16 %v3293, %v3292
      %v3425 = vpack.c.b16 %v3295, %v3294
      %v3426 = vpack.c.b16 %v3297, %v3296
      %v3427 = vpack.c.b16 %v3299, %v3298
      %3556 = vmatprep.subr.bf16.mxu0 0
      %3557 = vmatpush1.bf16.msra.mxu0 %v3307
      %3558 = vmatprep.subr.bf16.mxu0 0
      %3559 = vmatpush1.bf16.msra.mxu0 %v3306
      %3560 = vmatprep.subr.bf16.mxu0 0
      %3561 = vmatpush1.bf16.msra.mxu0 %v3305
      %3562 = vmatprep.subr.bf16.mxu0 0
      %3563 = vmatpush1.bf16.msra.mxu0 %v3304
      %3564 = vmatprep.subr.bf16.mxu0 0
      %3565 = vmatpush1.bf16.msra.mxu0 %v3303
      %3566 = vmatprep.subr.bf16.mxu0 0
      %3567 = vmatpush1.bf16.msra.mxu0 %v3302
      %3568 = vmatprep.subr.bf16.mxu0 0
      %3569 = vmatpush1.bf16.msra.mxu0 %v3301
      %3570 = vmatprep.subr.bf16.mxu0 0
      %3571 = vmatpush1.bf16.msra.mxu0 %v3300
      %3572 = vmatprep.subr.bf16.mxu0 0
      %3573 = vmatpush2.bf16.msra.mxu0 %v3315
      %3574 = vmatprep.subr.bf16.mxu0 0
      %3575 = vmatpush2.bf16.msra.mxu0 %v3314
      %3576 = vmatprep.subr.bf16.mxu0 0
      %3577 = vmatpush2.bf16.msra.mxu0 %v3313
      %3578 = vmatprep.subr.bf16.mxu0 0
      %3579 = vmatpush2.bf16.msra.mxu0 %v3312
      %3580 = vmatprep.subr.bf16.mxu0 0
      %3581 = vmatpush2.bf16.msra.mxu0 %v3311
      %3582 = vmatprep.subr.bf16.mxu0 0
      %3583 = vmatpush2.bf16.msra.mxu0 %v3310
      %3584 = vmatprep.subr.bf16.mxu0 0
      %3585 = vmatpush2.bf16.msra.mxu0 %v3309
      %3586 = vmatprep.subr.bf16.mxu0 0
      %3587 = vmatpush2.bf16.msra.mxu0 %v3308
      %3588 = vmatprep.mubr.bf16.mxu0 %v2510
      %3589 = vmatmul.mubr.bf16.gmra.mxu0 %v2509
      %v3590 = vpop.f32.mrf.mxu0
      %v3591 = vadd.f32 %v2786, %v3590
      %v3592 = vpop.f32.mrf.mxu0
      %v3593 = vpop.f32.mrf.mxu0
      %v3594 = vpop.f32.mrf.mxu0
      %3595 = vdwg.mxu0
      %3596 = vmatprep.subr.bf16.mxu0 0
      %3597 = vmatpush1.bf16.msra.mxu0 %v3323
      %3598 = vmatprep.subr.bf16.mxu0 0
      %3599 = vmatpush1.bf16.msra.mxu0 %v3322
      %3600 = vmatprep.subr.bf16.mxu0 0
      %3601 = vmatpush1.bf16.msra.mxu0 %v3321
      %3602 = vmatprep.subr.bf16.mxu0 0
      %3603 = vmatpush1.bf16.msra.mxu0 %v3320
      %3604 = vmatprep.subr.bf16.mxu0 0
      %3605 = vmatpush1.bf16.msra.mxu0 %v3319
      %3606 = vmatprep.subr.bf16.mxu0 0
      %3607 = vmatpush1.bf16.msra.mxu0 %v3318
      %3608 = vmatprep.subr.bf16.mxu0 0
      %3609 = vmatpush1.bf16.msra.mxu0 %v3317
      %3610 = vmatprep.subr.bf16.mxu0 0
      %3611 = vmatpush1.bf16.msra.mxu0 %v3316
      %3612 = vmatprep.subr.bf16.mxu0 0
      %3613 = vmatpush2.bf16.msra.mxu0 %v3331
      %3614 = vmatprep.subr.bf16.mxu0 0
      %3615 = vmatpush2.bf16.msra.mxu0 %v3330
      %3616 = vmatprep.subr.bf16.mxu0 0
      %3617 = vmatpush2.bf16.msra.mxu0 %v3329
      %3618 = vmatprep.subr.bf16.mxu0 0
      %3619 = vmatpush2.bf16.msra.mxu0 %v3328
      %3620 = vmatprep.subr.bf16.mxu0 0
      %3621 = vmatpush2.bf16.msra.mxu0 %v3327
      %3622 = vmatprep.subr.bf16.mxu0 0
      %3623 = vmatpush2.bf16.msra.mxu0 %v3326
      %3624 = vmatprep.subr.bf16.mxu0 0
      %3625 = vmatpush2.bf16.msra.mxu0 %v3325
      %3626 = vmatprep.subr.bf16.mxu0 0
      %3627 = vmatpush2.bf16.msra.mxu0 %v3324
      %3628 = vmatprep.mubr.bf16.mxu0 %v2512
      %3629 = vmatmul.mubr.bf16.gmra.mxu0 %v2511
      %v3630 = vpop.f32.mrf.mxu0
      %v3631 = vadd.f32 %v3591, %v3630
      %v3632 = vpop.f32.mrf.mxu0
      %v3633 = vpop.f32.mrf.mxu0
      %v3634 = vpop.f32.mrf.mxu0
      %3635 = vdwg.mxu0
      %3636 = vmatprep.subr.bf16.mxu0 0
      %3637 = vmatpush1.bf16.msra.mxu0 %v3339
      %3638 = vmatprep.subr.bf16.mxu0 0
      %3639 = vmatpush1.bf16.msra.mxu0 %v3338
      %3640 = vmatprep.subr.bf16.mxu0 0
      %3641 = vmatpush1.bf16.msra.mxu0 %v3337
      %3642 = vmatprep.subr.bf16.mxu0 0
      %3643 = vmatpush1.bf16.msra.mxu0 %v3336
      %3644 = vmatprep.subr.bf16.mxu0 0
      %3645 = vmatpush1.bf16.msra.mxu0 %v3335
      %3646 = vmatprep.subr.bf16.mxu0 0
      %3647 = vmatpush1.bf16.msra.mxu0 %v3334
      %3648 = vmatprep.subr.bf16.mxu0 0
      %3649 = vmatpush1.bf16.msra.mxu0 %v3333
      %3650 = vmatprep.subr.bf16.mxu0 0
      %3651 = vmatpush1.bf16.msra.mxu0 %v3332
      %3652 = vmatprep.subr.bf16.mxu0 0
      %3653 = vmatpush2.bf16.msra.mxu0 %v3347
      %3654 = vmatprep.subr.bf16.mxu0 0
      %3655 = vmatpush2.bf16.msra.mxu0 %v3346
      %3656 = vmatprep.subr.bf16.mxu0 0
      %3657 = vmatpush2.bf16.msra.mxu0 %v3345
      %3658 = vmatprep.subr.bf16.mxu0 0
      %3659 = vmatpush2.bf16.msra.mxu0 %v3344
      %3660 = vmatprep.subr.bf16.mxu0 0
      %3661 = vmatpush2.bf16.msra.mxu0 %v3343
      %3662 = vmatprep.subr.bf16.mxu0 0
      %3663 = vmatpush2.bf16.msra.mxu0 %v3342
      %3664 = vmatprep.subr.bf16.mxu0 0
      %3665 = vmatpush2.bf16.msra.mxu0 %v3341
      %3666 = vmatprep.subr.bf16.mxu0 0
      %3667 = vmatpush2.bf16.msra.mxu0 %v3340
      %3668 = vmatprep.mubr.bf16.mxu0 %v2514
      %3669 = vmatmul.mubr.bf16.gmra.mxu0 %v2513
      %v3670 = vpop.f32.mrf.mxu0
      %v3671 = vadd.f32 %v3631, %v3670
      %v3672 = vpop.f32.mrf.mxu0
      %v3673 = vpop.f32.mrf.mxu0
      %v3674 = vpop.f32.mrf.mxu0
      %3675 = vdwg.mxu0
      %3676 = vmatprep.subr.bf16.mxu0 0
      %3677 = vmatpush1.bf16.msra.mxu0 %v3355
      %3678 = vmatprep.subr.bf16.mxu0 0
      %3679 = vmatpush1.bf16.msra.mxu0 %v3354
      %3680 = vmatprep.subr.bf16.mxu0 0
      %3681 = vmatpush1.bf16.msra.mxu0 %v3353
      %3682 = vmatprep.subr.bf16.mxu0 0
      %3683 = vmatpush1.bf16.msra.mxu0 %v3352
      %3684 = vmatprep.subr.bf16.mxu0 0
      %3685 = vmatpush1.bf16.msra.mxu0 %v3351
      %3686 = vmatprep.subr.bf16.mxu0 0
      %3687 = vmatpush1.bf16.msra.mxu0 %v3350
      %3688 = vmatprep.subr.bf16.mxu0 0
      %3689 = vmatpush1.bf16.msra.mxu0 %v3349
      %3690 = vmatprep.subr.bf16.mxu0 0
      %3691 = vmatpush1.bf16.msra.mxu0 %v3348
      %3692 = vmatprep.subr.bf16.mxu0 0
      %3693 = vmatpush2.bf16.msra.mxu0 %v3363
      %3694 = vmatprep.subr.bf16.mxu0 0
      %3695 = vmatpush2.bf16.msra.mxu0 %v3362
      %3696 = vmatprep.subr.bf16.mxu0 0
      %3697 = vmatpush2.bf16.msra.mxu0 %v3361
      %3698 = vmatprep.subr.bf16.mxu0 0
      %3699 = vmatpush2.bf16.msra.mxu0 %v3360
      %3700 = vmatprep.subr.bf16.mxu0 0
      %3701 = vmatpush2.bf16.msra.mxu0 %v3359
      %3702 = vmatprep.subr.bf16.mxu0 0
      %3703 = vmatpush2.bf16.msra.mxu0 %v3358
      %3704 = vmatprep.subr.bf16.mxu0 0
      %3705 = vmatpush2.bf16.msra.mxu0 %v3357
      %3706 = vmatprep.subr.bf16.mxu0 0
      %3707 = vmatpush2.bf16.msra.mxu0 %v3356
      %3708 = vmatprep.mubr.bf16.mxu0 %v2516
      %3709 = vmatmul.mubr.bf16.gmra.mxu0 %v2515
      %v3710 = vpop.f32.mrf.mxu0
      %v3711 = vadd.f32 %v3671, %v3710
      %v3712 = vpop.f32.mrf.mxu0
      %v3713 = vpop.f32.mrf.mxu0
      %v3714 = vpop.f32.mrf.mxu0
      %3715 = vdwg.mxu0
      %3716 = vmatprep.subr.bf16.mxu0 0
      %3717 = vmatpush1.bf16.msra.mxu0 %v3371
      %3718 = vmatprep.subr.bf16.mxu0 0
      %3719 = vmatpush1.bf16.msra.mxu0 %v3370
      %3720 = vmatprep.subr.bf16.mxu0 0
      %3721 = vmatpush1.bf16.msra.mxu0 %v3369
      %3722 = vmatprep.subr.bf16.mxu0 0
      %3723 = vmatpush1.bf16.msra.mxu0 %v3368
      %3724 = vmatprep.subr.bf16.mxu0 0
      %3725 = vmatpush1.bf16.msra.mxu0 %v3367
      %3726 = vmatprep.subr.bf16.mxu0 0
      %3727 = vmatpush1.bf16.msra.mxu0 %v3366
      %3728 = vmatprep.subr.bf16.mxu0 0
      %3729 = vmatpush1.bf16.msra.mxu0 %v3365
      %3730 = vmatprep.subr.bf16.mxu0 0
      %3731 = vmatpush1.bf16.msra.mxu0 %v3364
      %3732 = vmatprep.subr.bf16.mxu0 0
      %3733 = vmatpush2.bf16.msra.mxu0 %v3379
      %3734 = vmatprep.subr.bf16.mxu0 0
      %3735 = vmatpush2.bf16.msra.mxu0 %v3378
      %3736 = vmatprep.subr.bf16.mxu0 0
      %3737 = vmatpush2.bf16.msra.mxu0 %v3377
      %3738 = vmatprep.subr.bf16.mxu0 0
      %3739 = vmatpush2.bf16.msra.mxu0 %v3376
      %3740 = vmatprep.subr.bf16.mxu0 0
      %3741 = vmatpush2.bf16.msra.mxu0 %v3375
      %3742 = vmatprep.subr.bf16.mxu0 0
      %3743 = vmatpush2.bf16.msra.mxu0 %v3374
      %3744 = vmatprep.subr.bf16.mxu0 0
      %3745 = vmatpush2.bf16.msra.mxu0 %v3373
      %3746 = vmatprep.subr.bf16.mxu0 0
      %3747 = vmatpush2.bf16.msra.mxu0 %v3372
      %3748 = vmatprep.mubr.bf16.mxu0 %v2518
      %3749 = vmatmul.mubr.bf16.gmra.mxu0 %v2517
      %v3750 = vpop.f32.mrf.mxu0
      %v3751 = vadd.f32 %v3711, %v3750
      %v3752 = vpop.f32.mrf.mxu0
      %v3753 = vpop.f32.mrf.mxu0
      %v3754 = vpop.f32.mrf.mxu0
      %3755 = vdwg.mxu0
      %3756 = vmatprep.subr.bf16.mxu0 0
      %3757 = vmatpush1.bf16.msra.mxu0 %v3387
      %3758 = vmatprep.subr.bf16.mxu0 0
      %3759 = vmatpush1.bf16.msra.mxu0 %v3386
      %3760 = vmatprep.subr.bf16.mxu0 0
      %3761 = vmatpush1.bf16.msra.mxu0 %v3385
      %3762 = vmatprep.subr.bf16.mxu0 0
      %3763 = vmatpush1.bf16.msra.mxu0 %v3384
      %3764 = vmatprep.subr.bf16.mxu0 0
      %3765 = vmatpush1.bf16.msra.mxu0 %v3383
      %3766 = vmatprep.subr.bf16.mxu0 0
      %3767 = vmatpush1.bf16.msra.mxu0 %v3382
      %3768 = vmatprep.subr.bf16.mxu0 0
      %3769 = vmatpush1.bf16.msra.mxu0 %v3381
      %3770 = vmatprep.subr.bf16.mxu0 0
      %3771 = vmatpush1.bf16.msra.mxu0 %v3380
      %3772 = vmatprep.subr.bf16.mxu0 0
      %3773 = vmatpush2.bf16.msra.mxu0 %v3395
      %3774 = vmatprep.subr.bf16.mxu0 0
      %3775 = vmatpush2.bf16.msra.mxu0 %v3394
      %3776 = vmatprep.subr.bf16.mxu0 0
      %3777 = vmatpush2.bf16.msra.mxu0 %v3393
      %3778 = vmatprep.subr.bf16.mxu0 0
      %3779 = vmatpush2.bf16.msra.mxu0 %v3392
      %3780 = vmatprep.subr.bf16.mxu0 0
      %3781 = vmatpush2.bf16.msra.mxu0 %v3391
      %3782 = vmatprep.subr.bf16.mxu0 0
      %3783 = vmatpush2.bf16.msra.mxu0 %v3390
      %3784 = vmatprep.subr.bf16.mxu0 0
      %3785 = vmatpush2.bf16.msra.mxu0 %v3389
      %3786 = vmatprep.subr.bf16.mxu0 0
      %3787 = vmatpush2.bf16.msra.mxu0 %v3388
      %3788 = vmatprep.mubr.bf16.mxu0 %v2520
      %3789 = vmatmul.mubr.bf16.gmra.mxu0 %v2519
      %v3790 = vpop.f32.mrf.mxu0
      %v3791 = vadd.f32 %v3751, %v3790
      %v3792 = vpop.f32.mrf.mxu0
      %v3793 = vpop.f32.mrf.mxu0
      %v3794 = vpop.f32.mrf.mxu0
      %3795 = vdwg.mxu0
      %3796 = vmatprep.subr.bf16.mxu0 0
      %3797 = vmatpush1.bf16.msra.mxu0 %v3403
      %3798 = vmatprep.subr.bf16.mxu0 0
      %3799 = vmatpush1.bf16.msra.mxu0 %v3402
      %3800 = vmatprep.subr.bf16.mxu0 0
      %3801 = vmatpush1.bf16.msra.mxu0 %v3401
      %3802 = vmatprep.subr.bf16.mxu0 0
      %3803 = vmatpush1.bf16.msra.mxu0 %v3400
      %3804 = vmatprep.subr.bf16.mxu0 0
      %3805 = vmatpush1.bf16.msra.mxu0 %v3399
      %3806 = vmatprep.subr.bf16.mxu0 0
      %3807 = vmatpush1.bf16.msra.mxu0 %v3398
      %3808 = vmatprep.subr.bf16.mxu0 0
      %3809 = vmatpush1.bf16.msra.mxu0 %v3397
      %3810 = vmatprep.subr.bf16.mxu0 0
      %3811 = vmatpush1.bf16.msra.mxu0 %v3396
      %3812 = vmatprep.subr.bf16.mxu0 0
      %3813 = vmatpush2.bf16.msra.mxu0 %v3411
      %3814 = vmatprep.subr.bf16.mxu0 0
      %3815 = vmatpush2.bf16.msra.mxu0 %v3410
      %3816 = vmatprep.subr.bf16.mxu0 0
      %3817 = vmatpush2.bf16.msra.mxu0 %v3409
      %3818 = vmatprep.subr.bf16.mxu0 0
      %3819 = vmatpush2.bf16.msra.mxu0 %v3408
      %3820 = vmatprep.subr.bf16.mxu0 0
      %3821 = vmatpush2.bf16.msra.mxu0 %v3407
      %3822 = vmatprep.subr.bf16.mxu0 0
      %3823 = vmatpush2.bf16.msra.mxu0 %v3406
      %3824 = vmatprep.subr.bf16.mxu0 0
      %3825 = vmatpush2.bf16.msra.mxu0 %v3405
      %3826 = vmatprep.subr.bf16.mxu0 0
      %3827 = vmatpush2.bf16.msra.mxu0 %v3404
      %3828 = vmatprep.mubr.bf16.mxu0 %v2522
      %3829 = vmatmul.mubr.bf16.gmra.mxu0 %v2521
      %v3830 = vpop.f32.mrf.mxu0
      %v3831 = vadd.f32 %v3791, %v3830
      %v3832 = vpop.f32.mrf.mxu0
      %v3833 = vpop.f32.mrf.mxu0
      %v3834 = vpop.f32.mrf.mxu0
      %3835 = vdwg.mxu0
      %3836 = vmatprep.subr.bf16.mxu0 0
      %3837 = vmatpush1.bf16.msra.mxu0 %v3419
      %3838 = vmatprep.subr.bf16.mxu0 0
      %3839 = vmatpush1.bf16.msra.mxu0 %v3418
      %3840 = vmatprep.subr.bf16.mxu0 0
      %3841 = vmatpush1.bf16.msra.mxu0 %v3417
      %3842 = vmatprep.subr.bf16.mxu0 0
      %3843 = vmatpush1.bf16.msra.mxu0 %v3416
      %3844 = vmatprep.subr.bf16.mxu0 0
      %3845 = vmatpush1.bf16.msra.mxu0 %v3415
      %3846 = vmatprep.subr.bf16.mxu0 0
      %3847 = vmatpush1.bf16.msra.mxu0 %v3414
      %3848 = vmatprep.subr.bf16.mxu0 0
      %3849 = vmatpush1.bf16.msra.mxu0 %v3413
      %3850 = vmatprep.subr.bf16.mxu0 0
      %3851 = vmatpush1.bf16.msra.mxu0 %v3412
      %3852 = vmatprep.subr.bf16.mxu0 0
      %3853 = vmatpush2.bf16.msra.mxu0 %v3427
      %3854 = vmatprep.subr.bf16.mxu0 0
      %3855 = vmatpush2.bf16.msra.mxu0 %v3426
      %3856 = vmatprep.subr.bf16.mxu0 0
      %3857 = vmatpush2.bf16.msra.mxu0 %v3425
      %3858 = vmatprep.subr.bf16.mxu0 0
      %3859 = vmatpush2.bf16.msra.mxu0 %v3424
      %3860 = vmatprep.subr.bf16.mxu0 0
      %3861 = vmatpush2.bf16.msra.mxu0 %v3423
      %3862 = vmatprep.subr.bf16.mxu0 0
      %3863 = vmatpush2.bf16.msra.mxu0 %v3422
      %3864 = vmatprep.subr.bf16.mxu0 0
      %3865 = vmatpush2.bf16.msra.mxu0 %v3421
      %3866 = vmatprep.subr.bf16.mxu0 0
      %3867 = vmatpush2.bf16.msra.mxu0 %v3420
      %3868 = vmatprep.mubr.bf16.mxu0 %v2524
      %3869 = vmatmul.mubr.bf16.gmra.mxu0 %v2523
      %v3870 = vpop.f32.mrf.mxu0
      %v3871 = vadd.f32 %v3831, %v3870
      %v3872 = vpop.f32.mrf.mxu0
      %v3873 = vpop.f32.mrf.mxu0
      %v3874 = vpop.f32.mrf.mxu0
      %3875 = vdwg.mxu0
      %v3876 = vadd.f32 %v1884, %v3871
      %v3877 = vld [vmem:[%s705] sm:$0x1]
      %v3878 = vld [vmem:[%s708] sm:$0x1]
      %v3879 = vsel %vm812, %v3876, 0.0
      %3880 = vadd.xlane.f32.xlu0 %v3879
      %v3881 = vpop.xlane.xlu0 %3880
      %v3882 = vmul.f32 %v3881, %v1860
      %v3883 = vsub.f32 %v3876, %v3882
      %v3884 = vmul.f32 %v3883, %v3883
      %v3885 = vsel %vm812, %v3884, 0.0
      %3886 = vadd.xlane.f32.xlu0 %v3885
      %v3887 = vpop.xlane.xlu0 %3886
      %v3888 = vmul.f32 %v3887, %v1860
      %v3889 = vadd.f32 %v3888, 1e-05
      %v3890 = vrsqrt.pop %v3889
      %v3891 = vmul.f32 %v3883, %v3890
      %v3893 = vlaneseq
      %v3894 = vshrl.u32 %v3893, 7
      %v3895 = vsub.s32 0, %v3894
      %v3896 = vrot.slane %v3877, %v3895
      %v3898 = vmul.f32 %v3891, %v3896
      %v3900 = vlaneseq
      %v3901 = vshrl.u32 %v3900, 7
      %v3902 = vsub.s32 0, %v3901
      %v3903 = vrot.slane %v3878, %v3902
      %v3905 = vadd.f32 %v3898, %v3903
      %3906 = vst.msk [vmem:[#allocation2] sm:$0xff] %vm812, %v3905
      %p3907 = scmp.eq.s32.totalorder %s28, 1
      // Predicated region
      $region93: #{podos_forward.1} parent=87 // pred_check
        %p3908 = pneg %p3907
      $region94: #{podos_forward.1} parent=87 // pred_check_branch
        %3910 = sbr.rel (%p3908) target = $region96
      $region95: #{podos_forward.1} parent=87 // pred_region
        %v3911 = vld [vmem:[%s15] sm:$0xff]
        %v3912 = vld [vmem:[%s15 + $0x8] sm:$0xff]
        %v3913 = vld [vmem:[%s15 + $0x10] sm:$0xff]
        %v3914 = vld [vmem:[%s15 + $0x18] sm:$0xff]
        %v3915 = vld [vmem:[%s16] sm:$0x1]
        %v3917 = vlaneseq
        %v3918 = vshrl.u32 %v3917, 7
        %v3919 = vsub.s32 0, %v3918
        %v3920 = vrot.slane %v3915, %v3919
        %v3923 = vsel %vm812, %v3905, 0
        %3925 = vmatprep.subr.mxu0 0.0
        %3926 = vmatpush1.msra.mxu0 0.0
        %3927 = vmatprep.subr.mxu0 0.0
        %3928 = vmatpush1.msra.mxu0 0.0
        %3929 = vmatprep.subr.mxu0 0.0
        %3930 = vmatpush1.msra.mxu0 0.0
        %3931 = vmatprep.subr.mxu0 0.0
        %3932 = vmatpush1.msra.mxu0 0.0
        %3933 = vmatprep.subr.mxu0 0.0
        %3934 = vmatpush1.msra.mxu0 0.0
        %3935 = vmatprep.subr.mxu0 0.0
        %3936 = vmatpush1.msra.mxu0 0.0
        %3937 = vmatprep.subr.mxu0 0.0
        %3938 = vmatpush1.msra.mxu0 0.0
        %3939 = vmatprep.subr.mxu0 0.0
        %3940 = vmatpush1.msra.mxu0 0.0
        %3941 = vmatprep.subr.mxu0 0.0
        %3942 = vmatpush1.msra.mxu0 0.0
        %3943 = vmatprep.subr.mxu0 0.0
        %3944 = vmatpush1.msra.mxu0 0.0
        %3945 = vmatprep.subr.mxu0 0.0
        %3946 = vmatpush1.msra.mxu0 0.0
        %3947 = vmatprep.subr.mxu0 0.0
        %3948 = vmatpush1.msra.mxu0 0.0
        %3949 = vmatprep.subr.mxu0 0.0
        %3950 = vmatpush1.msra.mxu0 %v3914
        %3951 = vmatprep.subr.mxu0 0.0
        %3952 = vmatpush1.msra.mxu0 %v3913
        %3953 = vmatprep.subr.mxu0 0.0
        %3954 = vmatpush1.msra.mxu0 %v3912
        %3955 = vmatprep.subr.mxu0 0.0
        %3956 = vmatpush1.msra.mxu0 %v3911
        %3957 = vmatprep.subr.mxu0 0.0
        %3958 = vmatpush2.msra.mxu0 0.0
        %3959 = vmatprep.subr.mxu0 0.0
        %3960 = vmatpush2.msra.mxu0 0.0
        %3961 = vmatprep.subr.mxu0 0.0
        %3962 = vmatpush2.msra.mxu0 0.0
        %3963 = vmatprep.subr.mxu0 0.0
        %3964 = vmatpush2.msra.mxu0 0.0
        %3965 = vmatprep.subr.mxu0 0.0
        %3966 = vmatpush2.msra.mxu0 0.0
        %3967 = vmatprep.subr.mxu0 0.0
        %3968 = vmatpush2.msra.mxu0 0.0
        %3969 = vmatprep.subr.mxu0 0.0
        %3970 = vmatpush2.msra.mxu0 0.0
        %3971 = vmatprep.subr.mxu0 0.0
        %3972 = vmatpush2.msra.mxu0 0.0
        %3973 = vmatprep.subr.mxu0 0.0
        %3974 = vmatpush2.msra.mxu0 0.0
        %3975 = vmatprep.subr.mxu0 0.0
        %3976 = vmatpush2.msra.mxu0 0.0
        %3977 = vmatprep.subr.mxu0 0.0
        %3978 = vmatpush2.msra.mxu0 0.0
        %3979 = vmatprep.subr.mxu0 0.0
        %3980 = vmatpush2.msra.mxu0 0.0
        %3981 = vmatprep.subr.mxu0 0.0
        %3982 = vmatpush2.msra.mxu0 0.0
        %3983 = vmatprep.subr.mxu0 0.0
        %3984 = vmatpush2.msra.mxu0 0.0
        %3985 = vmatprep.subr.mxu0 0.0
        %3986 = vmatpush2.msra.mxu0 0.0
        %3987 = vmatprep.subr.mxu0 0.0
        %3988 = vmatpush2.msra.mxu0 0.0
        %3989 = vmatprep.mubr.f32.mxu0 0.0
        %3990 = vmatmul.mubr.f32.gmra.mxu0 %v3923
        %v3991 = vpop.f32.mrf.mxu0
        %v3992 = vadd.f32 %v3920, %v3991
        %v3993 = vpop.f32.mrf.mxu0
        %3994 = vdwg.mxu0
        %vm3995 = vcmask 23552
        %3996 = vst.msk [vmem:[%s17] sm:$0xff] %vm3995, %v3992
      $region96: #{podos_forward.1} parent=87 // pred_fallthru
        _
      // Predicated region
      $region97: #{podos_forward.1} parent=87 // pred_check
        %p3997 = pneg %p458
      $region98: #{podos_forward.1} parent=87 // pred_check_branch
        %3999 = sbr.rel (%p3997) target = $region100
      $region99: #{podos_forward.1} parent=87 // pred_region
        _
      $region100: #{podos_forward.1} parent=87 // pred_fallthru
        _
      // Predicated region
      $region101: #{podos_forward.1} parent=87 // pred_check
        %p4000 = pneg %p458
      $region102: #{podos_forward.1} parent=87 // pred_check_branch
        %4002 = sbr.rel (%p4000) target = $region104
      $region103: #{podos_forward.1} parent=87 // pred_region
        _
      $region104: #{podos_forward.1} parent=87 // pred_fallthru
        _
    $region88: #{podos_forward.1} parent=5 // pred_fallthru
      _
    %p4003 = scmp.le.s32.totalorder 2, %s23
    // Predicated region
    $region105: #{podos_forward.1} parent=5 // pred_check
      %p4004 = pneg %p4003
    $region106: #{podos_forward.1} parent=5 // pred_check_branch
      %4006 = sbr.rel (%p4004) target = $region108
    $region107: #{podos_forward.1} parent=5 // pred_region
      %s4007 = ssub.s32 %s23, 2
    $region108: #{podos_forward.1} parent=5 // pred_fallthru
      _
  $region6: #{podos_forward.1} parent=0 // loop_footer
    %s27 = sadd.s32 1, %s23
  $region7: #{podos_forward.1} parent=0 // loop_footer_branch
    %22 = sbr.rel target = $region3
  $region8: #{podos_forward.1} parent=0 // loop_exit
    _

</llo_original>
